<compile_context>
chip_gen: v7x
topology: tpu7x:2x2x1
jax: 0.10.0
libtpu: 0.0.40
codegen_flags: <defaults>
</compile_context>

<pallas_src>
import jax
import jax.numpy as jnp
from jax.experimental import pallas as pl
from jax.experimental.pallas import tpu as pltpu


def _elu(x):
    # ELU(alpha=1): x if x > 0 else exp(x) - 1.
    # Clamp the exp argument so the discarded branch never produces inf.
    return jnp.where(x > 0, x, jnp.exp(jnp.minimum(x, 0.0)) - 1.0)


def _slearner_kernel(x_ref, t_ref,
                     w1x_ref, w1t_ref, b1_ref,
                     w2_ref, b2_ref,
                     w3_ref, b3_ref,
                     w4_ref, b4_ref,
                     w5t_ref, b5_ref,
                     out_ref):
    # Cast features to bf16 inside the kernel (wrapper passes f32 → only one
    # HBM pass over the feature matrix).
    x = x_ref[...].astype(jnp.bfloat16)          # [TB, D]
    t = t_ref[...]                               # [TB, 1] f32
    tb = t.shape[0]

    # ---- layer 1: feature matmul shared by both branches -------------------
    h_shared = jnp.dot(x, w1x_ref[...],
                       preferred_element_type=jnp.float32)          # [TB, h] f32
    w1t = w1t_ref[...]                           # [1, h] f32 (treatment weight)
    base = h_shared + b1_ref[...]                # [TB, h]
    tw = t * w1t                                 # reused by both branches
    h_t = _elu(base + tw)                        # branch: features ++ t
    h_c = _elu(base + (w1t - tw))                # branch: features ++ (1 - t)

    # ---- stack both branches along the batch axis (bf16), layers 2..4 ------
    h = jnp.concatenate([h_t.astype(jnp.bfloat16),
                         h_c.astype(jnp.bfloat16)], axis=0)         # [2*TB, h]

    h = _elu(jnp.dot(h, w2_ref[...],
                     preferred_element_type=jnp.float32) + b2_ref[...])
    h = _elu(jnp.dot(h.astype(jnp.bfloat16), w3_ref[...],
                     preferred_element_type=jnp.float32) + b3_ref[...])
    h = _elu(jnp.dot(h.astype(jnp.bfloat16), w4_ref[...],
                     preferred_element_type=jnp.float32) + b4_ref[...])

    # ---- layer 5: N=1 → VPU multiply + lane reduce (skip the MXU) -----------
    logits = jnp.sum(h * w5t_ref[...], axis=-1, keepdims=True) + b5_ref[...]
    #                                                              # [2*TB, 1] f32

    # Single sigmoid pass on the stacked logits.
    probs = jax.nn.sigmoid(logits)

    s_logit = logits[:tb, :]                     # factual branch  (features ++ t)
    s_prob = probs[:tb, :]
    _s_prob = probs[tb:, :]                      # counterfactual  (features ++ 1-t)

    y0 = t * _s_prob + (1.0 - t) * s_prob
    y1 = t * s_prob + (1.0 - t) * _s_prob
    uplift = y1 - y0

    # Single combined store: col 0 = logit, col 1 = uplift.
    out_ref[...] = jnp.concatenate([s_logit, uplift], axis=1)       # [TB, 2]


def slearner_forward(feature_list, is_treat, params, *, tb=2048):
    """feature_list: [B, D] f32, is_treat: [B] f32.
    Returns (s_logit [B, 1], uplift [B, 1])."""
    B, D = feature_list.shape
    x = feature_list.astype(jnp.float32)          # no bf16 pre-cast (done in-kernel)
    t = is_treat.reshape(B, 1).astype(jnp.float32)

    (w1, b1, w2, b2, w3, b3, w4, b4, w5, b5) = params
    # Split layer-1 weight into feature rows (MXU, bf16) and the treatment row
    # (used elementwise on the VPU, keep f32). Layer-5 weight is passed as a
    # [1, h//4] row for the VPU reduce.
    w1x = w1[:D, :].astype(jnp.bfloat16)          # [D, h]
    w1t = w1[D:, :].astype(jnp.float32)           # [1, h]
    wb = [w1x, w1t, b1.astype(jnp.float32),
          w2.astype(jnp.bfloat16), b2.astype(jnp.float32),
          w3.astype(jnp.bfloat16), b3.astype(jnp.float32),
          w4.astype(jnp.bfloat16), b4.astype(jnp.float32),
          w5.reshape(1, -1).astype(jnp.float32),  # [1, h//4]
          b5.astype(jnp.float32)]

    # Tile the batch. No wrapper padding: either the whole batch is one
    # full-array block, or tb is a multiple of 8 and Pallas handles the
    # ragged last block (tail rows are discarded by the masked store).
    if B <= tb:
        tb_eff = B
    else:
        assert tb % 8 == 0, "tb must be a multiple of 8"
        tb_eff = tb
    num_tiles = pl.cdiv(B, tb_eff)

    def const_spec(a):
        # Whole-array block, constant index map -> weight stays VMEM-resident.
        # TODO(synk): for large D/h, add pipeline_mode=pl.Buffered(1) so the
        # constant weights are single-buffered (saves VMEM on v7x's 64 MiB).
        return pl.BlockSpec(a.shape, lambda i: (0, 0))

    out = pl.pallas_call(
        _slearner_kernel,
        out_shape=jax.ShapeDtypeStruct((B, 2), jnp.float32),
        grid_spec=pltpu.PrefetchScalarGridSpec(
            num_scalar_prefetch=0,
            grid=(num_tiles,),
            in_specs=[pl.BlockSpec((tb_eff, D), lambda i: (i, 0)),   # features
                      pl.BlockSpec((tb_eff, 1), lambda i: (i, 0))]   # treatment
                     + [const_spec(a) for a in wb],
            out_specs=pl.BlockSpec((tb_eff, 2), lambda i: (i, 0)),
        ),
        compiler_params=pltpu.CompilerParams(
            dimension_semantics=("parallel",),
            vmem_limit_bytes=32 * 1024 * 1024),   # raises v5e's 16 MiB default
    )(x, t, *wb)

    s_logit = out[:, 0:1]
    uplift = out[:, 1:2]
    return s_logit, uplift


def slearner_reference(feature_list, is_treat, params):
    """Pure-JAX f32 reference matching the PyTorch forward (is_self=False)."""
    (w1, b1, w2, b2, w3, b3, w4, b4, w5, b5) = params
    t = is_treat.reshape(-1, 1).astype(jnp.float32)

    def act(x):
        return jnp.where(x > 0, x, jnp.exp(jnp.minimum(x, 0.0)) - 1.0)

    def mlp(x):
        h = act(x @ w1 + b1)
        h = act(h @ w2 + b2)
        h = act(h @ w3 + b3)
        h = act(h @ w4 + b4)
        return h @ w5 + b5

    xt = jnp.concatenate([feature_list, t], axis=1)
    xtn = jnp.concatenate([feature_list, 1.0 - t], axis=1)
    s_logit = mlp(xt)
    _s_logit = mlp(xtn)
    s_prob = jax.nn.sigmoid(s_logit)
    _s_prob = jax.nn.sigmoid(_s_logit)
    y0 = t * _s_prob + (1.0 - t) * s_prob
    y1 = t * s_prob + (1.0 - t) * _s_prob
    return s_logit, y1 - y0


def init_params(key, input_dim, h_dim):
    """Deterministic init mimicking nn.Linear's U(-1/sqrt(fan_in), +) scheme.
    Weights stored [in, out]; biases stored [1, out]."""
    dims = [(input_dim + 1, h_dim),
            (h_dim, h_dim),
            (h_dim, h_dim // 2),
            (h_dim // 2, h_dim // 4),
            (h_dim // 4, 1)]
    params = []
    for (fan_in, fan_out) in dims:
        key, kw, kb = jax.random.split(key, 3)
        bound = 1.0 / (fan_in ** 0.5)
        w = jax.random.uniform(kw, (fan_in, fan_out), jnp.float32,
                               minval=-bound, maxval=bound)
        b = jax.random.uniform(kb, (1, fan_out), jnp.float32,
                               minval=-bound, maxval=bound)
        params.extend([w, b])
    return tuple(params)


# TODO(synk): is_self=True branch not implemented — nn.Linear(h_dim / 4, ...)
# in the reference passes a float dim and cannot be constructed.

if __name__ == "__main__":
    B = 200          # not a multiple of 8*128; exercises full-block and ragged paths
    input_dim = 16
    h_dim = 32

    key = jax.random.PRNGKey(0)
    k_feat, k_treat, k_param = jax.random.split(key, 3)

    feature_list = jax.random.normal(k_feat, (B, input_dim), jnp.float32)
    is_treat = jax.random.bernoulli(k_treat, 0.5, (B,)).astype(jnp.float32)
    params = init_params(k_param, input_dim, h_dim)

    ref_logit, ref_uplift = slearner_reference(feature_list, is_treat, params)

    # 1) Default large tile -> single whole-batch block.
    s_logit, uplift = slearner_forward(feature_list, is_treat, params)
    jax.block_until_ready((s_logit, uplift))
    assert s_logit.shape == (B, 1) and uplift.shape == (B, 1)
    assert bool(jnp.all(jnp.isfinite(s_logit)))
    assert bool(jnp.all(jnp.isfinite(uplift)))
    # Loose tolerance: kernel matmuls run in bf16 with f32 accumulation.
    assert bool(jnp.allclose(s_logit, ref_logit, atol=5e-2)), "logit mismatch"
    assert bool(jnp.allclose(uplift, ref_uplift, atol=5e-2)), "uplift mismatch"

    # 2) Small tile -> multi-tile grid with a ragged last block (no padding).
    s_logit2, uplift2 = slearner_forward(feature_list, is_treat, params, tb=64)
    jax.block_until_ready((s_logit2, uplift2))
    assert bool(jnp.all(jnp.isfinite(s_logit2)))
    assert bool(jnp.all(jnp.isfinite(uplift2)))
    assert bool(jnp.allclose(s_logit2, ref_logit, atol=5e-2)), "logit mismatch (tiled)"
    assert bool(jnp.allclose(uplift2, ref_uplift, atol=5e-2)), "uplift mismatch (tiled)"

    print("KERNEL_OK")
</pallas_src>

<mosaic_0001>
module attributes {stable_mosaic.version = 11 : i64} {
  func.func @_slearner_kernel(%arg0: i32, %arg1: memref<200x16xf32, #tpu.memory_space<vmem>>, %arg2: memref<200x1xf32, #tpu.memory_space<vmem>>, %arg3: memref<16x32xbf16, #tpu.memory_space<vmem>>, %arg4: memref<1x32xf32, #tpu.memory_space<vmem>>, %arg5: memref<1x32xf32, #tpu.memory_space<vmem>>, %arg6: memref<32x32xbf16, #tpu.memory_space<vmem>>, %arg7: memref<1x32xf32, #tpu.memory_space<vmem>>, %arg8: memref<32x16xbf16, #tpu.memory_space<vmem>>, %arg9: memref<1x16xf32, #tpu.memory_space<vmem>>, %arg10: memref<16x8xbf16, #tpu.memory_space<vmem>>, %arg11: memref<1x8xf32, #tpu.memory_space<vmem>>, %arg12: memref<1x8xf32, #tpu.memory_space<vmem>>, %arg13: memref<1x1xf32, #tpu.memory_space<vmem>>, %arg14: memref<200x2xf32, #tpu.memory_space<vmem>>) attributes {dimension_semantics = [#tpu.dimension_semantics<parallel>], iteration_bounds = array<i64: 1>, scalar_prefetch = 0 : i64, scratch_operands = 0 : i64, tpu.core_type = #tpu.core_type<tc>, window_params = [{transform_indices = @transform_0, window_bounds = array<i64: 200, 16>}, {transform_indices = @transform_1, window_bounds = array<i64: 200, 1>}, {pipeline_mode = #tpu.pipeline_mode<synchronous>, transform_indices = @transform_2, window_bounds = array<i64: 16, 32>}, {pipeline_mode = #tpu.pipeline_mode<synchronous>, transform_indices = @transform_3, window_bounds = array<i64: 1, 32>}, {pipeline_mode = #tpu.pipeline_mode<synchronous>, transform_indices = @transform_4, window_bounds = array<i64: 1, 32>}, {pipeline_mode = #tpu.pipeline_mode<synchronous>, transform_indices = @transform_5, window_bounds = array<i64: 32, 32>}, {pipeline_mode = #tpu.pipeline_mode<synchronous>, transform_indices = @transform_6, window_bounds = array<i64: 1, 32>}, {pipeline_mode = #tpu.pipeline_mode<synchronous>, transform_indices = @transform_7, window_bounds = array<i64: 32, 16>}, {pipeline_mode = #tpu.pipeline_mode<synchronous>, transform_indices = @transform_8, window_bounds = array<i64: 1, 16>}, {pipeline_mode = #tpu.pipeline_mode<synchronous>, transform_indices = @transform_9, window_bounds = array<i64: 16, 8>}, {pipeline_mode = #tpu.pipeline_mode<synchronous>, transform_indices = @transform_10, window_bounds = array<i64: 1, 8>}, {pipeline_mode = #tpu.pipeline_mode<synchronous>, transform_indices = @transform_11, window_bounds = array<i64: 1, 8>}, {pipeline_mode = #tpu.pipeline_mode<synchronous>, transform_indices = @transform_12, window_bounds = array<i64: 1, 1>}, {transform_indices = @transform_13, window_bounds = array<i64: 200, 2>}]} {
    %c0 = arith.constant 0 : index
    %c0_0 = arith.constant 0 : index
    %0 = vector.load %arg1[%c0, %c0_0] : memref<200x16xf32, #tpu.memory_space<vmem>>, vector<200x16xf32>
    %1 = arith.truncf %0 : vector<200x16xf32> to vector<200x16xbf16>
    %c0_1 = arith.constant 0 : index
    %c0_2 = arith.constant 0 : index
    %2 = vector.load %arg2[%c0_1, %c0_2] : memref<200x1xf32, #tpu.memory_space<vmem>>, vector<200x1xf32>
    %c0_3 = arith.constant 0 : index
    %c0_4 = arith.constant 0 : index
    %3 = vector.load %arg3[%c0_3, %c0_4] : memref<16x32xbf16, #tpu.memory_space<vmem>>, vector<16x32xbf16>
    %cst = arith.constant dense<0.000000e+00> : vector<200x32xf32>
    %4 = tpu.matmul %1, %3, %cst {dimension_numbers = #tpu.dot_dimension_numbers<[1], [0], [0], [1], [0, 0, 1, 1], [], []>} : vector<200x16xbf16>, vector<16x32xbf16>, vector<200x32xf32> -> vector<200x32xf32>
    %c0_5 = arith.constant 0 : index
    %c0_6 = arith.constant 0 : index
    %5 = vector.load %arg4[%c0_5, %c0_6] : memref<1x32xf32, #tpu.memory_space<vmem>>, vector<1x32xf32>
    %c0_7 = arith.constant 0 : index
    %c0_8 = arith.constant 0 : index
    %6 = vector.load %arg5[%c0_7, %c0_8] : memref<1x32xf32, #tpu.memory_space<vmem>>, vector<1x32xf32>
    %7 = vector.broadcast %6 : vector<1x32xf32> to vector<200x32xf32>
    %8 = arith.addf %4, %7 : vector<200x32xf32>
    %9 = vector.broadcast %2 : vector<200x1xf32> to vector<200x32xf32>
    %10 = vector.broadcast %5 : vector<1x32xf32> to vector<200x32xf32>
    %11 = arith.mulf %9, %10 : vector<200x32xf32>
    %12 = arith.addf %8, %11 : vector<200x32xf32>
    %cst_9 = arith.constant 0.000000e+00 : f32
    %13 = vector.broadcast %cst_9 : f32 to vector<200x32xf32>
    %14 = arith.cmpf ogt, %12, %13 : vector<200x32xf32>
    %cst_10 = arith.constant 0.000000e+00 : f32
    %15 = vector.broadcast %cst_10 : f32 to vector<200x32xf32>
    %16 = arith.minimumf %12, %15 : vector<200x32xf32>
    %17 = math.exp %16 : vector<200x32xf32>
    %cst_11 = arith.constant 1.000000e+00 : f32
    %18 = vector.broadcast %cst_11 : f32 to vector<200x32xf32>
    %19 = arith.subf %17, %18 : vector<200x32xf32>
    %20 = arith.select %14, %12, %19 : vector<200x32xi1>, vector<200x32xf32>
    %21 = vector.broadcast %5 : vector<1x32xf32> to vector<200x32xf32>
    %22 = arith.subf %21, %11 : vector<200x32xf32>
    %23 = arith.addf %8, %22 : vector<200x32xf32>
    %cst_12 = arith.constant 0.000000e+00 : f32
    %24 = vector.broadcast %cst_12 : f32 to vector<200x32xf32>
    %25 = arith.cmpf ogt, %23, %24 : vector<200x32xf32>
    %cst_13 = arith.constant 0.000000e+00 : f32
    %26 = vector.broadcast %cst_13 : f32 to vector<200x32xf32>
    %27 = arith.minimumf %23, %26 : vector<200x32xf32>
    %28 = math.exp %27 : vector<200x32xf32>
    %cst_14 = arith.constant 1.000000e+00 : f32
    %29 = vector.broadcast %cst_14 : f32 to vector<200x32xf32>
    %30 = arith.subf %28, %29 : vector<200x32xf32>
    %31 = arith.select %25, %23, %30 : vector<200x32xi1>, vector<200x32xf32>
    %32 = arith.truncf %20 : vector<200x32xf32> to vector<200x32xbf16>
    %33 = arith.truncf %31 : vector<200x32xf32> to vector<200x32xbf16>
    %34 = tpu.concatenate %32, %33 in 0 : vector<200x32xbf16>, vector<200x32xbf16> -> vector<400x32xbf16>
    %c0_15 = arith.constant 0 : index
    %c0_16 = arith.constant 0 : index
    %35 = vector.load %arg6[%c0_15, %c0_16] : memref<32x32xbf16, #tpu.memory_space<vmem>>, vector<32x32xbf16>
    %cst_17 = arith.constant dense<0.000000e+00> : vector<400x32xf32>
    %36 = tpu.matmul %34, %35, %cst_17 {dimension_numbers = #tpu.dot_dimension_numbers<[1], [0], [0], [1], [0, 0, 1, 1], [], []>} : vector<400x32xbf16>, vector<32x32xbf16>, vector<400x32xf32> -> vector<400x32xf32>
    %c0_18 = arith.constant 0 : index
    %c0_19 = arith.constant 0 : index
    %37 = vector.load %arg7[%c0_18, %c0_19] : memref<1x32xf32, #tpu.memory_space<vmem>>, vector<1x32xf32>
    %38 = vector.broadcast %37 : vector<1x32xf32> to vector<400x32xf32>
    %39 = arith.addf %36, %38 : vector<400x32xf32>
    %cst_20 = arith.constant 0.000000e+00 : f32
    %40 = vector.broadcast %cst_20 : f32 to vector<400x32xf32>
    %41 = arith.cmpf ogt, %39, %40 : vector<400x32xf32>
    %cst_21 = arith.constant 0.000000e+00 : f32
    %42 = vector.broadcast %cst_21 : f32 to vector<400x32xf32>
    %43 = arith.minimumf %39, %42 : vector<400x32xf32>
    %44 = math.exp %43 : vector<400x32xf32>
    %cst_22 = arith.constant 1.000000e+00 : f32
    %45 = vector.broadcast %cst_22 : f32 to vector<400x32xf32>
    %46 = arith.subf %44, %45 : vector<400x32xf32>
    %47 = arith.select %41, %39, %46 : vector<400x32xi1>, vector<400x32xf32>
    %48 = arith.truncf %47 : vector<400x32xf32> to vector<400x32xbf16>
    %c0_23 = arith.constant 0 : index
    %c0_24 = arith.constant 0 : index
    %49 = vector.load %arg8[%c0_23, %c0_24] : memref<32x16xbf16, #tpu.memory_space<vmem>>, vector<32x16xbf16>
    %cst_25 = arith.constant dense<0.000000e+00> : vector<400x16xf32>
    %50 = tpu.matmul %48, %49, %cst_25 {dimension_numbers = #tpu.dot_dimension_numbers<[1], [0], [0], [1], [0, 0, 1, 1], [], []>} : vector<400x32xbf16>, vector<32x16xbf16>, vector<400x16xf32> -> vector<400x16xf32>
    %c0_26 = arith.constant 0 : index
    %c0_27 = arith.constant 0 : index
    %51 = vector.load %arg9[%c0_26, %c0_27] : memref<1x16xf32, #tpu.memory_space<vmem>>, vector<1x16xf32>
    %52 = vector.broadcast %51 : vector<1x16xf32> to vector<400x16xf32>
    %53 = arith.addf %50, %52 : vector<400x16xf32>
    %cst_28 = arith.constant 0.000000e+00 : f32
    %54 = vector.broadcast %cst_28 : f32 to vector<400x16xf32>
    %55 = arith.cmpf ogt, %53, %54 : vector<400x16xf32>
    %cst_29 = arith.constant 0.000000e+00 : f32
    %56 = vector.broadcast %cst_29 : f32 to vector<400x16xf32>
    %57 = arith.minimumf %53, %56 : vector<400x16xf32>
    %58 = math.exp %57 : vector<400x16xf32>
    %cst_30 = arith.constant 1.000000e+00 : f32
    %59 = vector.broadcast %cst_30 : f32 to vector<400x16xf32>
    %60 = arith.subf %58, %59 : vector<400x16xf32>
    %61 = arith.select %55, %53, %60 : vector<400x16xi1>, vector<400x16xf32>
    %62 = arith.truncf %61 : vector<400x16xf32> to vector<400x16xbf16>
    %c0_31 = arith.constant 0 : index
    %c0_32 = arith.constant 0 : index
    %63 = vector.load %arg10[%c0_31, %c0_32] : memref<16x8xbf16, #tpu.memory_space<vmem>>, vector<16x8xbf16>
    %cst_33 = arith.constant dense<0.000000e+00> : vector<400x8xf32>
    %64 = tpu.matmul %62, %63, %cst_33 {dimension_numbers = #tpu.dot_dimension_numbers<[1], [0], [0], [1], [0, 0, 1, 1], [], []>} : vector<400x16xbf16>, vector<16x8xbf16>, vector<400x8xf32> -> vector<400x8xf32>
    %c0_34 = arith.constant 0 : index
    %c0_35 = arith.constant 0 : index
    %65 = vector.load %arg11[%c0_34, %c0_35] : memref<1x8xf32, #tpu.memory_space<vmem>>, vector<1x8xf32>
    %66 = vector.broadcast %65 : vector<1x8xf32> to vector<400x8xf32>
    %67 = arith.addf %64, %66 : vector<400x8xf32>
    %cst_36 = arith.constant 0.000000e+00 : f32
    %68 = vector.broadcast %cst_36 : f32 to vector<400x8xf32>
    %69 = arith.cmpf ogt, %67, %68 : vector<400x8xf32>
    %cst_37 = arith.constant 0.000000e+00 : f32
    %70 = vector.broadcast %cst_37 : f32 to vector<400x8xf32>
    %71 = arith.minimumf %67, %70 : vector<400x8xf32>
    %72 = math.exp %71 : vector<400x8xf32>
    %cst_38 = arith.constant 1.000000e+00 : f32
    %73 = vector.broadcast %cst_38 : f32 to vector<400x8xf32>
    %74 = arith.subf %72, %73 : vector<400x8xf32>
    %75 = arith.select %69, %67, %74 : vector<400x8xi1>, vector<400x8xf32>
    %c0_39 = arith.constant 0 : index
    %c0_40 = arith.constant 0 : index
    %76 = vector.load %arg12[%c0_39, %c0_40] : memref<1x8xf32, #tpu.memory_space<vmem>>, vector<1x8xf32>
    %77 = vector.broadcast %76 : vector<1x8xf32> to vector<400x8xf32>
    %78 = arith.mulf %75, %77 : vector<400x8xf32>
    %cst_41 = arith.constant dense<0.000000e+00> : vector<400xf32>
    %79 = vector.multi_reduction <add>, %78, %cst_41 [1] : vector<400x8xf32> to vector<400xf32>
    %80 = vector.shape_cast %79 : vector<400xf32> to vector<400x1xf32>
    %c0_42 = arith.constant 0 : index
    %c0_43 = arith.constant 0 : index
    %81 = vector.load %arg13[%c0_42, %c0_43] : memref<1x1xf32, #tpu.memory_space<vmem>>, vector<1x1xf32>
    %82 = vector.broadcast %81 : vector<1x1xf32> to vector<400x1xf32>
    %83 = arith.addf %80, %82 : vector<400x1xf32>
    %84 = arith.negf %83 : vector<400x1xf32>
    %85 = math.exp %84 : vector<400x1xf32>
    %cst_44 = arith.constant 1.000000e+00 : f32
    %86 = vector.broadcast %cst_44 : f32 to vector<400x1xf32>
    %87 = arith.addf %86, %85 : vector<400x1xf32>
    %88 = arith.divf %86, %87 : vector<400x1xf32>
    %89 = vector.extract_strided_slice %83 {offsets = [0, 0], sizes = [200, 1], strides = [1, 1]} : vector<400x1xf32> to vector<200x1xf32>
    %90 = vector.extract_strided_slice %88 {offsets = [0, 0], sizes = [200, 1], strides = [1, 1]} : vector<400x1xf32> to vector<200x1xf32>
    %91 = vector.extract_strided_slice %88 {offsets = [200, 0], sizes = [200, 1], strides = [1, 1]} : vector<400x1xf32> to vector<200x1xf32>
    %92 = arith.mulf %2, %91 : vector<200x1xf32>
    %cst_45 = arith.constant 1.000000e+00 : f32
    %93 = vector.broadcast %cst_45 : f32 to vector<200x1xf32>
    %94 = arith.subf %93, %2 : vector<200x1xf32>
    %95 = arith.mulf %94, %90 : vector<200x1xf32>
    %96 = arith.addf %92, %95 : vector<200x1xf32>
    %97 = arith.mulf %2, %90 : vector<200x1xf32>
    %cst_46 = arith.constant 1.000000e+00 : f32
    %98 = vector.broadcast %cst_46 : f32 to vector<200x1xf32>
    %99 = arith.subf %98, %2 : vector<200x1xf32>
    %100 = arith.mulf %99, %91 : vector<200x1xf32>
    %101 = arith.addf %97, %100 : vector<200x1xf32>
    %102 = arith.subf %101, %96 : vector<200x1xf32>
    %103 = tpu.concatenate %89, %102 in 1 : vector<200x1xf32>, vector<200x1xf32> -> vector<200x2xf32>
    %c0_47 = arith.constant 0 : index
    %c0_48 = arith.constant 0 : index
    %104 = vector.load %arg14[%c0_47, %c0_48] : memref<200x2xf32, #tpu.memory_space<vmem>>, vector<200x2xf32>
    tpu.vector_store %arg14[%c0_47, %c0_48], %103 {strides = array<i32>} : memref<200x2xf32, #tpu.memory_space<vmem>>, vector<200x2xf32>,
    return
  }
  func.func @transform_0(%arg0: i32) -> (i32, i32) {
    %c0_i32 = arith.constant 0 : i32
    %c0_i32_0 = arith.constant 0 : i32
    return %arg0, %c0_i32 : i32, i32
  }
  func.func @transform_1(%arg0: i32) -> (i32, i32) {
    %c0_i32 = arith.constant 0 : i32
    %c0_i32_0 = arith.constant 0 : i32
    return %arg0, %c0_i32 : i32, i32
  }
  func.func @transform_2(%arg0: i32) -> (i32, i32) {
    %c0_i32 = arith.constant 0 : i32
    %c0_i32_0 = arith.constant 0 : i32
    %c0_i32_1 = arith.constant 0 : i32
    return %c0_i32, %c0_i32_0 : i32, i32
  }
  func.func @transform_3(%arg0: i32) -> (i32, i32) {
    %c0_i32 = arith.constant 0 : i32
    %c0_i32_0 = arith.constant 0 : i32
    %c0_i32_1 = arith.constant 0 : i32
    return %c0_i32, %c0_i32_0 : i32, i32
  }
  func.func @transform_4(%arg0: i32) -> (i32, i32) {
    %c0_i32 = arith.constant 0 : i32
    %c0_i32_0 = arith.constant 0 : i32
    %c0_i32_1 = arith.constant 0 : i32
    return %c0_i32, %c0_i32_0 : i32, i32
  }
  func.func @transform_5(%arg0: i32) -> (i32, i32) {
    %c0_i32 = arith.constant 0 : i32
    %c0_i32_0 = arith.constant 0 : i32
    %c0_i32_1 = arith.constant 0 : i32
    return %c0_i32, %c0_i32_0 : i32, i32
  }
  func.func @transform_6(%arg0: i32) -> (i32, i32) {
    %c0_i32 = arith.constant 0 : i32
    %c0_i32_0 = arith.constant 0 : i32
    %c0_i32_1 = arith.constant 0 : i32
    return %c0_i32, %c0_i32_0 : i32, i32
  }
  func.func @transform_7(%arg0: i32) -> (i32, i32) {
    %c0_i32 = arith.constant 0 : i32
    %c0_i32_0 = arith.constant 0 : i32
    %c0_i32_1 = arith.constant 0 : i32
    return %c0_i32, %c0_i32_0 : i32, i32
  }
  func.func @transform_8(%arg0: i32) -> (i32, i32) {
    %c0_i32 = arith.constant 0 : i32
    %c0_i32_0 = arith.constant 0 : i32
    %c0_i32_1 = arith.constant 0 : i32
    return %c0_i32, %c0_i32_0 : i32, i32
  }
  func.func @transform_9(%arg0: i32) -> (i32, i32) {
    %c0_i32 = arith.constant 0 : i32
    %c0_i32_0 = arith.constant 0 : i32
    %c0_i32_1 = arith.constant 0 : i32
    return %c0_i32, %c0_i32_0 : i32, i32
  }
  func.func @transform_10(%arg0: i32) -> (i32, i32) {
    %c0_i32 = arith.constant 0 : i32
    %c0_i32_0 = arith.constant 0 : i32
    %c0_i32_1 = arith.constant 0 : i32
    return %c0_i32, %c0_i32_0 : i32, i32
  }
  func.func @transform_11(%arg0: i32) -> (i32, i32) {
    %c0_i32 = arith.constant 0 : i32
    %c0_i32_0 = arith.constant 0 : i32
    %c0_i32_1 = arith.constant 0 : i32
    return %c0_i32, %c0_i32_0 : i32, i32
  }
  func.func @transform_12(%arg0: i32) -> (i32, i32) {
    %c0_i32 = arith.constant 0 : i32
    %c0_i32_0 = arith.constant 0 : i32
    %c0_i32_1 = arith.constant 0 : i32
    return %c0_i32, %c0_i32_0 : i32, i32
  }
  func.func @transform_13(%arg0: i32) -> (i32, i32) {
    %c0_i32 = arith.constant 0 : i32
    %c0_i32_0 = arith.constant 0 : i32
    return %arg0, %c0_i32 : i32, i32
  }
}

</mosaic_0001>

<llo_original>
// kernel: tpu_custom_call.1
$region0: #{tpu_custom_call.1}
  #allocation0 [shape = 'u32[]', space=smem, size = 0x4, offset = 0x4, fixed_abs, tag = 'smem constant byte address 0x4 - core index']
  #allocation1 [shape = 'u32[144,128]{1,0:T(1,128)}', space=vmem, size = 0x12000, scoped, tag = 'internal scratch']
  #allocation2 [shape = 'f32[1,1]{1,0:T(1,128)S(1)}', space=vmem, size = 0x200, scoped, tag = 'scoped memory for tpu_custom_call.1']
  %s0 = inlined_call_operand.vmem [shape: f32[200,16], index: 0, kind: input, shape index: {}]
  %s1 = inlined_call_operand.vmem [shape: f32[200,1], index: 1, kind: input, shape index: {}]
  %s2 = inlined_call_operand.vmem [shape: bf16[16,32], index: 2, kind: input, shape index: {}]
  %s3 = inlined_call_operand.vmem [shape: f32[1,32], index: 3, kind: input, shape index: {}]
  %s4 = inlined_call_operand.vmem [shape: f32[1,32], index: 4, kind: input, shape index: {}]
  %s5 = inlined_call_operand.vmem [shape: bf16[32,32], index: 5, kind: input, shape index: {}]
  %s6 = inlined_call_operand.vmem [shape: f32[1,32], index: 6, kind: input, shape index: {}]
  %s7 = inlined_call_operand.vmem [shape: bf16[32,16], index: 7, kind: input, shape index: {}]
  %s8 = inlined_call_operand.vmem [shape: f32[1,16], index: 8, kind: input, shape index: {}]
  %s9 = inlined_call_operand.vmem [shape: bf16[16,8], index: 9, kind: input, shape index: {}]
  %s10 = inlined_call_operand.vmem [shape: f32[1,8], index: 10, kind: input, shape index: {}]
  %s11 = inlined_call_operand.vmem [shape: f32[1,8], index: 11, kind: input, shape index: {}]
  %s12 = inlined_call_operand.<no memory space> [shape: f32[1,1], index: 12, kind: input, shape index: {}]
  %s13 = inlined_call_operand.vmem [shape: f32[200,2], index: 13, kind: output, shape index: {}]
  %s14 = sld [smem:[#allocation0]]
  $region62: #{tpu_custom_call.1} parent=0
    _
  %s16 = ssub.s32 1, %s14
  %s17 = scalar_select 0, %s16, %s14
  %v18 = vstv %s12
  %19 = vst [vmem:[#allocation2] sm:$0x1] %v18
  // Predicated region
  $region2: #{tpu_custom_call.1} parent=0 // pred_check
    _
  $region3: #{tpu_custom_call.1} parent=0 // pred_check_branch
    %21 = sbr.rel (0) target = $region5
  $region4: #{tpu_custom_call.1} parent=0 // pred_region
    _
  $region5: #{tpu_custom_call.1} parent=0 // pred_fallthru
    _
  // Predicated region
  $region6: #{tpu_custom_call.1} parent=0 // pred_check
    _
  $region7: #{tpu_custom_call.1} parent=0 // pred_check_branch
    %23 = sbr.rel (0) target = $region9
  $region8: #{tpu_custom_call.1} parent=0 // pred_region
    _
  $region9: #{tpu_custom_call.1} parent=0 // pred_fallthru
    _
  // Predicated region
  $region10: #{tpu_custom_call.1} parent=0 // pred_check
    _
  $region11: #{tpu_custom_call.1} parent=0 // pred_check_branch
    %25 = sbr.rel (0) target = $region13
  $region12: #{tpu_custom_call.1} parent=0 // pred_region
    _
  $region13: #{tpu_custom_call.1} parent=0 // pred_fallthru
    _
  // Predicated region
  $region14: #{tpu_custom_call.1} parent=0 // pred_check
    _
  $region15: #{tpu_custom_call.1} parent=0 // pred_check_branch
    %27 = sbr.rel (0) target = $region17
  $region16: #{tpu_custom_call.1} parent=0 // pred_region
    _
  $region17: #{tpu_custom_call.1} parent=0 // pred_fallthru
    _
  // Predicated region
  $region18: #{tpu_custom_call.1} parent=0 // pred_check
    _
  $region19: #{tpu_custom_call.1} parent=0 // pred_check_branch
    %29 = sbr.rel (0) target = $region21
  $region20: #{tpu_custom_call.1} parent=0 // pred_region
    _
  $region21: #{tpu_custom_call.1} parent=0 // pred_fallthru
    _
  // Predicated region
  $region22: #{tpu_custom_call.1} parent=0 // pred_check
    _
  $region23: #{tpu_custom_call.1} parent=0 // pred_check_branch
    %31 = sbr.rel (0) target = $region25
  $region24: #{tpu_custom_call.1} parent=0 // pred_region
    _
  $region25: #{tpu_custom_call.1} parent=0 // pred_fallthru
    _
  // Predicated region
  $region26: #{tpu_custom_call.1} parent=0 // pred_check
    _
  $region27: #{tpu_custom_call.1} parent=0 // pred_check_branch
    %33 = sbr.rel (0) target = $region29
  $region28: #{tpu_custom_call.1} parent=0 // pred_region
    _
  $region29: #{tpu_custom_call.1} parent=0 // pred_fallthru
    _
  // Predicated region
  $region30: #{tpu_custom_call.1} parent=0 // pred_check
    _
  $region31: #{tpu_custom_call.1} parent=0 // pred_check_branch
    %35 = sbr.rel (0) target = $region33
  $region32: #{tpu_custom_call.1} parent=0 // pred_region
    _
  $region33: #{tpu_custom_call.1} parent=0 // pred_fallthru
    _
  // Predicated region
  $region34: #{tpu_custom_call.1} parent=0 // pred_check
    _
  $region35: #{tpu_custom_call.1} parent=0 // pred_check_branch
    %37 = sbr.rel (0) target = $region37
  $region36: #{tpu_custom_call.1} parent=0 // pred_region
    _
  $region37: #{tpu_custom_call.1} parent=0 // pred_fallthru
    _
  // Predicated region
  $region38: #{tpu_custom_call.1} parent=0 // pred_check
    _
  $region39: #{tpu_custom_call.1} parent=0 // pred_check_branch
    %39 = sbr.rel (0) target = $region41
  $region40: #{tpu_custom_call.1} parent=0 // pred_region
    _
  $region41: #{tpu_custom_call.1} parent=0 // pred_fallthru
    _
  // Predicated region
  $region42: #{tpu_custom_call.1} parent=0 // pred_check
    _
  $region43: #{tpu_custom_call.1} parent=0 // pred_check_branch
    %41 = sbr.rel (0) target = $region45
  $region44: #{tpu_custom_call.1} parent=0 // pred_region
    _
  $region45: #{tpu_custom_call.1} parent=0 // pred_fallthru
    _
  // Predicated region
  $region46: #{tpu_custom_call.1} parent=0 // pred_check
    _
  $region47: #{tpu_custom_call.1} parent=0 // pred_check_branch
    %43 = sbr.rel (0) target = $region49
  $region48: #{tpu_custom_call.1} parent=0 // pred_region
    _
  $region49: #{tpu_custom_call.1} parent=0 // pred_fallthru
    _
  // Predicated region
  $region50: #{tpu_custom_call.1} parent=0 // pred_check
    _
  $region51: #{tpu_custom_call.1} parent=0 // pred_check_branch
    %45 = sbr.rel (0) target = $region53
  $region52: #{tpu_custom_call.1} parent=0 // pred_region
    _
  $region53: #{tpu_custom_call.1} parent=0 // pred_fallthru
    _
  %v47 = vld [vmem:[%s0] sm:$0xff]
  %v48 = vld [vmem:[%s0 + $0x8] sm:$0xff]
  %v49 = vld [vmem:[%s0 + $0x10] sm:$0xff]
  %v50 = vld [vmem:[%s0 + $0x18] sm:$0xff]
  %v51 = vld [vmem:[%s0 + $0x20] sm:$0xff]
  %v52 = vld [vmem:[%s0 + $0x28] sm:$0xff]
  %v53 = vld [vmem:[%s0 + $0x30] sm:$0xff]
  %v54 = vld [vmem:[%s0 + $0x38] sm:$0xff]
  %v55 = vld [vmem:[%s0 + $0x40] sm:$0xff]
  %v56 = vld [vmem:[%s0 + $0x48] sm:$0xff]
  %v57 = vld [vmem:[%s0 + $0x50] sm:$0xff]
  %v58 = vld [vmem:[%s0 + $0x58] sm:$0xff]
  %v59 = vld [vmem:[%s0 + $0x60] sm:$0xff]
  %v60 = vld [vmem:[%s0 + $0x68] sm:$0xff]
  %v61 = vld [vmem:[%s0 + $0x70] sm:$0xff]
  %v62 = vld [vmem:[%s0 + $0x78] sm:$0xff]
  %v63 = vld [vmem:[%s0 + $0x80] sm:$0xff]
  %v64 = vld [vmem:[%s0 + $0x88] sm:$0xff]
  %v65 = vld [vmem:[%s0 + $0x90] sm:$0xff]
  %v66 = vld [vmem:[%s0 + $0x98] sm:$0xff]
  %v67 = vld [vmem:[%s0 + $0xa0] sm:$0xff]
  %v68 = vld [vmem:[%s0 + $0xa8] sm:$0xff]
  %v69 = vld [vmem:[%s0 + $0xb0] sm:$0xff]
  %v70 = vld [vmem:[%s0 + $0xb8] sm:$0xff]
  %v71 = vld [vmem:[%s0 + $0xc0] sm:$0xff]
  %v72 = vpack.c.bf16 %v48, %v47
  %v73 = vpack.c.bf16 %v50, %v49
  %v74 = vpack.c.bf16 %v52, %v51
  %v75 = vpack.c.bf16 %v54, %v53
  %v76 = vpack.c.bf16 %v56, %v55
  %v77 = vpack.c.bf16 %v58, %v57
  %v78 = vpack.c.bf16 %v60, %v59
  %v79 = vpack.c.bf16 %v62, %v61
  %v80 = vpack.c.bf16 %v64, %v63
  %v81 = vpack.c.bf16 %v66, %v65
  %v82 = vpack.c.bf16 %v68, %v67
  %v83 = vpack.c.bf16 %v70, %v69
  %v84 = vpack.c.bf16 %v71, %v71
  %v85 = vld [vmem:[%s1] sm:$0xff]
  %v86 = vld [vmem:[%s1 + $0x8] sm:$0xff]
  %v87 = vld [vmem:[%s1 + $0x10] sm:$0xff]
  %v88 = vld [vmem:[%s1 + $0x18] sm:$0xff]
  %v89 = vld [vmem:[%s1 + $0x20] sm:$0xff]
  %v90 = vld [vmem:[%s1 + $0x28] sm:$0xff]
  %v91 = vld [vmem:[%s1 + $0x30] sm:$0xff]
  %v92 = vld [vmem:[%s1 + $0x38] sm:$0xff]
  %v93 = vld [vmem:[%s1 + $0x40] sm:$0xff]
  %v94 = vld [vmem:[%s1 + $0x48] sm:$0xff]
  %v95 = vld [vmem:[%s1 + $0x50] sm:$0xff]
  %v96 = vld [vmem:[%s1 + $0x58] sm:$0xff]
  %v97 = vld [vmem:[%s1 + $0x60] sm:$0xff]
  %v98 = vld [vmem:[%s1 + $0x68] sm:$0xff]
  %v99 = vld [vmem:[%s1 + $0x70] sm:$0xff]
  %v100 = vld [vmem:[%s1 + $0x78] sm:$0xff]
  %v101 = vld [vmem:[%s1 + $0x80] sm:$0xff]
  %v102 = vld [vmem:[%s1 + $0x88] sm:$0xff]
  %v103 = vld [vmem:[%s1 + $0x90] sm:$0xff]
  %v104 = vld [vmem:[%s1 + $0x98] sm:$0xff]
  %v105 = vld [vmem:[%s1 + $0xa0] sm:$0xff]
  %v106 = vld [vmem:[%s1 + $0xa8] sm:$0xff]
  %v107 = vld [vmem:[%s1 + $0xb0] sm:$0xff]
  %v108 = vld [vmem:[%s1 + $0xb8] sm:$0xff]
  %v109 = vld [vmem:[%s1 + $0xc0] sm:$0xff]
  %v110 = vld [vmem:[%s2] sm:$0xf]
  %v111 = vld [vmem:[%s2 + $0x4] sm:$0xf]
  %v112 = vld [vmem:[%s3] sm:$0x1]
  %v113 = vld [vmem:[%s4] sm:$0x1]
  %v115 = vlaneseq
  %v116 = vshrl.u32 %v115, 7
  %v117 = vsub.s32 0, %v116
  %v118 = vrot.slane %v113, %v117
  %v122 = vunpack.c.l.b16 %v110
  %v123 = vunpack.c.l.b16 %v111
  %v124 = vpack.c.b16 %v123, %v122
  %vm126 = vcmask 130048
  %v128 = vsel %vm126, %v72, 0
  %v131 = vsel %vm126, %v73, 0
  %v134 = vsel %vm126, %v74, 0
  %v137 = vsel %vm126, %v75, 0
  %v140 = vsel %vm126, %v76, 0
  %v143 = vsel %vm126, %v77, 0
  %v146 = vsel %vm126, %v78, 0
  %v149 = vsel %vm126, %v79, 0
  %v152 = vsel %vm126, %v80, 0
  %v155 = vsel %vm126, %v81, 0
  %v158 = vsel %vm126, %v82, 0
  %v161 = vsel %vm126, %v83, 0
  %v164 = vsel %vm126, %v84, 0
  %166 = vmatprep.subr.bf16.mxu0 0
  %167 = vmatpush1.bf16.msra.mxu0 %v124
  %168 = vmatprep.subr.bf16.mxu0 0
  %169 = vmatpush1.bf16.msra.mxu0 0
  %170 = vmatprep.subr.bf16.mxu0 0
  %171 = vmatpush1.bf16.msra.mxu0 0
  %172 = vmatprep.subr.bf16.mxu0 0
  %173 = vmatpush1.bf16.msra.mxu0 0
  %174 = vmatprep.subr.bf16.mxu0 0
  %175 = vmatpush1.bf16.msra.mxu0 0
  %176 = vmatprep.subr.bf16.mxu0 0
  %177 = vmatpush1.bf16.msra.mxu0 0
  %178 = vmatprep.subr.bf16.mxu0 0
  %179 = vmatpush1.bf16.msra.mxu0 0
  %180 = vmatprep.subr.bf16.mxu0 0
  %181 = vmatpush1.bf16.msra.mxu0 0
  %182 = vmatprep.subr.bf16.mxu0 0
  %183 = vmatpush1.bf16.msra.mxu0 0
  %184 = vmatprep.subr.bf16.mxu0 0
  %185 = vmatpush1.bf16.msra.mxu0 0
  %186 = vmatprep.subr.bf16.mxu0 0
  %187 = vmatpush1.bf16.msra.mxu0 0
  %188 = vmatprep.subr.bf16.mxu0 0
  %189 = vmatpush1.bf16.msra.mxu0 0
  %190 = vmatprep.subr.bf16.mxu0 0
  %191 = vmatpush1.bf16.msra.mxu0 0
  %192 = vmatprep.subr.bf16.mxu0 0
  %193 = vmatpush1.bf16.msra.mxu0 0
  %194 = vmatprep.subr.bf16.mxu0 0
  %195 = vmatpush1.bf16.msra.mxu0 0
  %196 = vmatprep.subr.bf16.mxu0 0
  %197 = vmatpush1.bf16.msra.mxu0 0
  %198 = vmatprep.mubr.bf16.mxu0 0
  %199 = vmatmul.mubr.bf16.gmra.mrb[0].mxu0 %v128
  %v200 = vpop.f32.mrb[0].mxu0
  %v201 = vadd.f32 %v118, %v200
  %v202 = vpop.f32.mrb[0].mxu0
  %v203 = vpop.f32.mrb[0].mxu0
  %v204 = vadd.f32 %v118, %v203
  %v205 = vpop.f32.mrb[0].mxu0
  %206 = vmatprep.mubr.bf16.mxu0 0
  %207 = vmatmul.mubr.bf16.gmra.mrb[0].mxu0 %v131
  %v208 = vpop.f32.mrb[0].mxu0
  %v209 = vadd.f32 %v118, %v208
  %v210 = vpop.f32.mrb[0].mxu0
  %v211 = vpop.f32.mrb[0].mxu0
  %v212 = vadd.f32 %v118, %v211
  %v213 = vpop.f32.mrb[0].mxu0
  %214 = vmatprep.mubr.bf16.mxu0 0
  %215 = vmatmul.mubr.bf16.gmra.mrb[0].mxu0 %v134
  %v216 = vpop.f32.mrb[0].mxu0
  %v217 = vadd.f32 %v118, %v216
  %v218 = vpop.f32.mrb[0].mxu0
  %v219 = vpop.f32.mrb[0].mxu0
  %v220 = vadd.f32 %v118, %v219
  %v221 = vpop.f32.mrb[0].mxu0
  %222 = vmatprep.mubr.bf16.mxu0 0
  %223 = vmatmul.mubr.bf16.gmra.mrb[0].mxu0 %v137
  %v224 = vpop.f32.mrb[0].mxu0
  %v225 = vadd.f32 %v118, %v224
  %v226 = vpop.f32.mrb[0].mxu0
  %v227 = vpop.f32.mrb[0].mxu0
  %v228 = vadd.f32 %v118, %v227
  %v229 = vpop.f32.mrb[0].mxu0
  %230 = vmatprep.mubr.bf16.mxu0 0
  %231 = vmatmul.mubr.bf16.gmra.mrb[0].mxu0 %v140
  %v232 = vpop.f32.mrb[0].mxu0
  %v233 = vadd.f32 %v118, %v232
  %v234 = vpop.f32.mrb[0].mxu0
  %v235 = vpop.f32.mrb[0].mxu0
  %v236 = vadd.f32 %v118, %v235
  %v237 = vpop.f32.mrb[0].mxu0
  %238 = vmatprep.mubr.bf16.mxu0 0
  %239 = vmatmul.mubr.bf16.gmra.mrb[0].mxu0 %v143
  %v240 = vpop.f32.mrb[0].mxu0
  %v241 = vadd.f32 %v118, %v240
  %v242 = vpop.f32.mrb[0].mxu0
  %v243 = vpop.f32.mrb[0].mxu0
  %v244 = vadd.f32 %v118, %v243
  %v245 = vpop.f32.mrb[0].mxu0
  %246 = vmatprep.mubr.bf16.mxu0 0
  %247 = vmatmul.mubr.bf16.gmra.mrb[0].mxu0 %v146
  %v248 = vpop.f32.mrb[0].mxu0
  %v249 = vadd.f32 %v118, %v248
  %v250 = vpop.f32.mrb[0].mxu0
  %v251 = vpop.f32.mrb[0].mxu0
  %v252 = vadd.f32 %v118, %v251
  %v253 = vpop.f32.mrb[0].mxu0
  %254 = vmatprep.mubr.bf16.mxu0 0
  %255 = vmatmul.mubr.bf16.gmra.mrb[0].mxu0 %v149
  %v256 = vpop.f32.mrb[0].mxu0
  %v257 = vadd.f32 %v118, %v256
  %v258 = vpop.f32.mrb[0].mxu0
  %v259 = vpop.f32.mrb[0].mxu0
  %v260 = vadd.f32 %v118, %v259
  %v261 = vpop.f32.mrb[0].mxu0
  %262 = vmatprep.mubr.bf16.mxu0 0
  %263 = vmatmul.mubr.bf16.gmra.mrb[0].mxu0 %v152
  %v264 = vpop.f32.mrb[0].mxu0
  %v265 = vadd.f32 %v118, %v264
  %v266 = vpop.f32.mrb[0].mxu0
  %v267 = vpop.f32.mrb[0].mxu0
  %v268 = vadd.f32 %v118, %v267
  %v269 = vpop.f32.mrb[0].mxu0
  %270 = vmatprep.mubr.bf16.mxu0 0
  %271 = vmatmul.mubr.bf16.gmra.mrb[0].mxu0 %v155
  %v272 = vpop.f32.mrb[0].mxu0
  %v273 = vadd.f32 %v118, %v272
  %v274 = vpop.f32.mrb[0].mxu0
  %v275 = vpop.f32.mrb[0].mxu0
  %v276 = vadd.f32 %v118, %v275
  %v277 = vpop.f32.mrb[0].mxu0
  %278 = vmatprep.mubr.bf16.mxu0 0
  %279 = vmatmul.mubr.bf16.gmra.mrb[0].mxu0 %v158
  %v280 = vpop.f32.mrb[0].mxu0
  %v281 = vadd.f32 %v118, %v280
  %v282 = vpop.f32.mrb[0].mxu0
  %v283 = vpop.f32.mrb[0].mxu0
  %v284 = vadd.f32 %v118, %v283
  %v285 = vpop.f32.mrb[0].mxu0
  %286 = vmatprep.mubr.bf16.mxu0 0
  %287 = vmatmul.mubr.bf16.gmra.mrb[0].mxu0 %v161
  %v288 = vpop.f32.mrb[0].mxu0
  %v289 = vadd.f32 %v118, %v288
  %v290 = vpop.f32.mrb[0].mxu0
  %v291 = vpop.f32.mrb[0].mxu0
  %v292 = vadd.f32 %v118, %v291
  %v293 = vpop.f32.mrb[0].mxu0
  %294 = vmatprep.mubr.bf16.mxu0 0
  %295 = vmatmul.mubr.bf16.gmra.mrb[0].mxu0 %v164
  %v296 = vpop.f32.mrb[0].mxu0
  %v297 = vadd.f32 %v118, %v296
  %v298 = vpop.f32.mrb[0].mxu0
  %v299 = vpop.f32.mrb[0].mxu0
  %v300 = vpop.f32.mrb[0].mxu0
  %301 = vdwg.mxu0
  %303 = vset.pattern.permute.xlu0 0
  %304 = vperm.xlu0 %303, %v85
  %v305 = vpop.permute.xlu0 %304
  %308 = vset.pattern.permute.xlu0 0
  %309 = vperm.xlu0 %308, %v86
  %v310 = vpop.permute.xlu0 %309
  %313 = vset.pattern.permute.xlu0 0
  %314 = vperm.xlu0 %313, %v87
  %v315 = vpop.permute.xlu0 %314
  %318 = vset.pattern.permute.xlu0 0
  %319 = vperm.xlu0 %318, %v88
  %v320 = vpop.permute.xlu0 %319
  %323 = vset.pattern.permute.xlu0 0
  %324 = vperm.xlu0 %323, %v89
  %v325 = vpop.permute.xlu0 %324
  %328 = vset.pattern.permute.xlu0 0
  %329 = vperm.xlu0 %328, %v90
  %v330 = vpop.permute.xlu0 %329
  %333 = vset.pattern.permute.xlu0 0
  %334 = vperm.xlu0 %333, %v91
  %v335 = vpop.permute.xlu0 %334
  %338 = vset.pattern.permute.xlu0 0
  %339 = vperm.xlu0 %338, %v92
  %v340 = vpop.permute.xlu0 %339
  %343 = vset.pattern.permute.xlu0 0
  %344 = vperm.xlu0 %343, %v93
  %v345 = vpop.permute.xlu0 %344
  %348 = vset.pattern.permute.xlu0 0
  %349 = vperm.xlu0 %348, %v94
  %v350 = vpop.permute.xlu0 %349
  %353 = vset.pattern.permute.xlu0 0
  %354 = vperm.xlu0 %353, %v95
  %v355 = vpop.permute.xlu0 %354
  %358 = vset.pattern.permute.xlu0 0
  %359 = vperm.xlu0 %358, %v96
  %v360 = vpop.permute.xlu0 %359
  %363 = vset.pattern.permute.xlu0 0
  %364 = vperm.xlu0 %363, %v97
  %v365 = vpop.permute.xlu0 %364
  %368 = vset.pattern.permute.xlu0 0
  %369 = vperm.xlu0 %368, %v98
  %v370 = vpop.permute.xlu0 %369
  %373 = vset.pattern.permute.xlu0 0
  %374 = vperm.xlu0 %373, %v99
  %v375 = vpop.permute.xlu0 %374
  %378 = vset.pattern.permute.xlu0 0
  %379 = vperm.xlu0 %378, %v100
  %v380 = vpop.permute.xlu0 %379
  %383 = vset.pattern.permute.xlu0 0
  %384 = vperm.xlu0 %383, %v101
  %v385 = vpop.permute.xlu0 %384
  %388 = vset.pattern.permute.xlu0 0
  %389 = vperm.xlu0 %388, %v102
  %v390 = vpop.permute.xlu0 %389
  %393 = vset.pattern.permute.xlu0 0
  %394 = vperm.xlu0 %393, %v103
  %v395 = vpop.permute.xlu0 %394
  %398 = vset.pattern.permute.xlu0 0
  %399 = vperm.xlu0 %398, %v104
  %v400 = vpop.permute.xlu0 %399
  %403 = vset.pattern.permute.xlu0 0
  %404 = vperm.xlu0 %403, %v105
  %v405 = vpop.permute.xlu0 %404
  %408 = vset.pattern.permute.xlu0 0
  %409 = vperm.xlu0 %408, %v106
  %v410 = vpop.permute.xlu0 %409
  %413 = vset.pattern.permute.xlu0 0
  %414 = vperm.xlu0 %413, %v107
  %v415 = vpop.permute.xlu0 %414
  %418 = vset.pattern.permute.xlu0 0
  %419 = vperm.xlu0 %418, %v108
  %v420 = vpop.permute.xlu0 %419
  %423 = vset.pattern.permute.xlu0 0
  %424 = vperm.xlu0 %423, %v109
  %v425 = vpop.permute.xlu0 %424
  %v428 = vlaneseq
  %v429 = vshrl.u32 %v428, 7
  %v430 = vsub.s32 0, %v429
  %v431 = vrot.slane %v112, %v430
  %v433 = vmul.f32 %v305, %v431
  %v434 = vmul.f32 %v310, %v431
  %v435 = vmul.f32 %v315, %v431
  %v436 = vmul.f32 %v320, %v431
  %v437 = vmul.f32 %v325, %v431
  %v438 = vmul.f32 %v330, %v431
  %v439 = vmul.f32 %v335, %v431
  %v440 = vmul.f32 %v340, %v431
  %v441 = vmul.f32 %v345, %v431
  %v442 = vmul.f32 %v350, %v431
  %v443 = vmul.f32 %v355, %v431
  %v444 = vmul.f32 %v360, %v431
  %v445 = vmul.f32 %v365, %v431
  %v446 = vmul.f32 %v370, %v431
  %v447 = vmul.f32 %v375, %v431
  %v448 = vmul.f32 %v380, %v431
  %v449 = vmul.f32 %v385, %v431
  %v450 = vmul.f32 %v390, %v431
  %v451 = vmul.f32 %v395, %v431
  %v452 = vmul.f32 %v400, %v431
  %v453 = vmul.f32 %v405, %v431
  %v454 = vmul.f32 %v410, %v431
  %v455 = vmul.f32 %v415, %v431
  %v456 = vmul.f32 %v420, %v431
  %v457 = vmul.f32 %v425, %v431
  %v458 = vadd.f32 %v201, %v433
  %v459 = vadd.f32 %v204, %v434
  %v460 = vadd.f32 %v209, %v435
  %v461 = vadd.f32 %v212, %v436
  %v462 = vadd.f32 %v217, %v437
  %v463 = vadd.f32 %v220, %v438
  %v464 = vadd.f32 %v225, %v439
  %v465 = vadd.f32 %v228, %v440
  %v466 = vadd.f32 %v233, %v441
  %v467 = vadd.f32 %v236, %v442
  %v468 = vadd.f32 %v241, %v443
  %v469 = vadd.f32 %v244, %v444
  %v470 = vadd.f32 %v249, %v445
  %v471 = vadd.f32 %v252, %v446
  %v472 = vadd.f32 %v257, %v447
  %v473 = vadd.f32 %v260, %v448
  %v474 = vadd.f32 %v265, %v449
  %v475 = vadd.f32 %v268, %v450
  %v476 = vadd.f32 %v273, %v451
  %v477 = vadd.f32 %v276, %v452
  %v478 = vadd.f32 %v281, %v453
  %v479 = vadd.f32 %v284, %v454
  %v480 = vadd.f32 %v289, %v455
  %v481 = vadd.f32 %v292, %v456
  %v482 = vadd.f32 %v297, %v457
  %vm483 = vcmp.gt.f32.partialorder %v458, 0.0
  %vm484 = vcmp.gt.f32.partialorder %v459, 0.0
  %vm485 = vcmp.gt.f32.partialorder %v460, 0.0
  %vm486 = vcmp.gt.f32.partialorder %v461, 0.0
  %vm487 = vcmp.gt.f32.partialorder %v462, 0.0
  %vm488 = vcmp.gt.f32.partialorder %v463, 0.0
  %vm489 = vcmp.gt.f32.partialorder %v464, 0.0
  %vm490 = vcmp.gt.f32.partialorder %v465, 0.0
  %vm491 = vcmp.gt.f32.partialorder %v466, 0.0
  %vm492 = vcmp.gt.f32.partialorder %v467, 0.0
  %vm493 = vcmp.gt.f32.partialorder %v468, 0.0
  %vm494 = vcmp.gt.f32.partialorder %v469, 0.0
  %vm495 = vcmp.gt.f32.partialorder %v470, 0.0
  %vm496 = vcmp.gt.f32.partialorder %v471, 0.0
  %vm497 = vcmp.gt.f32.partialorder %v472, 0.0
  %vm498 = vcmp.gt.f32.partialorder %v473, 0.0
  %vm499 = vcmp.gt.f32.partialorder %v474, 0.0
  %vm500 = vcmp.gt.f32.partialorder %v475, 0.0
  %vm501 = vcmp.gt.f32.partialorder %v476, 0.0
  %vm502 = vcmp.gt.f32.partialorder %v477, 0.0
  %vm503 = vcmp.gt.f32.partialorder %v478, 0.0
  %vm504 = vcmp.gt.f32.partialorder %v479, 0.0
  %vm505 = vcmp.gt.f32.partialorder %v480, 0.0
  %vm506 = vcmp.gt.f32.partialorder %v481, 0.0
  %vm507 = vcmp.gt.f32.partialorder %v482, 0.0
  %v508 = vmin.f32 %v458, 0.0
  %v509 = vmin.f32 %v459, 0.0
  %v510 = vmin.f32 %v460, 0.0
  %v511 = vmin.f32 %v461, 0.0
  %v512 = vmin.f32 %v462, 0.0
  %v513 = vmin.f32 %v463, 0.0
  %v514 = vmin.f32 %v464, 0.0
  %v515 = vmin.f32 %v465, 0.0
  %v516 = vmin.f32 %v466, 0.0
  %v517 = vmin.f32 %v467, 0.0
  %v518 = vmin.f32 %v468, 0.0
  %v519 = vmin.f32 %v469, 0.0
  %v520 = vmin.f32 %v470, 0.0
  %v521 = vmin.f32 %v471, 0.0
  %v522 = vmin.f32 %v472, 0.0
  %v523 = vmin.f32 %v473, 0.0
  %v524 = vmin.f32 %v474, 0.0
  %v525 = vmin.f32 %v475, 0.0
  %v526 = vmin.f32 %v476, 0.0
  %v527 = vmin.f32 %v477, 0.0
  %v528 = vmin.f32 %v478, 0.0
  %v529 = vmin.f32 %v479, 0.0
  %v530 = vmin.f32 %v480, 0.0
  %v531 = vmin.f32 %v481, 0.0
  %v532 = vmin.f32 %v482, 0.0
  %v533 = vmul.f32 %v508, 1.442695
  %v534 = vpow.pop %v533
  %v535 = vmul.f32 %v509, 1.442695
  %v536 = vpow.pop %v535
  %v537 = vmul.f32 %v510, 1.442695
  %v538 = vpow.pop %v537
  %v539 = vmul.f32 %v511, 1.442695
  %v540 = vpow.pop %v539
  %v541 = vmul.f32 %v512, 1.442695
  %v542 = vpow.pop %v541
  %v543 = vmul.f32 %v513, 1.442695
  %v544 = vpow.pop %v543
  %v545 = vmul.f32 %v514, 1.442695
  %v546 = vpow.pop %v545
  %v547 = vmul.f32 %v515, 1.442695
  %v548 = vpow.pop %v547
  %v549 = vmul.f32 %v516, 1.442695
  %v550 = vpow.pop %v549
  %v551 = vmul.f32 %v517, 1.442695
  %v552 = vpow.pop %v551
  %v553 = vmul.f32 %v518, 1.442695
  %v554 = vpow.pop %v553
  %v555 = vmul.f32 %v519, 1.442695
  %v556 = vpow.pop %v555
  %v557 = vmul.f32 %v520, 1.442695
  %v558 = vpow.pop %v557
  %v559 = vmul.f32 %v521, 1.442695
  %v560 = vpow.pop %v559
  %v561 = vmul.f32 %v522, 1.442695
  %v562 = vpow.pop %v561
  %v563 = vmul.f32 %v523, 1.442695
  %v564 = vpow.pop %v563
  %v565 = vmul.f32 %v524, 1.442695
  %v566 = vpow.pop %v565
  %v567 = vmul.f32 %v525, 1.442695
  %v568 = vpow.pop %v567
  %v569 = vmul.f32 %v526, 1.442695
  %v570 = vpow.pop %v569
  %v571 = vmul.f32 %v527, 1.442695
  %v572 = vpow.pop %v571
  %v573 = vmul.f32 %v528, 1.442695
  %v574 = vpow.pop %v573
  %v575 = vmul.f32 %v529, 1.442695
  %v576 = vpow.pop %v575
  %v577 = vmul.f32 %v530, 1.442695
  %v578 = vpow.pop %v577
  %v579 = vmul.f32 %v531, 1.442695
  %v580 = vpow.pop %v579
  %v581 = vmul.f32 %v532, 1.442695
  %v582 = vpow.pop %v581
  %v583 = vsub.f32 %v534, 1.0
  %v584 = vsub.f32 %v536, 1.0
  %v585 = vsub.f32 %v538, 1.0
  %v586 = vsub.f32 %v540, 1.0
  %v587 = vsub.f32 %v542, 1.0
  %v588 = vsub.f32 %v544, 1.0
  %v589 = vsub.f32 %v546, 1.0
  %v590 = vsub.f32 %v548, 1.0
  %v591 = vsub.f32 %v550, 1.0
  %v592 = vsub.f32 %v552, 1.0
  %v593 = vsub.f32 %v554, 1.0
  %v594 = vsub.f32 %v556, 1.0
  %v595 = vsub.f32 %v558, 1.0
  %v596 = vsub.f32 %v560, 1.0
  %v597 = vsub.f32 %v562, 1.0
  %v598 = vsub.f32 %v564, 1.0
  %v599 = vsub.f32 %v566, 1.0
  %v600 = vsub.f32 %v568, 1.0
  %v601 = vsub.f32 %v570, 1.0
  %v602 = vsub.f32 %v572, 1.0
  %v603 = vsub.f32 %v574, 1.0
  %v604 = vsub.f32 %v576, 1.0
  %v605 = vsub.f32 %v578, 1.0
  %v606 = vsub.f32 %v580, 1.0
  %v607 = vsub.f32 %v582, 1.0
  %v608 = vsel %vm483, %v458, %v583
  %v609 = vsel %vm484, %v459, %v584
  %v610 = vsel %vm485, %v460, %v585
  %v611 = vsel %vm486, %v461, %v586
  %v612 = vsel %vm487, %v462, %v587
  %v613 = vsel %vm488, %v463, %v588
  %v614 = vsel %vm489, %v464, %v589
  %v615 = vsel %vm490, %v465, %v590
  %v616 = vsel %vm491, %v466, %v591
  %v617 = vsel %vm492, %v467, %v592
  %v618 = vsel %vm493, %v468, %v593
  %v619 = vsel %vm494, %v469, %v594
  %v620 = vsel %vm495, %v470, %v595
  %v621 = vsel %vm496, %v471, %v596
  %v622 = vsel %vm497, %v472, %v597
  %v623 = vsel %vm498, %v473, %v598
  %v624 = vsel %vm499, %v474, %v599
  %v625 = vsel %vm500, %v475, %v600
  %v626 = vsel %vm501, %v476, %v601
  %v627 = vsel %vm502, %v477, %v602
  %v628 = vsel %vm503, %v478, %v603
  %v629 = vsel %vm504, %v479, %v604
  %v630 = vsel %vm505, %v480, %v605
  %v631 = vsel %vm506, %v481, %v606
  %v632 = vsel %vm507, %v482, %v607
  %v633 = vsub.f32 %v431, %v433
  %v634 = vsub.f32 %v431, %v434
  %v635 = vsub.f32 %v431, %v435
  %v636 = vsub.f32 %v431, %v436
  %v637 = vsub.f32 %v431, %v437
  %v638 = vsub.f32 %v431, %v438
  %v639 = vsub.f32 %v431, %v439
  %v640 = vsub.f32 %v431, %v440
  %v641 = vsub.f32 %v431, %v441
  %v642 = vsub.f32 %v431, %v442
  %v643 = vsub.f32 %v431, %v443
  %v644 = vsub.f32 %v431, %v444
  %v645 = vsub.f32 %v431, %v445
  %v646 = vsub.f32 %v431, %v446
  %v647 = vsub.f32 %v431, %v447
  %v648 = vsub.f32 %v431, %v448
  %v649 = vsub.f32 %v431, %v449
  %v650 = vsub.f32 %v431, %v450
  %v651 = vsub.f32 %v431, %v451
  %v652 = vsub.f32 %v431, %v452
  %v653 = vsub.f32 %v431, %v453
  %v654 = vsub.f32 %v431, %v454
  %v655 = vsub.f32 %v431, %v455
  %v656 = vsub.f32 %v431, %v456
  %v657 = vsub.f32 %v431, %v457
  %v658 = vadd.f32 %v201, %v633
  %v659 = vadd.f32 %v204, %v634
  %v660 = vadd.f32 %v209, %v635
  %v661 = vadd.f32 %v212, %v636
  %v662 = vadd.f32 %v217, %v637
  %v663 = vadd.f32 %v220, %v638
  %v664 = vadd.f32 %v225, %v639
  %v665 = vadd.f32 %v228, %v640
  %v666 = vadd.f32 %v233, %v641
  %v667 = vadd.f32 %v236, %v642
  %v668 = vadd.f32 %v241, %v643
  %v669 = vadd.f32 %v244, %v644
  %v670 = vadd.f32 %v249, %v645
  %v671 = vadd.f32 %v252, %v646
  %v672 = vadd.f32 %v257, %v647
  %v673 = vadd.f32 %v260, %v648
  %v674 = vadd.f32 %v265, %v649
  %v675 = vadd.f32 %v268, %v650
  %v676 = vadd.f32 %v273, %v651
  %v677 = vadd.f32 %v276, %v652
  %v678 = vadd.f32 %v281, %v653
  %v679 = vadd.f32 %v284, %v654
  %v680 = vadd.f32 %v289, %v655
  %v681 = vadd.f32 %v292, %v656
  %v682 = vadd.f32 %v297, %v657
  %vm683 = vcmp.gt.f32.partialorder %v658, 0.0
  %vm684 = vcmp.gt.f32.partialorder %v659, 0.0
  %vm685 = vcmp.gt.f32.partialorder %v660, 0.0
  %vm686 = vcmp.gt.f32.partialorder %v661, 0.0
  %vm687 = vcmp.gt.f32.partialorder %v662, 0.0
  %vm688 = vcmp.gt.f32.partialorder %v663, 0.0
  %vm689 = vcmp.gt.f32.partialorder %v664, 0.0
  %vm690 = vcmp.gt.f32.partialorder %v665, 0.0
  %vm691 = vcmp.gt.f32.partialorder %v666, 0.0
  %vm692 = vcmp.gt.f32.partialorder %v667, 0.0
  %vm693 = vcmp.gt.f32.partialorder %v668, 0.0
  %vm694 = vcmp.gt.f32.partialorder %v669, 0.0
  %vm695 = vcmp.gt.f32.partialorder %v670, 0.0
  %vm696 = vcmp.gt.f32.partialorder %v671, 0.0
  %vm697 = vcmp.gt.f32.partialorder %v672, 0.0
  %vm698 = vcmp.gt.f32.partialorder %v673, 0.0
  %vm699 = vcmp.gt.f32.partialorder %v674, 0.0
  %vm700 = vcmp.gt.f32.partialorder %v675, 0.0
  %vm701 = vcmp.gt.f32.partialorder %v676, 0.0
  %vm702 = vcmp.gt.f32.partialorder %v677, 0.0
  %vm703 = vcmp.gt.f32.partialorder %v678, 0.0
  %vm704 = vcmp.gt.f32.partialorder %v679, 0.0
  %vm705 = vcmp.gt.f32.partialorder %v680, 0.0
  %vm706 = vcmp.gt.f32.partialorder %v681, 0.0
  %vm707 = vcmp.gt.f32.partialorder %v682, 0.0
  %v708 = vmin.f32 %v658, 0.0
  %v709 = vmin.f32 %v659, 0.0
  %v710 = vmin.f32 %v660, 0.0
  %v711 = vmin.f32 %v661, 0.0
  %v712 = vmin.f32 %v662, 0.0
  %v713 = vmin.f32 %v663, 0.0
  %v714 = vmin.f32 %v664, 0.0
  %v715 = vmin.f32 %v665, 0.0
  %v716 = vmin.f32 %v666, 0.0
  %v717 = vmin.f32 %v667, 0.0
  %v718 = vmin.f32 %v668, 0.0
  %v719 = vmin.f32 %v669, 0.0
  %v720 = vmin.f32 %v670, 0.0
  %v721 = vmin.f32 %v671, 0.0
  %v722 = vmin.f32 %v672, 0.0
  %v723 = vmin.f32 %v673, 0.0
  %v724 = vmin.f32 %v674, 0.0
  %v725 = vmin.f32 %v675, 0.0
  %v726 = vmin.f32 %v676, 0.0
  %v727 = vmin.f32 %v677, 0.0
  %v728 = vmin.f32 %v678, 0.0
  %v729 = vmin.f32 %v679, 0.0
  %v730 = vmin.f32 %v680, 0.0
  %v731 = vmin.f32 %v681, 0.0
  %v732 = vmin.f32 %v682, 0.0
  %v733 = vmul.f32 %v708, 1.442695
  %v734 = vpow.pop %v733
  %v735 = vmul.f32 %v709, 1.442695
  %v736 = vpow.pop %v735
  %v737 = vmul.f32 %v710, 1.442695
  %v738 = vpow.pop %v737
  %v739 = vmul.f32 %v711, 1.442695
  %v740 = vpow.pop %v739
  %v741 = vmul.f32 %v712, 1.442695
  %v742 = vpow.pop %v741
  %v743 = vmul.f32 %v713, 1.442695
  %v744 = vpow.pop %v743
  %v745 = vmul.f32 %v714, 1.442695
  %v746 = vpow.pop %v745
  %v747 = vmul.f32 %v715, 1.442695
  %v748 = vpow.pop %v747
  %v749 = vmul.f32 %v716, 1.442695
  %v750 = vpow.pop %v749
  %v751 = vmul.f32 %v717, 1.442695
  %v752 = vpow.pop %v751
  %v753 = vmul.f32 %v718, 1.442695
  %v754 = vpow.pop %v753
  %v755 = vmul.f32 %v719, 1.442695
  %v756 = vpow.pop %v755
  %v757 = vmul.f32 %v720, 1.442695
  %v758 = vpow.pop %v757
  %v759 = vmul.f32 %v721, 1.442695
  %v760 = vpow.pop %v759
  %v761 = vmul.f32 %v722, 1.442695
  %v762 = vpow.pop %v761
  %v763 = vmul.f32 %v723, 1.442695
  %v764 = vpow.pop %v763
  %v765 = vmul.f32 %v724, 1.442695
  %v766 = vpow.pop %v765
  %v767 = vmul.f32 %v725, 1.442695
  %v768 = vpow.pop %v767
  %v769 = vmul.f32 %v726, 1.442695
  %v770 = vpow.pop %v769
  %v771 = vmul.f32 %v727, 1.442695
  %v772 = vpow.pop %v771
  %v773 = vmul.f32 %v728, 1.442695
  %v774 = vpow.pop %v773
  %v775 = vmul.f32 %v729, 1.442695
  %v776 = vpow.pop %v775
  %v777 = vmul.f32 %v730, 1.442695
  %v778 = vpow.pop %v777
  %v779 = vmul.f32 %v731, 1.442695
  %v780 = vpow.pop %v779
  %v781 = vmul.f32 %v732, 1.442695
  %v782 = vpow.pop %v781
  %v783 = vsub.f32 %v734, 1.0
  %v784 = vsub.f32 %v736, 1.0
  %v785 = vsub.f32 %v738, 1.0
  %v786 = vsub.f32 %v740, 1.0
  %v787 = vsub.f32 %v742, 1.0
  %v788 = vsub.f32 %v744, 1.0
  %v789 = vsub.f32 %v746, 1.0
  %v790 = vsub.f32 %v748, 1.0
  %v791 = vsub.f32 %v750, 1.0
  %v792 = vsub.f32 %v752, 1.0
  %v793 = vsub.f32 %v754, 1.0
  %v794 = vsub.f32 %v756, 1.0
  %v795 = vsub.f32 %v758, 1.0
  %v796 = vsub.f32 %v760, 1.0
  %v797 = vsub.f32 %v762, 1.0
  %v798 = vsub.f32 %v764, 1.0
  %v799 = vsub.f32 %v766, 1.0
  %v800 = vsub.f32 %v768, 1.0
  %v801 = vsub.f32 %v770, 1.0
  %v802 = vsub.f32 %v772, 1.0
  %v803 = vsub.f32 %v774, 1.0
  %v804 = vsub.f32 %v776, 1.0
  %v805 = vsub.f32 %v778, 1.0
  %v806 = vsub.f32 %v780, 1.0
  %v807 = vsub.f32 %v782, 1.0
  %v808 = vsel %vm683, %v658, %v783
  %v809 = vsel %vm684, %v659, %v784
  %v810 = vsel %vm685, %v660, %v785
  %v811 = vsel %vm686, %v661, %v786
  %v812 = vsel %vm687, %v662, %v787
  %v813 = vsel %vm688, %v663, %v788
  %v814 = vsel %vm689, %v664, %v789
  %v815 = vsel %vm690, %v665, %v790
  %v816 = vsel %vm691, %v666, %v791
  %v817 = vsel %vm692, %v667, %v792
  %v818 = vsel %vm693, %v668, %v793
  %v819 = vsel %vm694, %v669, %v794
  %v820 = vsel %vm695, %v670, %v795
  %v821 = vsel %vm696, %v671, %v796
  %v822 = vsel %vm697, %v672, %v797
  %v823 = vsel %vm698, %v673, %v798
  %v824 = vsel %vm699, %v674, %v799
  %v825 = vsel %vm700, %v675, %v800
  %v826 = vsel %vm701, %v676, %v801
  %v827 = vsel %vm702, %v677, %v802
  %v828 = vsel %vm703, %v678, %v803
  %v829 = vsel %vm704, %v679, %v804
  %v830 = vsel %vm705, %v680, %v805
  %v831 = vsel %vm706, %v681, %v806
  %v832 = vsel %vm707, %v682, %v807
  %v833 = vpack.c.bf16 %v609, %v608
  %v834 = vpack.c.bf16 %v611, %v610
  %v835 = vpack.c.bf16 %v613, %v612
  %v836 = vpack.c.bf16 %v615, %v614
  %v837 = vpack.c.bf16 %v617, %v616
  %v838 = vpack.c.bf16 %v619, %v618
  %v839 = vpack.c.bf16 %v621, %v620
  %v840 = vpack.c.bf16 %v623, %v622
  %v841 = vpack.c.bf16 %v625, %v624
  %v842 = vpack.c.bf16 %v627, %v626
  %v843 = vpack.c.bf16 %v629, %v628
  %v844 = vpack.c.bf16 %v631, %v630
  %v845 = vpack.c.bf16 %v632, %v632
  %v846 = vpack.c.bf16 %v809, %v808
  %v847 = vpack.c.bf16 %v811, %v810
  %v848 = vpack.c.bf16 %v813, %v812
  %v849 = vpack.c.bf16 %v815, %v814
  %v850 = vpack.c.bf16 %v817, %v816
  %v851 = vpack.c.bf16 %v819, %v818
  %v852 = vpack.c.bf16 %v821, %v820
  %v853 = vpack.c.bf16 %v823, %v822
  %v854 = vpack.c.bf16 %v825, %v824
  %v855 = vpack.c.bf16 %v827, %v826
  %v856 = vpack.c.bf16 %v829, %v828
  %v857 = vpack.c.bf16 %v831, %v830
  %v858 = vpack.c.bf16 %v832, %v832
  %vm872 = vcmask 1043456
  %v873 = vrot.slane %v846, 4
  %v874 = vrot.slane %v847, 4
  %v875 = vsel %vm872, %v873, %v874
  %v876 = vrot.slane %v848, 4
  %v877 = vsel %vm872, %v874, %v876
  %v878 = vrot.slane %v849, 4
  %v879 = vsel %vm872, %v876, %v878
  %v880 = vrot.slane %v850, 4
  %v881 = vsel %vm872, %v878, %v880
  %v882 = vrot.slane %v851, 4
  %v883 = vsel %vm872, %v880, %v882
  %v884 = vrot.slane %v852, 4
  %v885 = vsel %vm872, %v882, %v884
  %v886 = vrot.slane %v853, 4
  %v887 = vsel %vm872, %v884, %v886
  %v888 = vrot.slane %v854, 4
  %v889 = vsel %vm872, %v886, %v888
  %v890 = vrot.slane %v855, 4
  %v891 = vsel %vm872, %v888, %v890
  %v892 = vrot.slane %v856, 4
  %v893 = vsel %vm872, %v890, %v892
  %v894 = vrot.slane %v857, 4
  %v895 = vsel %vm872, %v892, %v894
  %v896 = vrot.slane %v858, 4
  %v897 = vsel %vm872, %v894, %v896
  %vm898 = vcmask 1043456
  %v901 = vsel %vm898, %v845, %v873
  %v902 = vld [vmem:[%s5] sm:$0xf]
  %v903 = vld [vmem:[%s5 + $0x4] sm:$0xf]
  %v904 = vld [vmem:[%s5 + $0x8] sm:$0xf]
  %v905 = vld [vmem:[%s5 + $0xc] sm:$0xf]
  %v906 = vld [vmem:[%s6] sm:$0x1]
  %v908 = vlaneseq
  %v909 = vshrl.u32 %v908, 7
  %v910 = vsub.s32 0, %v909
  %v911 = vrot.slane %v906, %v910
  %v917 = vunpack.c.l.b16 %v902
  %v918 = vunpack.c.l.b16 %v903
  %v919 = vunpack.c.l.b16 %v904
  %v920 = vunpack.c.l.b16 %v905
  %v921 = vpack.c.b16 %v918, %v917
  %v922 = vpack.c.b16 %v920, %v919
  %vm925 = vcmask 261120
  %v927 = vsel %vm925, %v833, 0
  %v930 = vsel %vm925, %v834, 0
  %v933 = vsel %vm925, %v835, 0
  %v936 = vsel %vm925, %v836, 0
  %v939 = vsel %vm925, %v837, 0
  %v942 = vsel %vm925, %v838, 0
  %v945 = vsel %vm925, %v839, 0
  %v948 = vsel %vm925, %v840, 0
  %v951 = vsel %vm925, %v841, 0
  %v954 = vsel %vm925, %v842, 0
  %v957 = vsel %vm925, %v843, 0
  %v960 = vsel %vm925, %v844, 0
  %v962 = vsel %vm925, %v901, 0
  %v965 = vsel %vm925, %v875, 0
  %v968 = vsel %vm925, %v877, 0
  %v971 = vsel %vm925, %v879, 0
  %v974 = vsel %vm925, %v881, 0
  %v977 = vsel %vm925, %v883, 0
  %v980 = vsel %vm925, %v885, 0
  %v983 = vsel %vm925, %v887, 0
  %v986 = vsel %vm925, %v889, 0
  %v989 = vsel %vm925, %v891, 0
  %v992 = vsel %vm925, %v893, 0
  %v995 = vsel %vm925, %v895, 0
  %v998 = vsel %vm925, %v897, 0
  %1000 = vmatprep.subr.bf16.mxu0 0
  %1001 = vmatpush1.bf16.msra.mxu0 %v921
  %1002 = vmatprep.subr.bf16.mxu0 0
  %1003 = vmatpush1.bf16.msra.mxu0 %v922
  %1004 = vmatprep.subr.bf16.mxu0 0
  %1005 = vmatpush1.bf16.msra.mxu0 0
  %1006 = vmatprep.subr.bf16.mxu0 0
  %1007 = vmatpush1.bf16.msra.mxu0 0
  %1008 = vmatprep.subr.bf16.mxu0 0
  %1009 = vmatpush1.bf16.msra.mxu0 0
  %1010 = vmatprep.subr.bf16.mxu0 0
  %1011 = vmatpush1.bf16.msra.mxu0 0
  %1012 = vmatprep.subr.bf16.mxu0 0
  %1013 = vmatpush1.bf16.msra.mxu0 0
  %1014 = vmatprep.subr.bf16.mxu0 0
  %1015 = vmatpush1.bf16.msra.mxu0 0
  %1016 = vmatprep.subr.bf16.mxu0 0
  %1017 = vmatpush1.bf16.msra.mxu0 0
  %1018 = vmatprep.subr.bf16.mxu0 0
  %1019 = vmatpush1.bf16.msra.mxu0 0
  %1020 = vmatprep.subr.bf16.mxu0 0
  %1021 = vmatpush1.bf16.msra.mxu0 0
  %1022 = vmatprep.subr.bf16.mxu0 0
  %1023 = vmatpush1.bf16.msra.mxu0 0
  %1024 = vmatprep.subr.bf16.mxu0 0
  %1025 = vmatpush1.bf16.msra.mxu0 0
  %1026 = vmatprep.subr.bf16.mxu0 0
  %1027 = vmatpush1.bf16.msra.mxu0 0
  %1028 = vmatprep.subr.bf16.mxu0 0
  %1029 = vmatpush1.bf16.msra.mxu0 0
  %1030 = vmatprep.subr.bf16.mxu0 0
  %1031 = vmatpush1.bf16.msra.mxu0 0
  %1032 = vmatprep.mubr.bf16.mxu0 0
  %1033 = vmatmul.mubr.bf16.gmra.mrb[0].mxu0 %v927
  %v1034 = vpop.f32.mrb[0].mxu0
  %v1035 = vadd.f32 %v911, %v1034
  %v1036 = vpop.f32.mrb[0].mxu0
  %v1037 = vpop.f32.mrb[0].mxu0
  %v1038 = vadd.f32 %v911, %v1037
  %v1039 = vpop.f32.mrb[0].mxu0
  %1040 = vmatprep.mubr.bf16.mxu0 0
  %1041 = vmatmul.mubr.bf16.gmra.mrb[0].mxu0 %v930
  %v1042 = vpop.f32.mrb[0].mxu0
  %v1043 = vadd.f32 %v911, %v1042
  %v1044 = vpop.f32.mrb[0].mxu0
  %v1045 = vpop.f32.mrb[0].mxu0
  %v1046 = vadd.f32 %v911, %v1045
  %v1047 = vpop.f32.mrb[0].mxu0
  %1048 = vmatprep.mubr.bf16.mxu0 0
  %1049 = vmatmul.mubr.bf16.gmra.mrb[0].mxu0 %v933
  %v1050 = vpop.f32.mrb[0].mxu0
  %v1051 = vadd.f32 %v911, %v1050
  %v1052 = vpop.f32.mrb[0].mxu0
  %v1053 = vpop.f32.mrb[0].mxu0
  %v1054 = vadd.f32 %v911, %v1053
  %v1055 = vpop.f32.mrb[0].mxu0
  %1056 = vmatprep.mubr.bf16.mxu0 0
  %1057 = vmatmul.mubr.bf16.gmra.mrb[0].mxu0 %v936
  %v1058 = vpop.f32.mrb[0].mxu0
  %v1059 = vadd.f32 %v911, %v1058
  %v1060 = vpop.f32.mrb[0].mxu0
  %v1061 = vpop.f32.mrb[0].mxu0
  %v1062 = vadd.f32 %v911, %v1061
  %v1063 = vpop.f32.mrb[0].mxu0
  %1064 = vmatprep.mubr.bf16.mxu0 0
  %1065 = vmatmul.mubr.bf16.gmra.mrb[0].mxu0 %v939
  %v1066 = vpop.f32.mrb[0].mxu0
  %v1067 = vadd.f32 %v911, %v1066
  %v1068 = vpop.f32.mrb[0].mxu0
  %v1069 = vpop.f32.mrb[0].mxu0
  %v1070 = vadd.f32 %v911, %v1069
  %v1071 = vpop.f32.mrb[0].mxu0
  %1072 = vmatprep.mubr.bf16.mxu0 0
  %1073 = vmatmul.mubr.bf16.gmra.mrb[0].mxu0 %v942
  %v1074 = vpop.f32.mrb[0].mxu0
  %v1075 = vadd.f32 %v911, %v1074
  %v1076 = vpop.f32.mrb[0].mxu0
  %v1077 = vpop.f32.mrb[0].mxu0
  %v1078 = vadd.f32 %v911, %v1077
  %v1079 = vpop.f32.mrb[0].mxu0
  %1080 = vmatprep.mubr.bf16.mxu0 0
  %1081 = vmatmul.mubr.bf16.gmra.mrb[0].mxu0 %v945
  %v1082 = vpop.f32.mrb[0].mxu0
  %v1083 = vadd.f32 %v911, %v1082
  %v1084 = vpop.f32.mrb[0].mxu0
  %v1085 = vpop.f32.mrb[0].mxu0
  %v1086 = vadd.f32 %v911, %v1085
  %v1087 = vpop.f32.mrb[0].mxu0
  %1088 = vmatprep.mubr.bf16.mxu0 0
  %1089 = vmatmul.mubr.bf16.gmra.mrb[0].mxu0 %v948
  %v1090 = vpop.f32.mrb[0].mxu0
  %v1091 = vadd.f32 %v911, %v1090
  %v1092 = vpop.f32.mrb[0].mxu0
  %v1093 = vpop.f32.mrb[0].mxu0
  %v1094 = vadd.f32 %v911, %v1093
  %v1095 = vpop.f32.mrb[0].mxu0
  %1096 = vmatprep.mubr.bf16.mxu0 0
  %1097 = vmatmul.mubr.bf16.gmra.mrb[0].mxu0 %v951
  %v1098 = vpop.f32.mrb[0].mxu0
  %v1099 = vadd.f32 %v911, %v1098
  %v1100 = vpop.f32.mrb[0].mxu0
  %v1101 = vpop.f32.mrb[0].mxu0
  %v1102 = vadd.f32 %v911, %v1101
  %v1103 = vpop.f32.mrb[0].mxu0
  %1104 = vmatprep.mubr.bf16.mxu0 0
  %1105 = vmatmul.mubr.bf16.gmra.mrb[0].mxu0 %v954
  %v1106 = vpop.f32.mrb[0].mxu0
  %v1107 = vadd.f32 %v911, %v1106
  %v1108 = vpop.f32.mrb[0].mxu0
  %v1109 = vpop.f32.mrb[0].mxu0
  %v1110 = vadd.f32 %v911, %v1109
  %v1111 = vpop.f32.mrb[0].mxu0
  %1112 = vmatprep.mubr.bf16.mxu0 0
  %1113 = vmatmul.mubr.bf16.gmra.mrb[0].mxu0 %v957
  %v1114 = vpop.f32.mrb[0].mxu0
  %v1115 = vadd.f32 %v911, %v1114
  %v1116 = vpop.f32.mrb[0].mxu0
  %v1117 = vpop.f32.mrb[0].mxu0
  %v1118 = vadd.f32 %v911, %v1117
  %v1119 = vpop.f32.mrb[0].mxu0
  %1120 = vmatprep.mubr.bf16.mxu0 0
  %1121 = vmatmul.mubr.bf16.gmra.mrb[0].mxu0 %v960
  %v1122 = vpop.f32.mrb[0].mxu0
  %v1123 = vadd.f32 %v911, %v1122
  %v1124 = vpop.f32.mrb[0].mxu0
  %v1125 = vpop.f32.mrb[0].mxu0
  %v1126 = vadd.f32 %v911, %v1125
  %v1127 = vpop.f32.mrb[0].mxu0
  %1128 = vmatprep.mubr.bf16.mxu0 0
  %1129 = vmatmul.mubr.bf16.gmra.mrb[0].mxu0 %v962
  %v1130 = vpop.f32.mrb[0].mxu0
  %v1131 = vadd.f32 %v911, %v1130
  %v1132 = vpop.f32.mrb[0].mxu0
  %v1133 = vpop.f32.mrb[0].mxu0
  %v1134 = vadd.f32 %v911, %v1133
  %v1135 = vpop.f32.mrb[0].mxu0
  %1136 = vmatprep.mubr.bf16.mxu0 0
  %1137 = vmatmul.mubr.bf16.gmra.mrb[0].mxu0 %v965
  %v1138 = vpop.f32.mrb[0].mxu0
  %v1139 = vadd.f32 %v911, %v1138
  %v1140 = vpop.f32.mrb[0].mxu0
  %v1141 = vpop.f32.mrb[0].mxu0
  %v1142 = vadd.f32 %v911, %v1141
  %v1143 = vpop.f32.mrb[0].mxu0
  %1144 = vmatprep.mubr.bf16.mxu0 0
  %1145 = vmatmul.mubr.bf16.gmra.mrb[0].mxu0 %v968
  %v1146 = vpop.f32.mrb[0].mxu0
  %v1147 = vadd.f32 %v911, %v1146
  %v1148 = vpop.f32.mrb[0].mxu0
  %v1149 = vpop.f32.mrb[0].mxu0
  %v1150 = vadd.f32 %v911, %v1149
  %v1151 = vpop.f32.mrb[0].mxu0
  %1152 = vmatprep.mubr.bf16.mxu0 0
  %1153 = vmatmul.mubr.bf16.gmra.mrb[0].mxu0 %v971
  %v1154 = vpop.f32.mrb[0].mxu0
  %v1155 = vadd.f32 %v911, %v1154
  %v1156 = vpop.f32.mrb[0].mxu0
  %v1157 = vpop.f32.mrb[0].mxu0
  %v1158 = vadd.f32 %v911, %v1157
  %v1159 = vpop.f32.mrb[0].mxu0
  %1160 = vmatprep.mubr.bf16.mxu0 0
  %1161 = vmatmul.mubr.bf16.gmra.mrb[0].mxu0 %v974
  %v1162 = vpop.f32.mrb[0].mxu0
  %v1163 = vadd.f32 %v911, %v1162
  %v1164 = vpop.f32.mrb[0].mxu0
  %v1165 = vpop.f32.mrb[0].mxu0
  %v1166 = vadd.f32 %v911, %v1165
  %v1167 = vpop.f32.mrb[0].mxu0
  %1168 = vmatprep.mubr.bf16.mxu0 0
  %1169 = vmatmul.mubr.bf16.gmra.mrb[0].mxu0 %v977
  %v1170 = vpop.f32.mrb[0].mxu0
  %v1171 = vadd.f32 %v911, %v1170
  %v1172 = vpop.f32.mrb[0].mxu0
  %v1173 = vpop.f32.mrb[0].mxu0
  %v1174 = vadd.f32 %v911, %v1173
  %v1175 = vpop.f32.mrb[0].mxu0
  %1176 = vmatprep.mubr.bf16.mxu0 0
  %1177 = vmatmul.mubr.bf16.gmra.mrb[0].mxu0 %v980
  %v1178 = vpop.f32.mrb[0].mxu0
  %v1179 = vadd.f32 %v911, %v1178
  %v1180 = vpop.f32.mrb[0].mxu0
  %v1181 = vpop.f32.mrb[0].mxu0
  %v1182 = vadd.f32 %v911, %v1181
  %v1183 = vpop.f32.mrb[0].mxu0
  %1184 = vmatprep.mubr.bf16.mxu0 0
  %1185 = vmatmul.mubr.bf16.gmra.mrb[0].mxu0 %v983
  %v1186 = vpop.f32.mrb[0].mxu0
  %v1187 = vadd.f32 %v911, %v1186
  %v1188 = vpop.f32.mrb[0].mxu0
  %v1189 = vpop.f32.mrb[0].mxu0
  %v1190 = vadd.f32 %v911, %v1189
  %v1191 = vpop.f32.mrb[0].mxu0
  %1192 = vmatprep.mubr.bf16.mxu0 0
  %1193 = vmatmul.mubr.bf16.gmra.mrb[0].mxu0 %v986
  %v1194 = vpop.f32.mrb[0].mxu0
  %v1195 = vadd.f32 %v911, %v1194
  %v1196 = vpop.f32.mrb[0].mxu0
  %v1197 = vpop.f32.mrb[0].mxu0
  %v1198 = vadd.f32 %v911, %v1197
  %v1199 = vpop.f32.mrb[0].mxu0
  %1200 = vmatprep.mubr.bf16.mxu0 0
  %1201 = vmatmul.mubr.bf16.gmra.mrb[0].mxu0 %v989
  %v1202 = vpop.f32.mrb[0].mxu0
  %v1203 = vadd.f32 %v911, %v1202
  %v1204 = vpop.f32.mrb[0].mxu0
  %v1205 = vpop.f32.mrb[0].mxu0
  %v1206 = vadd.f32 %v911, %v1205
  %v1207 = vpop.f32.mrb[0].mxu0
  %1208 = vmatprep.mubr.bf16.mxu0 0
  %1209 = vmatmul.mubr.bf16.gmra.mrb[0].mxu0 %v992
  %v1210 = vpop.f32.mrb[0].mxu0
  %v1211 = vadd.f32 %v911, %v1210
  %v1212 = vpop.f32.mrb[0].mxu0
  %v1213 = vpop.f32.mrb[0].mxu0
  %v1214 = vadd.f32 %v911, %v1213
  %v1215 = vpop.f32.mrb[0].mxu0
  %1216 = vmatprep.mubr.bf16.mxu0 0
  %1217 = vmatmul.mubr.bf16.gmra.mrb[0].mxu0 %v995
  %v1218 = vpop.f32.mrb[0].mxu0
  %v1219 = vadd.f32 %v911, %v1218
  %v1220 = vpop.f32.mrb[0].mxu0
  %v1221 = vpop.f32.mrb[0].mxu0
  %v1222 = vadd.f32 %v911, %v1221
  %v1223 = vpop.f32.mrb[0].mxu0
  %1224 = vmatprep.mubr.bf16.mxu0 0
  %1225 = vmatmul.mubr.bf16.gmra.mrb[0].mxu0 %v998
  %v1226 = vpop.f32.mrb[0].mxu0
  %v1227 = vadd.f32 %v911, %v1226
  %v1228 = vpop.f32.mrb[0].mxu0
  %v1229 = vpop.f32.mrb[0].mxu0
  %v1230 = vadd.f32 %v911, %v1229
  %v1231 = vpop.f32.mrb[0].mxu0
  %1232 = vdwg.mxu0
  %vm1233 = vcmp.gt.f32.partialorder %v1035, 0.0
  %vm1234 = vcmp.gt.f32.partialorder %v1038, 0.0
  %vm1235 = vcmp.gt.f32.partialorder %v1043, 0.0
  %vm1236 = vcmp.gt.f32.partialorder %v1046, 0.0
  %vm1237 = vcmp.gt.f32.partialorder %v1051, 0.0
  %vm1238 = vcmp.gt.f32.partialorder %v1054, 0.0
  %vm1239 = vcmp.gt.f32.partialorder %v1059, 0.0
  %vm1240 = vcmp.gt.f32.partialorder %v1062, 0.0
  %vm1241 = vcmp.gt.f32.partialorder %v1067, 0.0
  %vm1242 = vcmp.gt.f32.partialorder %v1070, 0.0
  %vm1243 = vcmp.gt.f32.partialorder %v1075, 0.0
  %vm1244 = vcmp.gt.f32.partialorder %v1078, 0.0
  %vm1245 = vcmp.gt.f32.partialorder %v1083, 0.0
  %vm1246 = vcmp.gt.f32.partialorder %v1086, 0.0
  %vm1247 = vcmp.gt.f32.partialorder %v1091, 0.0
  %vm1248 = vcmp.gt.f32.partialorder %v1094, 0.0
  %vm1249 = vcmp.gt.f32.partialorder %v1099, 0.0
  %vm1250 = vcmp.gt.f32.partialorder %v1102, 0.0
  %vm1251 = vcmp.gt.f32.partialorder %v1107, 0.0
  %vm1252 = vcmp.gt.f32.partialorder %v1110, 0.0
  %vm1253 = vcmp.gt.f32.partialorder %v1115, 0.0
  %vm1254 = vcmp.gt.f32.partialorder %v1118, 0.0
  %vm1255 = vcmp.gt.f32.partialorder %v1123, 0.0
  %vm1256 = vcmp.gt.f32.partialorder %v1126, 0.0
  %vm1257 = vcmp.gt.f32.partialorder %v1131, 0.0
  %vm1258 = vcmp.gt.f32.partialorder %v1134, 0.0
  %vm1259 = vcmp.gt.f32.partialorder %v1139, 0.0
  %vm1260 = vcmp.gt.f32.partialorder %v1142, 0.0
  %vm1261 = vcmp.gt.f32.partialorder %v1147, 0.0
  %vm1262 = vcmp.gt.f32.partialorder %v1150, 0.0
  %vm1263 = vcmp.gt.f32.partialorder %v1155, 0.0
  %vm1264 = vcmp.gt.f32.partialorder %v1158, 0.0
  %vm1265 = vcmp.gt.f32.partialorder %v1163, 0.0
  %vm1266 = vcmp.gt.f32.partialorder %v1166, 0.0
  %vm1267 = vcmp.gt.f32.partialorder %v1171, 0.0
  %vm1268 = vcmp.gt.f32.partialorder %v1174, 0.0
  %vm1269 = vcmp.gt.f32.partialorder %v1179, 0.0
  %vm1270 = vcmp.gt.f32.partialorder %v1182, 0.0
  %vm1271 = vcmp.gt.f32.partialorder %v1187, 0.0
  %vm1272 = vcmp.gt.f32.partialorder %v1190, 0.0
  %vm1273 = vcmp.gt.f32.partialorder %v1195, 0.0
  %vm1274 = vcmp.gt.f32.partialorder %v1198, 0.0
  %vm1275 = vcmp.gt.f32.partialorder %v1203, 0.0
  %vm1276 = vcmp.gt.f32.partialorder %v1206, 0.0
  %vm1277 = vcmp.gt.f32.partialorder %v1211, 0.0
  %vm1278 = vcmp.gt.f32.partialorder %v1214, 0.0
  %vm1279 = vcmp.gt.f32.partialorder %v1219, 0.0
  %vm1280 = vcmp.gt.f32.partialorder %v1222, 0.0
  %vm1281 = vcmp.gt.f32.partialorder %v1227, 0.0
  %vm1282 = vcmp.gt.f32.partialorder %v1230, 0.0
  %v1283 = vmin.f32 %v1035, 0.0
  %v1284 = vmin.f32 %v1038, 0.0
  %v1285 = vmin.f32 %v1043, 0.0
  %v1286 = vmin.f32 %v1046, 0.0
  %v1287 = vmin.f32 %v1051, 0.0
  %v1288 = vmin.f32 %v1054, 0.0
  %v1289 = vmin.f32 %v1059, 0.0
  %v1290 = vmin.f32 %v1062, 0.0
  %v1291 = vmin.f32 %v1067, 0.0
  %v1292 = vmin.f32 %v1070, 0.0
  %v1293 = vmin.f32 %v1075, 0.0
  %v1294 = vmin.f32 %v1078, 0.0
  %v1295 = vmin.f32 %v1083, 0.0
  %v1296 = vmin.f32 %v1086, 0.0
  %v1297 = vmin.f32 %v1091, 0.0
  %v1298 = vmin.f32 %v1094, 0.0
  %v1299 = vmin.f32 %v1099, 0.0
  %v1300 = vmin.f32 %v1102, 0.0
  %v1301 = vmin.f32 %v1107, 0.0
  %v1302 = vmin.f32 %v1110, 0.0
  %v1303 = vmin.f32 %v1115, 0.0
  %v1304 = vmin.f32 %v1118, 0.0
  %v1305 = vmin.f32 %v1123, 0.0
  %v1306 = vmin.f32 %v1126, 0.0
  %v1307 = vmin.f32 %v1131, 0.0
  %v1308 = vmin.f32 %v1134, 0.0
  %v1309 = vmin.f32 %v1139, 0.0
  %v1310 = vmin.f32 %v1142, 0.0
  %v1311 = vmin.f32 %v1147, 0.0
  %v1312 = vmin.f32 %v1150, 0.0
  %v1313 = vmin.f32 %v1155, 0.0
  %v1314 = vmin.f32 %v1158, 0.0
  %v1315 = vmin.f32 %v1163, 0.0
  %v1316 = vmin.f32 %v1166, 0.0
  %v1317 = vmin.f32 %v1171, 0.0
  %v1318 = vmin.f32 %v1174, 0.0
  %v1319 = vmin.f32 %v1179, 0.0
  %v1320 = vmin.f32 %v1182, 0.0
  %v1321 = vmin.f32 %v1187, 0.0
  %v1322 = vmin.f32 %v1190, 0.0
  %v1323 = vmin.f32 %v1195, 0.0
  %v1324 = vmin.f32 %v1198, 0.0
  %v1325 = vmin.f32 %v1203, 0.0
  %v1326 = vmin.f32 %v1206, 0.0
  %v1327 = vmin.f32 %v1211, 0.0
  %v1328 = vmin.f32 %v1214, 0.0
  %v1329 = vmin.f32 %v1219, 0.0
  %v1330 = vmin.f32 %v1222, 0.0
  %v1331 = vmin.f32 %v1227, 0.0
  %v1332 = vmin.f32 %v1230, 0.0
  %v1333 = vmul.f32 %v1283, 1.442695
  %v1334 = vpow.pop %v1333
  %v1335 = vmul.f32 %v1284, 1.442695
  %v1336 = vpow.pop %v1335
  %v1337 = vmul.f32 %v1285, 1.442695
  %v1338 = vpow.pop %v1337
  %v1339 = vmul.f32 %v1286, 1.442695
  %v1340 = vpow.pop %v1339
  %v1341 = vmul.f32 %v1287, 1.442695
  %v1342 = vpow.pop %v1341
  %v1343 = vmul.f32 %v1288, 1.442695
  %v1344 = vpow.pop %v1343
  %v1345 = vmul.f32 %v1289, 1.442695
  %v1346 = vpow.pop %v1345
  %v1347 = vmul.f32 %v1290, 1.442695
  %v1348 = vpow.pop %v1347
  %v1349 = vmul.f32 %v1291, 1.442695
  %v1350 = vpow.pop %v1349
  %v1351 = vmul.f32 %v1292, 1.442695
  %v1352 = vpow.pop %v1351
  %v1353 = vmul.f32 %v1293, 1.442695
  %v1354 = vpow.pop %v1353
  %v1355 = vmul.f32 %v1294, 1.442695
  %v1356 = vpow.pop %v1355
  %v1357 = vmul.f32 %v1295, 1.442695
  %v1358 = vpow.pop %v1357
  %v1359 = vmul.f32 %v1296, 1.442695
  %v1360 = vpow.pop %v1359
  %v1361 = vmul.f32 %v1297, 1.442695
  %v1362 = vpow.pop %v1361
  %v1363 = vmul.f32 %v1298, 1.442695
  %v1364 = vpow.pop %v1363
  %v1365 = vmul.f32 %v1299, 1.442695
  %v1366 = vpow.pop %v1365
  %v1367 = vmul.f32 %v1300, 1.442695
  %v1368 = vpow.pop %v1367
  %v1369 = vmul.f32 %v1301, 1.442695
  %v1370 = vpow.pop %v1369
  %v1371 = vmul.f32 %v1302, 1.442695
  %v1372 = vpow.pop %v1371
  %v1373 = vmul.f32 %v1303, 1.442695
  %v1374 = vpow.pop %v1373
  %v1375 = vmul.f32 %v1304, 1.442695
  %v1376 = vpow.pop %v1375
  %v1377 = vmul.f32 %v1305, 1.442695
  %v1378 = vpow.pop %v1377
  %v1379 = vmul.f32 %v1306, 1.442695
  %v1380 = vpow.pop %v1379
  %v1381 = vmul.f32 %v1307, 1.442695
  %v1382 = vpow.pop %v1381
  %v1383 = vmul.f32 %v1308, 1.442695
  %v1384 = vpow.pop %v1383
  %v1385 = vmul.f32 %v1309, 1.442695
  %v1386 = vpow.pop %v1385
  %v1387 = vmul.f32 %v1310, 1.442695
  %v1388 = vpow.pop %v1387
  %v1389 = vmul.f32 %v1311, 1.442695
  %v1390 = vpow.pop %v1389
  %v1391 = vmul.f32 %v1312, 1.442695
  %v1392 = vpow.pop %v1391
  %v1393 = vmul.f32 %v1313, 1.442695
  %v1394 = vpow.pop %v1393
  %v1395 = vmul.f32 %v1314, 1.442695
  %v1396 = vpow.pop %v1395
  %v1397 = vmul.f32 %v1315, 1.442695
  %v1398 = vpow.pop %v1397
  %v1399 = vmul.f32 %v1316, 1.442695
  %v1400 = vpow.pop %v1399
  %v1401 = vmul.f32 %v1317, 1.442695
  %v1402 = vpow.pop %v1401
  %v1403 = vmul.f32 %v1318, 1.442695
  %v1404 = vpow.pop %v1403
  %v1405 = vmul.f32 %v1319, 1.442695
  %v1406 = vpow.pop %v1405
  %v1407 = vmul.f32 %v1320, 1.442695
  %v1408 = vpow.pop %v1407
  %v1409 = vmul.f32 %v1321, 1.442695
  %v1410 = vpow.pop %v1409
  %v1411 = vmul.f32 %v1322, 1.442695
  %v1412 = vpow.pop %v1411
  %v1413 = vmul.f32 %v1323, 1.442695
  %v1414 = vpow.pop %v1413
  %v1415 = vmul.f32 %v1324, 1.442695
  %v1416 = vpow.pop %v1415
  %v1417 = vmul.f32 %v1325, 1.442695
  %v1418 = vpow.pop %v1417
  %v1419 = vmul.f32 %v1326, 1.442695
  %v1420 = vpow.pop %v1419
  %v1421 = vmul.f32 %v1327, 1.442695
  %v1422 = vpow.pop %v1421
  %v1423 = vmul.f32 %v1328, 1.442695
  %v1424 = vpow.pop %v1423
  %v1425 = vmul.f32 %v1329, 1.442695
  %v1426 = vpow.pop %v1425
  %v1427 = vmul.f32 %v1330, 1.442695
  %v1428 = vpow.pop %v1427
  %v1429 = vmul.f32 %v1331, 1.442695
  %v1430 = vpow.pop %v1429
  %v1431 = vmul.f32 %v1332, 1.442695
  %v1432 = vpow.pop %v1431
  %v1433 = vsub.f32 %v1334, 1.0
  %v1434 = vsub.f32 %v1336, 1.0
  %v1435 = vsub.f32 %v1338, 1.0
  %v1436 = vsub.f32 %v1340, 1.0
  %v1437 = vsub.f32 %v1342, 1.0
  %v1438 = vsub.f32 %v1344, 1.0
  %v1439 = vsub.f32 %v1346, 1.0
  %v1440 = vsub.f32 %v1348, 1.0
  %v1441 = vsub.f32 %v1350, 1.0
  %v1442 = vsub.f32 %v1352, 1.0
  %v1443 = vsub.f32 %v1354, 1.0
  %v1444 = vsub.f32 %v1356, 1.0
  %v1445 = vsub.f32 %v1358, 1.0
  %v1446 = vsub.f32 %v1360, 1.0
  %v1447 = vsub.f32 %v1362, 1.0
  %v1448 = vsub.f32 %v1364, 1.0
  %v1449 = vsub.f32 %v1366, 1.0
  %v1450 = vsub.f32 %v1368, 1.0
  %v1451 = vsub.f32 %v1370, 1.0
  %v1452 = vsub.f32 %v1372, 1.0
  %v1453 = vsub.f32 %v1374, 1.0
  %v1454 = vsub.f32 %v1376, 1.0
  %v1455 = vsub.f32 %v1378, 1.0
  %v1456 = vsub.f32 %v1380, 1.0
  %v1457 = vsub.f32 %v1382, 1.0
  %v1458 = vsub.f32 %v1384, 1.0
  %v1459 = vsub.f32 %v1386, 1.0
  %v1460 = vsub.f32 %v1388, 1.0
  %v1461 = vsub.f32 %v1390, 1.0
  %v1462 = vsub.f32 %v1392, 1.0
  %v1463 = vsub.f32 %v1394, 1.0
  %v1464 = vsub.f32 %v1396, 1.0
  %v1465 = vsub.f32 %v1398, 1.0
  %v1466 = vsub.f32 %v1400, 1.0
  %v1467 = vsub.f32 %v1402, 1.0
  %v1468 = vsub.f32 %v1404, 1.0
  %v1469 = vsub.f32 %v1406, 1.0
  %v1470 = vsub.f32 %v1408, 1.0
  %v1471 = vsub.f32 %v1410, 1.0
  %v1472 = vsub.f32 %v1412, 1.0
  %v1473 = vsub.f32 %v1414, 1.0
  %v1474 = vsub.f32 %v1416, 1.0
  %v1475 = vsub.f32 %v1418, 1.0
  %v1476 = vsub.f32 %v1420, 1.0
  %v1477 = vsub.f32 %v1422, 1.0
  %v1478 = vsub.f32 %v1424, 1.0
  %v1479 = vsub.f32 %v1426, 1.0
  %v1480 = vsub.f32 %v1428, 1.0
  %v1481 = vsub.f32 %v1430, 1.0
  %v1482 = vsub.f32 %v1432, 1.0
  %v1483 = vsel %vm1233, %v1035, %v1433
  %v1484 = vsel %vm1234, %v1038, %v1434
  %v1485 = vsel %vm1235, %v1043, %v1435
  %v1486 = vsel %vm1236, %v1046, %v1436
  %v1487 = vsel %vm1237, %v1051, %v1437
  %v1488 = vsel %vm1238, %v1054, %v1438
  %v1489 = vsel %vm1239, %v1059, %v1439
  %v1490 = vsel %vm1240, %v1062, %v1440
  %v1491 = vsel %vm1241, %v1067, %v1441
  %v1492 = vsel %vm1242, %v1070, %v1442
  %v1493 = vsel %vm1243, %v1075, %v1443
  %v1494 = vsel %vm1244, %v1078, %v1444
  %v1495 = vsel %vm1245, %v1083, %v1445
  %v1496 = vsel %vm1246, %v1086, %v1446
  %v1497 = vsel %vm1247, %v1091, %v1447
  %v1498 = vsel %vm1248, %v1094, %v1448
  %v1499 = vsel %vm1249, %v1099, %v1449
  %v1500 = vsel %vm1250, %v1102, %v1450
  %v1501 = vsel %vm1251, %v1107, %v1451
  %v1502 = vsel %vm1252, %v1110, %v1452
  %v1503 = vsel %vm1253, %v1115, %v1453
  %v1504 = vsel %vm1254, %v1118, %v1454
  %v1505 = vsel %vm1255, %v1123, %v1455
  %v1506 = vsel %vm1256, %v1126, %v1456
  %v1507 = vsel %vm1257, %v1131, %v1457
  %v1508 = vsel %vm1258, %v1134, %v1458
  %v1509 = vsel %vm1259, %v1139, %v1459
  %v1510 = vsel %vm1260, %v1142, %v1460
  %v1511 = vsel %vm1261, %v1147, %v1461
  %v1512 = vsel %vm1262, %v1150, %v1462
  %v1513 = vsel %vm1263, %v1155, %v1463
  %v1514 = vsel %vm1264, %v1158, %v1464
  %v1515 = vsel %vm1265, %v1163, %v1465
  %v1516 = vsel %vm1266, %v1166, %v1466
  %v1517 = vsel %vm1267, %v1171, %v1467
  %v1518 = vsel %vm1268, %v1174, %v1468
  %v1519 = vsel %vm1269, %v1179, %v1469
  %v1520 = vsel %vm1270, %v1182, %v1470
  %v1521 = vsel %vm1271, %v1187, %v1471
  %v1522 = vsel %vm1272, %v1190, %v1472
  %v1523 = vsel %vm1273, %v1195, %v1473
  %v1524 = vsel %vm1274, %v1198, %v1474
  %v1525 = vsel %vm1275, %v1203, %v1475
  %v1526 = vsel %vm1276, %v1206, %v1476
  %v1527 = vsel %vm1277, %v1211, %v1477
  %v1528 = vsel %vm1278, %v1214, %v1478
  %v1529 = vsel %vm1279, %v1219, %v1479
  %v1530 = vsel %vm1280, %v1222, %v1480
  %v1531 = vsel %vm1281, %v1227, %v1481
  %v1532 = vsel %vm1282, %v1230, %v1482
  %v1533 = vpack.c.bf16 %v1484, %v1483
  %v1534 = vpack.c.bf16 %v1486, %v1485
  %v1535 = vpack.c.bf16 %v1488, %v1487
  %v1536 = vpack.c.bf16 %v1490, %v1489
  %v1537 = vpack.c.bf16 %v1492, %v1491
  %v1538 = vpack.c.bf16 %v1494, %v1493
  %v1539 = vpack.c.bf16 %v1496, %v1495
  %v1540 = vpack.c.bf16 %v1498, %v1497
  %v1541 = vpack.c.bf16 %v1500, %v1499
  %v1542 = vpack.c.bf16 %v1502, %v1501
  %v1543 = vpack.c.bf16 %v1504, %v1503
  %v1544 = vpack.c.bf16 %v1506, %v1505
  %v1545 = vpack.c.bf16 %v1508, %v1507
  %v1546 = vpack.c.bf16 %v1510, %v1509
  %v1547 = vpack.c.bf16 %v1512, %v1511
  %v1548 = vpack.c.bf16 %v1514, %v1513
  %v1549 = vpack.c.bf16 %v1516, %v1515
  %v1550 = vpack.c.bf16 %v1518, %v1517
  %v1551 = vpack.c.bf16 %v1520, %v1519
  %v1552 = vpack.c.bf16 %v1522, %v1521
  %v1553 = vpack.c.bf16 %v1524, %v1523
  %v1554 = vpack.c.bf16 %v1526, %v1525
  %v1555 = vpack.c.bf16 %v1528, %v1527
  %v1556 = vpack.c.bf16 %v1530, %v1529
  %v1557 = vpack.c.bf16 %v1532, %v1531
  %v1558 = vld [vmem:[%s7] sm:$0xf]
  %v1559 = vld [vmem:[%s7 + $0x4] sm:$0xf]
  %v1560 = vld [vmem:[%s7 + $0x8] sm:$0xf]
  %v1561 = vld [vmem:[%s7 + $0xc] sm:$0xf]
  %v1562 = vld [vmem:[%s8] sm:$0x1]
  %v1564 = vlaneseq
  %v1565 = vshrl.u32 %v1564, 7
  %v1566 = vsub.s32 0, %v1565
  %v1567 = vrot.slane %v1562, %v1566
  %v1573 = vunpack.c.l.b16 %v1558
  %v1574 = vunpack.c.l.b16 %v1559
  %v1575 = vunpack.c.l.b16 %v1560
  %v1576 = vunpack.c.l.b16 %v1561
  %v1577 = vpack.c.b16 %v1574, %v1573
  %v1578 = vpack.c.b16 %v1576, %v1575
  %v1582 = vsel %vm925, %v1533, 0
  %v1585 = vsel %vm925, %v1534, 0
  %v1588 = vsel %vm925, %v1535, 0
  %v1591 = vsel %vm925, %v1536, 0
  %v1594 = vsel %vm925, %v1537, 0
  %v1597 = vsel %vm925, %v1538, 0
  %v1600 = vsel %vm925, %v1539, 0
  %v1603 = vsel %vm925, %v1540, 0
  %v1606 = vsel %vm925, %v1541, 0
  %v1609 = vsel %vm925, %v1542, 0
  %v1612 = vsel %vm925, %v1543, 0
  %v1615 = vsel %vm925, %v1544, 0
  %v1618 = vsel %vm925, %v1545, 0
  %v1621 = vsel %vm925, %v1546, 0
  %v1624 = vsel %vm925, %v1547, 0
  %v1627 = vsel %vm925, %v1548, 0
  %v1630 = vsel %vm925, %v1549, 0
  %v1633 = vsel %vm925, %v1550, 0
  %v1636 = vsel %vm925, %v1551, 0
  %v1639 = vsel %vm925, %v1552, 0
  %v1642 = vsel %vm925, %v1553, 0
  %v1645 = vsel %vm925, %v1554, 0
  %v1648 = vsel %vm925, %v1555, 0
  %v1651 = vsel %vm925, %v1556, 0
  %v1654 = vsel %vm925, %v1557, 0
  %1656 = vmatprep.subr.bf16.mxu0 0
  %1657 = vmatpush1.bf16.msra.mxu0 %v1577
  %1658 = vmatprep.subr.bf16.mxu0 0
  %1659 = vmatpush1.bf16.msra.mxu0 %v1578
  %1660 = vmatprep.subr.bf16.mxu0 0
  %1661 = vmatpush1.bf16.msra.mxu0 0
  %1662 = vmatprep.subr.bf16.mxu0 0
  %1663 = vmatpush1.bf16.msra.mxu0 0
  %1664 = vmatprep.subr.bf16.mxu0 0
  %1665 = vmatpush1.bf16.msra.mxu0 0
  %1666 = vmatprep.subr.bf16.mxu0 0
  %1667 = vmatpush1.bf16.msra.mxu0 0
  %1668 = vmatprep.subr.bf16.mxu0 0
  %1669 = vmatpush1.bf16.msra.mxu0 0
  %1670 = vmatprep.subr.bf16.mxu0 0
  %1671 = vmatpush1.bf16.msra.mxu0 0
  %1672 = vmatprep.subr.bf16.mxu0 0
  %1673 = vmatpush1.bf16.msra.mxu0 0
  %1674 = vmatprep.subr.bf16.mxu0 0
  %1675 = vmatpush1.bf16.msra.mxu0 0
  %1676 = vmatprep.subr.bf16.mxu0 0
  %1677 = vmatpush1.bf16.msra.mxu0 0
  %1678 = vmatprep.subr.bf16.mxu0 0
  %1679 = vmatpush1.bf16.msra.mxu0 0
  %1680 = vmatprep.subr.bf16.mxu0 0
  %1681 = vmatpush1.bf16.msra.mxu0 0
  %1682 = vmatprep.subr.bf16.mxu0 0
  %1683 = vmatpush1.bf16.msra.mxu0 0
  %1684 = vmatprep.subr.bf16.mxu0 0
  %1685 = vmatpush1.bf16.msra.mxu0 0
  %1686 = vmatprep.subr.bf16.mxu0 0
  %1687 = vmatpush1.bf16.msra.mxu0 0
  %1688 = vmatprep.mubr.bf16.mxu0 0
  %1689 = vmatmul.mubr.bf16.gmra.mrb[0].mxu0 %v1582
  %v1690 = vpop.f32.mrb[0].mxu0
  %v1691 = vadd.f32 %v1567, %v1690
  %v1692 = vpop.f32.mrb[0].mxu0
  %v1693 = vpop.f32.mrb[0].mxu0
  %v1694 = vadd.f32 %v1567, %v1693
  %v1695 = vpop.f32.mrb[0].mxu0
  %1696 = vmatprep.mubr.bf16.mxu0 0
  %1697 = vmatmul.mubr.bf16.gmra.mrb[0].mxu0 %v1585
  %v1698 = vpop.f32.mrb[0].mxu0
  %v1699 = vadd.f32 %v1567, %v1698
  %v1700 = vpop.f32.mrb[0].mxu0
  %v1701 = vpop.f32.mrb[0].mxu0
  %v1702 = vadd.f32 %v1567, %v1701
  %v1703 = vpop.f32.mrb[0].mxu0
  %1704 = vmatprep.mubr.bf16.mxu0 0
  %1705 = vmatmul.mubr.bf16.gmra.mrb[0].mxu0 %v1588
  %v1706 = vpop.f32.mrb[0].mxu0
  %v1707 = vadd.f32 %v1567, %v1706
  %v1708 = vpop.f32.mrb[0].mxu0
  %v1709 = vpop.f32.mrb[0].mxu0
  %v1710 = vadd.f32 %v1567, %v1709
  %v1711 = vpop.f32.mrb[0].mxu0
  %1712 = vmatprep.mubr.bf16.mxu0 0
  %1713 = vmatmul.mubr.bf16.gmra.mrb[0].mxu0 %v1591
  %v1714 = vpop.f32.mrb[0].mxu0
  %v1715 = vadd.f32 %v1567, %v1714
  %v1716 = vpop.f32.mrb[0].mxu0
  %v1717 = vpop.f32.mrb[0].mxu0
  %v1718 = vadd.f32 %v1567, %v1717
  %v1719 = vpop.f32.mrb[0].mxu0
  %1720 = vmatprep.mubr.bf16.mxu0 0
  %1721 = vmatmul.mubr.bf16.gmra.mrb[0].mxu0 %v1594
  %v1722 = vpop.f32.mrb[0].mxu0
  %v1723 = vadd.f32 %v1567, %v1722
  %v1724 = vpop.f32.mrb[0].mxu0
  %v1725 = vpop.f32.mrb[0].mxu0
  %v1726 = vadd.f32 %v1567, %v1725
  %v1727 = vpop.f32.mrb[0].mxu0
  %1728 = vmatprep.mubr.bf16.mxu0 0
  %1729 = vmatmul.mubr.bf16.gmra.mrb[0].mxu0 %v1597
  %v1730 = vpop.f32.mrb[0].mxu0
  %v1731 = vadd.f32 %v1567, %v1730
  %v1732 = vpop.f32.mrb[0].mxu0
  %v1733 = vpop.f32.mrb[0].mxu0
  %v1734 = vadd.f32 %v1567, %v1733
  %v1735 = vpop.f32.mrb[0].mxu0
  %1736 = vmatprep.mubr.bf16.mxu0 0
  %1737 = vmatmul.mubr.bf16.gmra.mrb[0].mxu0 %v1600
  %v1738 = vpop.f32.mrb[0].mxu0
  %v1739 = vadd.f32 %v1567, %v1738
  %v1740 = vpop.f32.mrb[0].mxu0
  %v1741 = vpop.f32.mrb[0].mxu0
  %v1742 = vadd.f32 %v1567, %v1741
  %v1743 = vpop.f32.mrb[0].mxu0
  %1744 = vmatprep.mubr.bf16.mxu0 0
  %1745 = vmatmul.mubr.bf16.gmra.mrb[0].mxu0 %v1603
  %v1746 = vpop.f32.mrb[0].mxu0
  %v1747 = vadd.f32 %v1567, %v1746
  %v1748 = vpop.f32.mrb[0].mxu0
  %v1749 = vpop.f32.mrb[0].mxu0
  %v1750 = vadd.f32 %v1567, %v1749
  %v1751 = vpop.f32.mrb[0].mxu0
  %1752 = vmatprep.mubr.bf16.mxu0 0
  %1753 = vmatmul.mubr.bf16.gmra.mrb[0].mxu0 %v1606
  %v1754 = vpop.f32.mrb[0].mxu0
  %v1755 = vadd.f32 %v1567, %v1754
  %v1756 = vpop.f32.mrb[0].mxu0
  %v1757 = vpop.f32.mrb[0].mxu0
  %v1758 = vadd.f32 %v1567, %v1757
  %v1759 = vpop.f32.mrb[0].mxu0
  %1760 = vmatprep.mubr.bf16.mxu0 0
  %1761 = vmatmul.mubr.bf16.gmra.mrb[0].mxu0 %v1609
  %v1762 = vpop.f32.mrb[0].mxu0
  %v1763 = vadd.f32 %v1567, %v1762
  %v1764 = vpop.f32.mrb[0].mxu0
  %v1765 = vpop.f32.mrb[0].mxu0
  %v1766 = vadd.f32 %v1567, %v1765
  %v1767 = vpop.f32.mrb[0].mxu0
  %1768 = vmatprep.mubr.bf16.mxu0 0
  %1769 = vmatmul.mubr.bf16.gmra.mrb[0].mxu0 %v1612
  %v1770 = vpop.f32.mrb[0].mxu0
  %v1771 = vadd.f32 %v1567, %v1770
  %v1772 = vpop.f32.mrb[0].mxu0
  %v1773 = vpop.f32.mrb[0].mxu0
  %v1774 = vadd.f32 %v1567, %v1773
  %v1775 = vpop.f32.mrb[0].mxu0
  %1776 = vmatprep.mubr.bf16.mxu0 0
  %1777 = vmatmul.mubr.bf16.gmra.mrb[0].mxu0 %v1615
  %v1778 = vpop.f32.mrb[0].mxu0
  %v1779 = vadd.f32 %v1567, %v1778
  %v1780 = vpop.f32.mrb[0].mxu0
  %v1781 = vpop.f32.mrb[0].mxu0
  %v1782 = vadd.f32 %v1567, %v1781
  %v1783 = vpop.f32.mrb[0].mxu0
  %1784 = vmatprep.mubr.bf16.mxu0 0
  %1785 = vmatmul.mubr.bf16.gmra.mrb[0].mxu0 %v1618
  %v1786 = vpop.f32.mrb[0].mxu0
  %v1787 = vadd.f32 %v1567, %v1786
  %v1788 = vpop.f32.mrb[0].mxu0
  %v1789 = vpop.f32.mrb[0].mxu0
  %v1790 = vadd.f32 %v1567, %v1789
  %v1791 = vpop.f32.mrb[0].mxu0
  %1792 = vmatprep.mubr.bf16.mxu0 0
  %1793 = vmatmul.mubr.bf16.gmra.mrb[0].mxu0 %v1621
  %v1794 = vpop.f32.mrb[0].mxu0
  %v1795 = vadd.f32 %v1567, %v1794
  %v1796 = vpop.f32.mrb[0].mxu0
  %v1797 = vpop.f32.mrb[0].mxu0
  %v1798 = vadd.f32 %v1567, %v1797
  %v1799 = vpop.f32.mrb[0].mxu0
  %1800 = vmatprep.mubr.bf16.mxu0 0
  %1801 = vmatmul.mubr.bf16.gmra.mrb[0].mxu0 %v1624
  %v1802 = vpop.f32.mrb[0].mxu0
  %v1803 = vadd.f32 %v1567, %v1802
  %v1804 = vpop.f32.mrb[0].mxu0
  %v1805 = vpop.f32.mrb[0].mxu0
  %v1806 = vadd.f32 %v1567, %v1805
  %v1807 = vpop.f32.mrb[0].mxu0
  %1808 = vmatprep.mubr.bf16.mxu0 0
  %1809 = vmatmul.mubr.bf16.gmra.mrb[0].mxu0 %v1627
  %v1810 = vpop.f32.mrb[0].mxu0
  %v1811 = vadd.f32 %v1567, %v1810
  %v1812 = vpop.f32.mrb[0].mxu0
  %v1813 = vpop.f32.mrb[0].mxu0
  %v1814 = vadd.f32 %v1567, %v1813
  %v1815 = vpop.f32.mrb[0].mxu0
  %1816 = vmatprep.mubr.bf16.mxu0 0
  %1817 = vmatmul.mubr.bf16.gmra.mrb[0].mxu0 %v1630
  %v1818 = vpop.f32.mrb[0].mxu0
  %v1819 = vadd.f32 %v1567, %v1818
  %v1820 = vpop.f32.mrb[0].mxu0
  %v1821 = vpop.f32.mrb[0].mxu0
  %v1822 = vadd.f32 %v1567, %v1821
  %v1823 = vpop.f32.mrb[0].mxu0
  %1824 = vmatprep.mubr.bf16.mxu0 0
  %1825 = vmatmul.mubr.bf16.gmra.mrb[0].mxu0 %v1633
  %v1826 = vpop.f32.mrb[0].mxu0
  %v1827 = vadd.f32 %v1567, %v1826
  %v1828 = vpop.f32.mrb[0].mxu0
  %v1829 = vpop.f32.mrb[0].mxu0
  %v1830 = vadd.f32 %v1567, %v1829
  %v1831 = vpop.f32.mrb[0].mxu0
  %1832 = vmatprep.mubr.bf16.mxu0 0
  %1833 = vmatmul.mubr.bf16.gmra.mrb[0].mxu0 %v1636
  %v1834 = vpop.f32.mrb[0].mxu0
  %v1835 = vadd.f32 %v1567, %v1834
  %v1836 = vpop.f32.mrb[0].mxu0
  %v1837 = vpop.f32.mrb[0].mxu0
  %v1838 = vadd.f32 %v1567, %v1837
  %v1839 = vpop.f32.mrb[0].mxu0
  %1840 = vmatprep.mubr.bf16.mxu0 0
  %1841 = vmatmul.mubr.bf16.gmra.mrb[0].mxu0 %v1639
  %v1842 = vpop.f32.mrb[0].mxu0
  %v1843 = vadd.f32 %v1567, %v1842
  %v1844 = vpop.f32.mrb[0].mxu0
  %v1845 = vpop.f32.mrb[0].mxu0
  %v1846 = vadd.f32 %v1567, %v1845
  %v1847 = vpop.f32.mrb[0].mxu0
  %1848 = vmatprep.mubr.bf16.mxu0 0
  %1849 = vmatmul.mubr.bf16.gmra.mrb[0].mxu0 %v1642
  %v1850 = vpop.f32.mrb[0].mxu0
  %v1851 = vadd.f32 %v1567, %v1850
  %v1852 = vpop.f32.mrb[0].mxu0
  %v1853 = vpop.f32.mrb[0].mxu0
  %v1854 = vadd.f32 %v1567, %v1853
  %v1855 = vpop.f32.mrb[0].mxu0
  %1856 = vmatprep.mubr.bf16.mxu0 0
  %1857 = vmatmul.mubr.bf16.gmra.mrb[0].mxu0 %v1645
  %v1858 = vpop.f32.mrb[0].mxu0
  %v1859 = vadd.f32 %v1567, %v1858
  %v1860 = vpop.f32.mrb[0].mxu0
  %v1861 = vpop.f32.mrb[0].mxu0
  %v1862 = vadd.f32 %v1567, %v1861
  %v1863 = vpop.f32.mrb[0].mxu0
  %1864 = vmatprep.mubr.bf16.mxu0 0
  %1865 = vmatmul.mubr.bf16.gmra.mrb[0].mxu0 %v1648
  %v1866 = vpop.f32.mrb[0].mxu0
  %v1867 = vadd.f32 %v1567, %v1866
  %v1868 = vpop.f32.mrb[0].mxu0
  %v1869 = vpop.f32.mrb[0].mxu0
  %v1870 = vadd.f32 %v1567, %v1869
  %v1871 = vpop.f32.mrb[0].mxu0
  %1872 = vmatprep.mubr.bf16.mxu0 0
  %1873 = vmatmul.mubr.bf16.gmra.mrb[0].mxu0 %v1651
  %v1874 = vpop.f32.mrb[0].mxu0
  %v1875 = vadd.f32 %v1567, %v1874
  %v1876 = vpop.f32.mrb[0].mxu0
  %v1877 = vpop.f32.mrb[0].mxu0
  %v1878 = vadd.f32 %v1567, %v1877
  %v1879 = vpop.f32.mrb[0].mxu0
  %1880 = vmatprep.mubr.bf16.mxu0 0
  %1881 = vmatmul.mubr.bf16.gmra.mrb[0].mxu0 %v1654
  %v1882 = vpop.f32.mrb[0].mxu0
  %v1883 = vadd.f32 %v1567, %v1882
  %v1884 = vpop.f32.mrb[0].mxu0
  %v1885 = vpop.f32.mrb[0].mxu0
  %v1886 = vadd.f32 %v1567, %v1885
  %v1887 = vpop.f32.mrb[0].mxu0
  %1888 = vdwg.mxu0
  %vm1889 = vcmp.gt.f32.partialorder %v1691, 0.0
  %vm1890 = vcmp.gt.f32.partialorder %v1694, 0.0
  %vm1891 = vcmp.gt.f32.partialorder %v1699, 0.0
  %vm1892 = vcmp.gt.f32.partialorder %v1702, 0.0
  %vm1893 = vcmp.gt.f32.partialorder %v1707, 0.0
  %vm1894 = vcmp.gt.f32.partialorder %v1710, 0.0
  %vm1895 = vcmp.gt.f32.partialorder %v1715, 0.0
  %vm1896 = vcmp.gt.f32.partialorder %v1718, 0.0
  %vm1897 = vcmp.gt.f32.partialorder %v1723, 0.0
  %vm1898 = vcmp.gt.f32.partialorder %v1726, 0.0
  %vm1899 = vcmp.gt.f32.partialorder %v1731, 0.0
  %vm1900 = vcmp.gt.f32.partialorder %v1734, 0.0
  %vm1901 = vcmp.gt.f32.partialorder %v1739, 0.0
  %vm1902 = vcmp.gt.f32.partialorder %v1742, 0.0
  %vm1903 = vcmp.gt.f32.partialorder %v1747, 0.0
  %vm1904 = vcmp.gt.f32.partialorder %v1750, 0.0
  %vm1905 = vcmp.gt.f32.partialorder %v1755, 0.0
  %vm1906 = vcmp.gt.f32.partialorder %v1758, 0.0
  %vm1907 = vcmp.gt.f32.partialorder %v1763, 0.0
  %vm1908 = vcmp.gt.f32.partialorder %v1766, 0.0
  %vm1909 = vcmp.gt.f32.partialorder %v1771, 0.0
  %vm1910 = vcmp.gt.f32.partialorder %v1774, 0.0
  %vm1911 = vcmp.gt.f32.partialorder %v1779, 0.0
  %vm1912 = vcmp.gt.f32.partialorder %v1782, 0.0
  %vm1913 = vcmp.gt.f32.partialorder %v1787, 0.0
  %vm1914 = vcmp.gt.f32.partialorder %v1790, 0.0
  %vm1915 = vcmp.gt.f32.partialorder %v1795, 0.0
  %vm1916 = vcmp.gt.f32.partialorder %v1798, 0.0
  %vm1917 = vcmp.gt.f32.partialorder %v1803, 0.0
  %vm1918 = vcmp.gt.f32.partialorder %v1806, 0.0
  %vm1919 = vcmp.gt.f32.partialorder %v1811, 0.0
  %vm1920 = vcmp.gt.f32.partialorder %v1814, 0.0
  %vm1921 = vcmp.gt.f32.partialorder %v1819, 0.0
  %vm1922 = vcmp.gt.f32.partialorder %v1822, 0.0
  %vm1923 = vcmp.gt.f32.partialorder %v1827, 0.0
  %vm1924 = vcmp.gt.f32.partialorder %v1830, 0.0
  %vm1925 = vcmp.gt.f32.partialorder %v1835, 0.0
  %vm1926 = vcmp.gt.f32.partialorder %v1838, 0.0
  %vm1927 = vcmp.gt.f32.partialorder %v1843, 0.0
  %vm1928 = vcmp.gt.f32.partialorder %v1846, 0.0
  %vm1929 = vcmp.gt.f32.partialorder %v1851, 0.0
  %vm1930 = vcmp.gt.f32.partialorder %v1854, 0.0
  %vm1931 = vcmp.gt.f32.partialorder %v1859, 0.0
  %vm1932 = vcmp.gt.f32.partialorder %v1862, 0.0
  %vm1933 = vcmp.gt.f32.partialorder %v1867, 0.0
  %vm1934 = vcmp.gt.f32.partialorder %v1870, 0.0
  %vm1935 = vcmp.gt.f32.partialorder %v1875, 0.0
  %vm1936 = vcmp.gt.f32.partialorder %v1878, 0.0
  %vm1937 = vcmp.gt.f32.partialorder %v1883, 0.0
  %vm1938 = vcmp.gt.f32.partialorder %v1886, 0.0
  %v1939 = vmin.f32 %v1691, 0.0
  %v1940 = vmin.f32 %v1694, 0.0
  %v1941 = vmin.f32 %v1699, 0.0
  %v1942 = vmin.f32 %v1702, 0.0
  %v1943 = vmin.f32 %v1707, 0.0
  %v1944 = vmin.f32 %v1710, 0.0
  %v1945 = vmin.f32 %v1715, 0.0
  %v1946 = vmin.f32 %v1718, 0.0
  %v1947 = vmin.f32 %v1723, 0.0
  %v1948 = vmin.f32 %v1726, 0.0
  %v1949 = vmin.f32 %v1731, 0.0
  %v1950 = vmin.f32 %v1734, 0.0
  %v1951 = vmin.f32 %v1739, 0.0
  %v1952 = vmin.f32 %v1742, 0.0
  %v1953 = vmin.f32 %v1747, 0.0
  %v1954 = vmin.f32 %v1750, 0.0
  %v1955 = vmin.f32 %v1755, 0.0
  %v1956 = vmin.f32 %v1758, 0.0
  %v1957 = vmin.f32 %v1763, 0.0
  %v1958 = vmin.f32 %v1766, 0.0
  %v1959 = vmin.f32 %v1771, 0.0
  %v1960 = vmin.f32 %v1774, 0.0
  %v1961 = vmin.f32 %v1779, 0.0
  %v1962 = vmin.f32 %v1782, 0.0
  %v1963 = vmin.f32 %v1787, 0.0
  %v1964 = vmin.f32 %v1790, 0.0
  %v1965 = vmin.f32 %v1795, 0.0
  %v1966 = vmin.f32 %v1798, 0.0
  %v1967 = vmin.f32 %v1803, 0.0
  %v1968 = vmin.f32 %v1806, 0.0
  %v1969 = vmin.f32 %v1811, 0.0
  %v1970 = vmin.f32 %v1814, 0.0
  %v1971 = vmin.f32 %v1819, 0.0
  %v1972 = vmin.f32 %v1822, 0.0
  %v1973 = vmin.f32 %v1827, 0.0
  %v1974 = vmin.f32 %v1830, 0.0
  %v1975 = vmin.f32 %v1835, 0.0
  %v1976 = vmin.f32 %v1838, 0.0
  %v1977 = vmin.f32 %v1843, 0.0
  %v1978 = vmin.f32 %v1846, 0.0
  %v1979 = vmin.f32 %v1851, 0.0
  %v1980 = vmin.f32 %v1854, 0.0
  %v1981 = vmin.f32 %v1859, 0.0
  %v1982 = vmin.f32 %v1862, 0.0
  %v1983 = vmin.f32 %v1867, 0.0
  %v1984 = vmin.f32 %v1870, 0.0
  %v1985 = vmin.f32 %v1875, 0.0
  %v1986 = vmin.f32 %v1878, 0.0
  %v1987 = vmin.f32 %v1883, 0.0
  %v1988 = vmin.f32 %v1886, 0.0
  %v1989 = vmul.f32 %v1939, 1.442695
  %v1990 = vpow.pop %v1989
  %v1991 = vmul.f32 %v1940, 1.442695
  %v1992 = vpow.pop %v1991
  %v1993 = vmul.f32 %v1941, 1.442695
  %v1994 = vpow.pop %v1993
  %v1995 = vmul.f32 %v1942, 1.442695
  %v1996 = vpow.pop %v1995
  %v1997 = vmul.f32 %v1943, 1.442695
  %v1998 = vpow.pop %v1997
  %v1999 = vmul.f32 %v1944, 1.442695
  %v2000 = vpow.pop %v1999
  %v2001 = vmul.f32 %v1945, 1.442695
  %v2002 = vpow.pop %v2001
  %v2003 = vmul.f32 %v1946, 1.442695
  %v2004 = vpow.pop %v2003
  %v2005 = vmul.f32 %v1947, 1.442695
  %v2006 = vpow.pop %v2005
  %v2007 = vmul.f32 %v1948, 1.442695
  %v2008 = vpow.pop %v2007
  %v2009 = vmul.f32 %v1949, 1.442695
  %v2010 = vpow.pop %v2009
  %v2011 = vmul.f32 %v1950, 1.442695
  %v2012 = vpow.pop %v2011
  %v2013 = vmul.f32 %v1951, 1.442695
  %v2014 = vpow.pop %v2013
  %v2015 = vmul.f32 %v1952, 1.442695
  %v2016 = vpow.pop %v2015
  %v2017 = vmul.f32 %v1953, 1.442695
  %v2018 = vpow.pop %v2017
  %v2019 = vmul.f32 %v1954, 1.442695
  %v2020 = vpow.pop %v2019
  %v2021 = vmul.f32 %v1955, 1.442695
  %v2022 = vpow.pop %v2021
  %v2023 = vmul.f32 %v1956, 1.442695
  %v2024 = vpow.pop %v2023
  %v2025 = vmul.f32 %v1957, 1.442695
  %v2026 = vpow.pop %v2025
  %v2027 = vmul.f32 %v1958, 1.442695
  %v2028 = vpow.pop %v2027
  %v2029 = vmul.f32 %v1959, 1.442695
  %v2030 = vpow.pop %v2029
  %v2031 = vmul.f32 %v1960, 1.442695
  %v2032 = vpow.pop %v2031
  %v2033 = vmul.f32 %v1961, 1.442695
  %v2034 = vpow.pop %v2033
  %v2035 = vmul.f32 %v1962, 1.442695
  %v2036 = vpow.pop %v2035
  %v2037 = vmul.f32 %v1963, 1.442695
  %v2038 = vpow.pop %v2037
  %v2039 = vmul.f32 %v1964, 1.442695
  %v2040 = vpow.pop %v2039
  %v2041 = vmul.f32 %v1965, 1.442695
  %v2042 = vpow.pop %v2041
  %v2043 = vmul.f32 %v1966, 1.442695
  %v2044 = vpow.pop %v2043
  %v2045 = vmul.f32 %v1967, 1.442695
  %v2046 = vpow.pop %v2045
  %v2047 = vmul.f32 %v1968, 1.442695
  %v2048 = vpow.pop %v2047
  %v2049 = vmul.f32 %v1969, 1.442695
  %v2050 = vpow.pop %v2049
  %v2051 = vmul.f32 %v1970, 1.442695
  %v2052 = vpow.pop %v2051
  %v2053 = vmul.f32 %v1971, 1.442695
  %v2054 = vpow.pop %v2053
  %v2055 = vmul.f32 %v1972, 1.442695
  %v2056 = vpow.pop %v2055
  %v2057 = vmul.f32 %v1973, 1.442695
  %v2058 = vpow.pop %v2057
  %v2059 = vmul.f32 %v1974, 1.442695
  %v2060 = vpow.pop %v2059
  %v2061 = vmul.f32 %v1975, 1.442695
  %v2062 = vpow.pop %v2061
  %v2063 = vmul.f32 %v1976, 1.442695
  %v2064 = vpow.pop %v2063
  %v2065 = vmul.f32 %v1977, 1.442695
  %v2066 = vpow.pop %v2065
  %v2067 = vmul.f32 %v1978, 1.442695
  %v2068 = vpow.pop %v2067
  %v2069 = vmul.f32 %v1979, 1.442695
  %v2070 = vpow.pop %v2069
  %v2071 = vmul.f32 %v1980, 1.442695
  %v2072 = vpow.pop %v2071
  %v2073 = vmul.f32 %v1981, 1.442695
  %v2074 = vpow.pop %v2073
  %v2075 = vmul.f32 %v1982, 1.442695
  %v2076 = vpow.pop %v2075
  %v2077 = vmul.f32 %v1983, 1.442695
  %v2078 = vpow.pop %v2077
  %v2079 = vmul.f32 %v1984, 1.442695
  %v2080 = vpow.pop %v2079
  %v2081 = vmul.f32 %v1985, 1.442695
  %v2082 = vpow.pop %v2081
  %v2083 = vmul.f32 %v1986, 1.442695
  %v2084 = vpow.pop %v2083
  %v2085 = vmul.f32 %v1987, 1.442695
  %v2086 = vpow.pop %v2085
  %v2087 = vmul.f32 %v1988, 1.442695
  %v2088 = vpow.pop %v2087
  %v2089 = vsub.f32 %v1990, 1.0
  %v2090 = vsub.f32 %v1992, 1.0
  %v2091 = vsub.f32 %v1994, 1.0
  %v2092 = vsub.f32 %v1996, 1.0
  %v2093 = vsub.f32 %v1998, 1.0
  %v2094 = vsub.f32 %v2000, 1.0
  %v2095 = vsub.f32 %v2002, 1.0
  %v2096 = vsub.f32 %v2004, 1.0
  %v2097 = vsub.f32 %v2006, 1.0
  %v2098 = vsub.f32 %v2008, 1.0
  %v2099 = vsub.f32 %v2010, 1.0
  %v2100 = vsub.f32 %v2012, 1.0
  %v2101 = vsub.f32 %v2014, 1.0
  %v2102 = vsub.f32 %v2016, 1.0
  %v2103 = vsub.f32 %v2018, 1.0
  %v2104 = vsub.f32 %v2020, 1.0
  %v2105 = vsub.f32 %v2022, 1.0
  %v2106 = vsub.f32 %v2024, 1.0
  %v2107 = vsub.f32 %v2026, 1.0
  %v2108 = vsub.f32 %v2028, 1.0
  %v2109 = vsub.f32 %v2030, 1.0
  %v2110 = vsub.f32 %v2032, 1.0
  %v2111 = vsub.f32 %v2034, 1.0
  %v2112 = vsub.f32 %v2036, 1.0
  %v2113 = vsub.f32 %v2038, 1.0
  %v2114 = vsub.f32 %v2040, 1.0
  %v2115 = vsub.f32 %v2042, 1.0
  %v2116 = vsub.f32 %v2044, 1.0
  %v2117 = vsub.f32 %v2046, 1.0
  %v2118 = vsub.f32 %v2048, 1.0
  %v2119 = vsub.f32 %v2050, 1.0
  %v2120 = vsub.f32 %v2052, 1.0
  %v2121 = vsub.f32 %v2054, 1.0
  %v2122 = vsub.f32 %v2056, 1.0
  %v2123 = vsub.f32 %v2058, 1.0
  %v2124 = vsub.f32 %v2060, 1.0
  %v2125 = vsub.f32 %v2062, 1.0
  %v2126 = vsub.f32 %v2064, 1.0
  %v2127 = vsub.f32 %v2066, 1.0
  %v2128 = vsub.f32 %v2068, 1.0
  %v2129 = vsub.f32 %v2070, 1.0
  %v2130 = vsub.f32 %v2072, 1.0
  %v2131 = vsub.f32 %v2074, 1.0
  %v2132 = vsub.f32 %v2076, 1.0
  %v2133 = vsub.f32 %v2078, 1.0
  %v2134 = vsub.f32 %v2080, 1.0
  %v2135 = vsub.f32 %v2082, 1.0
  %v2136 = vsub.f32 %v2084, 1.0
  %v2137 = vsub.f32 %v2086, 1.0
  %v2138 = vsub.f32 %v2088, 1.0
  %v2139 = vsel %vm1889, %v1691, %v2089
  %v2140 = vsel %vm1890, %v1694, %v2090
  %v2141 = vsel %vm1891, %v1699, %v2091
  %v2142 = vsel %vm1892, %v1702, %v2092
  %v2143 = vsel %vm1893, %v1707, %v2093
  %v2144 = vsel %vm1894, %v1710, %v2094
  %v2145 = vsel %vm1895, %v1715, %v2095
  %v2146 = vsel %vm1896, %v1718, %v2096
  %v2147 = vsel %vm1897, %v1723, %v2097
  %v2148 = vsel %vm1898, %v1726, %v2098
  %v2149 = vsel %vm1899, %v1731, %v2099
  %v2150 = vsel %vm1900, %v1734, %v2100
  %v2151 = vsel %vm1901, %v1739, %v2101
  %v2152 = vsel %vm1902, %v1742, %v2102
  %v2153 = vsel %vm1903, %v1747, %v2103
  %v2154 = vsel %vm1904, %v1750, %v2104
  %v2155 = vsel %vm1905, %v1755, %v2105
  %v2156 = vsel %vm1906, %v1758, %v2106
  %v2157 = vsel %vm1907, %v1763, %v2107
  %v2158 = vsel %vm1908, %v1766, %v2108
  %v2159 = vsel %vm1909, %v1771, %v2109
  %v2160 = vsel %vm1910, %v1774, %v2110
  %v2161 = vsel %vm1911, %v1779, %v2111
  %v2162 = vsel %vm1912, %v1782, %v2112
  %v2163 = vsel %vm1913, %v1787, %v2113
  %v2164 = vsel %vm1914, %v1790, %v2114
  %v2165 = vsel %vm1915, %v1795, %v2115
  %v2166 = vsel %vm1916, %v1798, %v2116
  %v2167 = vsel %vm1917, %v1803, %v2117
  %v2168 = vsel %vm1918, %v1806, %v2118
  %v2169 = vsel %vm1919, %v1811, %v2119
  %v2170 = vsel %vm1920, %v1814, %v2120
  %v2171 = vsel %vm1921, %v1819, %v2121
  %v2172 = vsel %vm1922, %v1822, %v2122
  %v2173 = vsel %vm1923, %v1827, %v2123
  %v2174 = vsel %vm1924, %v1830, %v2124
  %v2175 = vsel %vm1925, %v1835, %v2125
  %v2176 = vsel %vm1926, %v1838, %v2126
  %v2177 = vsel %vm1927, %v1843, %v2127
  %v2178 = vsel %vm1928, %v1846, %v2128
  %v2179 = vsel %vm1929, %v1851, %v2129
  %v2180 = vsel %vm1930, %v1854, %v2130
  %v2181 = vsel %vm1931, %v1859, %v2131
  %v2182 = vsel %vm1932, %v1862, %v2132
  %v2183 = vsel %vm1933, %v1867, %v2133
  %v2184 = vsel %vm1934, %v1870, %v2134
  %v2185 = vsel %vm1935, %v1875, %v2135
  %v2186 = vsel %vm1936, %v1878, %v2136
  %v2187 = vsel %vm1937, %v1883, %v2137
  %v2188 = vsel %vm1938, %v1886, %v2138
  %v2189 = vpack.c.bf16 %v2140, %v2139
  %v2190 = vpack.c.bf16 %v2142, %v2141
  %v2191 = vpack.c.bf16 %v2144, %v2143
  %v2192 = vpack.c.bf16 %v2146, %v2145
  %v2193 = vpack.c.bf16 %v2148, %v2147
  %v2194 = vpack.c.bf16 %v2150, %v2149
  %v2195 = vpack.c.bf16 %v2152, %v2151
  %v2196 = vpack.c.bf16 %v2154, %v2153
  %v2197 = vpack.c.bf16 %v2156, %v2155
  %v2198 = vpack.c.bf16 %v2158, %v2157
  %v2199 = vpack.c.bf16 %v2160, %v2159
  %v2200 = vpack.c.bf16 %v2162, %v2161
  %v2201 = vpack.c.bf16 %v2164, %v2163
  %v2202 = vpack.c.bf16 %v2166, %v2165
  %v2203 = vpack.c.bf16 %v2168, %v2167
  %v2204 = vpack.c.bf16 %v2170, %v2169
  %v2205 = vpack.c.bf16 %v2172, %v2171
  %v2206 = vpack.c.bf16 %v2174, %v2173
  %v2207 = vpack.c.bf16 %v2176, %v2175
  %v2208 = vpack.c.bf16 %v2178, %v2177
  %v2209 = vpack.c.bf16 %v2180, %v2179
  %v2210 = vpack.c.bf16 %v2182, %v2181
  %v2211 = vpack.c.bf16 %v2184, %v2183
  %v2212 = vpack.c.bf16 %v2186, %v2185
  %v2213 = vpack.c.bf16 %v2188, %v2187
  %v2214 = vld [vmem:[%s9] sm:$0xf]
  %v2215 = vld [vmem:[%s9 + $0x4] sm:$0xf]
  %v2216 = vld [vmem:[%s10] sm:$0x1]
  %v2218 = vlaneseq
  %v2219 = vshrl.u32 %v2218, 7
  %v2220 = vsub.s32 0, %v2219
  %v2221 = vrot.slane %v2216, %v2220
  %v2225 = vunpack.c.l.b16 %v2214
  %v2226 = vunpack.c.l.b16 %v2215
  %v2227 = vpack.c.b16 %v2226, %v2225
  %v2230 = vsel %vm126, %v2189, 0
  %v2233 = vsel %vm126, %v2190, 0
  %v2236 = vsel %vm126, %v2191, 0
  %v2239 = vsel %vm126, %v2192, 0
  %v2242 = vsel %vm126, %v2193, 0
  %v2245 = vsel %vm126, %v2194, 0
  %v2248 = vsel %vm126, %v2195, 0
  %v2251 = vsel %vm126, %v2196, 0
  %v2254 = vsel %vm126, %v2197, 0
  %v2257 = vsel %vm126, %v2198, 0
  %v2260 = vsel %vm126, %v2199, 0
  %v2263 = vsel %vm126, %v2200, 0
  %v2266 = vsel %vm126, %v2201, 0
  %v2269 = vsel %vm126, %v2202, 0
  %v2272 = vsel %vm126, %v2203, 0
  %v2275 = vsel %vm126, %v2204, 0
  %v2278 = vsel %vm126, %v2205, 0
  %v2281 = vsel %vm126, %v2206, 0
  %v2284 = vsel %vm126, %v2207, 0
  %v2287 = vsel %vm126, %v2208, 0
  %v2290 = vsel %vm126, %v2209, 0
  %v2293 = vsel %vm126, %v2210, 0
  %v2296 = vsel %vm126, %v2211, 0
  %v2299 = vsel %vm126, %v2212, 0
  %v2302 = vsel %vm126, %v2213, 0
  %2304 = vmatprep.subr.bf16.mxu0 0
  %2305 = vmatpush1.bf16.msra.mxu0 %v2227
  %2306 = vmatprep.subr.bf16.mxu0 0
  %2307 = vmatpush1.bf16.msra.mxu0 0
  %2308 = vmatprep.subr.bf16.mxu0 0
  %2309 = vmatpush1.bf16.msra.mxu0 0
  %2310 = vmatprep.subr.bf16.mxu0 0
  %2311 = vmatpush1.bf16.msra.mxu0 0
  %2312 = vmatprep.subr.bf16.mxu0 0
  %2313 = vmatpush1.bf16.msra.mxu0 0
  %2314 = vmatprep.subr.bf16.mxu0 0
  %2315 = vmatpush1.bf16.msra.mxu0 0
  %2316 = vmatprep.subr.bf16.mxu0 0
  %2317 = vmatpush1.bf16.msra.mxu0 0
  %2318 = vmatprep.subr.bf16.mxu0 0
  %2319 = vmatpush1.bf16.msra.mxu0 0
  %2320 = vmatprep.subr.bf16.mxu0 0
  %2321 = vmatpush1.bf16.msra.mxu0 0
  %2322 = vmatprep.subr.bf16.mxu0 0
  %2323 = vmatpush1.bf16.msra.mxu0 0
  %2324 = vmatprep.subr.bf16.mxu0 0
  %2325 = vmatpush1.bf16.msra.mxu0 0
  %2326 = vmatprep.subr.bf16.mxu0 0
  %2327 = vmatpush1.bf16.msra.mxu0 0
  %2328 = vmatprep.subr.bf16.mxu0 0
  %2329 = vmatpush1.bf16.msra.mxu0 0
  %2330 = vmatprep.subr.bf16.mxu0 0
  %2331 = vmatpush1.bf16.msra.mxu0 0
  %2332 = vmatprep.subr.bf16.mxu0 0
  %2333 = vmatpush1.bf16.msra.mxu0 0
  %2334 = vmatprep.subr.bf16.mxu0 0
  %2335 = vmatpush1.bf16.msra.mxu0 0
  %2336 = vmatprep.mubr.bf16.mxu0 0
  %2337 = vmatmul.mubr.bf16.gmra.mrb[0].mxu0 %v2230
  %v2338 = vpop.f32.mrb[0].mxu0
  %v2339 = vadd.f32 %v2221, %v2338
  %v2340 = vpop.f32.mrb[0].mxu0
  %v2341 = vpop.f32.mrb[0].mxu0
  %v2342 = vadd.f32 %v2221, %v2341
  %v2343 = vpop.f32.mrb[0].mxu0
  %2344 = vmatprep.mubr.bf16.mxu0 0
  %2345 = vmatmul.mubr.bf16.gmra.mrb[0].mxu0 %v2233
  %v2346 = vpop.f32.mrb[0].mxu0
  %v2347 = vadd.f32 %v2221, %v2346
  %v2348 = vpop.f32.mrb[0].mxu0
  %v2349 = vpop.f32.mrb[0].mxu0
  %v2350 = vadd.f32 %v2221, %v2349
  %v2351 = vpop.f32.mrb[0].mxu0
  %2352 = vmatprep.mubr.bf16.mxu0 0
  %2353 = vmatmul.mubr.bf16.gmra.mrb[0].mxu0 %v2236
  %v2354 = vpop.f32.mrb[0].mxu0
  %v2355 = vadd.f32 %v2221, %v2354
  %v2356 = vpop.f32.mrb[0].mxu0
  %v2357 = vpop.f32.mrb[0].mxu0
  %v2358 = vadd.f32 %v2221, %v2357
  %v2359 = vpop.f32.mrb[0].mxu0
  %2360 = vmatprep.mubr.bf16.mxu0 0
  %2361 = vmatmul.mubr.bf16.gmra.mrb[0].mxu0 %v2239
  %v2362 = vpop.f32.mrb[0].mxu0
  %v2363 = vadd.f32 %v2221, %v2362
  %v2364 = vpop.f32.mrb[0].mxu0
  %v2365 = vpop.f32.mrb[0].mxu0
  %v2366 = vadd.f32 %v2221, %v2365
  %v2367 = vpop.f32.mrb[0].mxu0
  %2368 = vmatprep.mubr.bf16.mxu0 0
  %2369 = vmatmul.mubr.bf16.gmra.mrb[0].mxu0 %v2242
  %v2370 = vpop.f32.mrb[0].mxu0
  %v2371 = vadd.f32 %v2221, %v2370
  %v2372 = vpop.f32.mrb[0].mxu0
  %v2373 = vpop.f32.mrb[0].mxu0
  %v2374 = vadd.f32 %v2221, %v2373
  %v2375 = vpop.f32.mrb[0].mxu0
  %2376 = vmatprep.mubr.bf16.mxu0 0
  %2377 = vmatmul.mubr.bf16.gmra.mrb[0].mxu0 %v2245
  %v2378 = vpop.f32.mrb[0].mxu0
  %v2379 = vadd.f32 %v2221, %v2378
  %v2380 = vpop.f32.mrb[0].mxu0
  %v2381 = vpop.f32.mrb[0].mxu0
  %v2382 = vadd.f32 %v2221, %v2381
  %v2383 = vpop.f32.mrb[0].mxu0
  %2384 = vmatprep.mubr.bf16.mxu0 0
  %2385 = vmatmul.mubr.bf16.gmra.mrb[0].mxu0 %v2248
  %v2386 = vpop.f32.mrb[0].mxu0
  %v2387 = vadd.f32 %v2221, %v2386
  %v2388 = vpop.f32.mrb[0].mxu0
  %v2389 = vpop.f32.mrb[0].mxu0
  %v2390 = vadd.f32 %v2221, %v2389
  %v2391 = vpop.f32.mrb[0].mxu0
  %2392 = vmatprep.mubr.bf16.mxu0 0
  %2393 = vmatmul.mubr.bf16.gmra.mrb[0].mxu0 %v2251
  %v2394 = vpop.f32.mrb[0].mxu0
  %v2395 = vadd.f32 %v2221, %v2394
  %v2396 = vpop.f32.mrb[0].mxu0
  %v2397 = vpop.f32.mrb[0].mxu0
  %v2398 = vadd.f32 %v2221, %v2397
  %v2399 = vpop.f32.mrb[0].mxu0
  %2400 = vmatprep.mubr.bf16.mxu0 0
  %2401 = vmatmul.mubr.bf16.gmra.mrb[0].mxu0 %v2254
  %v2402 = vpop.f32.mrb[0].mxu0
  %v2403 = vadd.f32 %v2221, %v2402
  %v2404 = vpop.f32.mrb[0].mxu0
  %v2405 = vpop.f32.mrb[0].mxu0
  %v2406 = vadd.f32 %v2221, %v2405
  %v2407 = vpop.f32.mrb[0].mxu0
  %2408 = vmatprep.mubr.bf16.mxu0 0
  %2409 = vmatmul.mubr.bf16.gmra.mrb[0].mxu0 %v2257
  %v2410 = vpop.f32.mrb[0].mxu0
  %v2411 = vadd.f32 %v2221, %v2410
  %v2412 = vpop.f32.mrb[0].mxu0
  %v2413 = vpop.f32.mrb[0].mxu0
  %v2414 = vadd.f32 %v2221, %v2413
  %v2415 = vpop.f32.mrb[0].mxu0
  %2416 = vmatprep.mubr.bf16.mxu0 0
  %2417 = vmatmul.mubr.bf16.gmra.mrb[0].mxu0 %v2260
  %v2418 = vpop.f32.mrb[0].mxu0
  %v2419 = vadd.f32 %v2221, %v2418
  %v2420 = vpop.f32.mrb[0].mxu0
  %v2421 = vpop.f32.mrb[0].mxu0
  %v2422 = vadd.f32 %v2221, %v2421
  %v2423 = vpop.f32.mrb[0].mxu0
  %2424 = vmatprep.mubr.bf16.mxu0 0
  %2425 = vmatmul.mubr.bf16.gmra.mrb[0].mxu0 %v2263
  %v2426 = vpop.f32.mrb[0].mxu0
  %v2427 = vadd.f32 %v2221, %v2426
  %v2428 = vpop.f32.mrb[0].mxu0
  %v2429 = vpop.f32.mrb[0].mxu0
  %v2430 = vadd.f32 %v2221, %v2429
  %v2431 = vpop.f32.mrb[0].mxu0
  %2432 = vmatprep.mubr.bf16.mxu0 0
  %2433 = vmatmul.mubr.bf16.gmra.mrb[0].mxu0 %v2266
  %v2434 = vpop.f32.mrb[0].mxu0
  %v2435 = vadd.f32 %v2221, %v2434
  %v2436 = vpop.f32.mrb[0].mxu0
  %v2437 = vpop.f32.mrb[0].mxu0
  %v2438 = vadd.f32 %v2221, %v2437
  %v2439 = vpop.f32.mrb[0].mxu0
  %2440 = vmatprep.mubr.bf16.mxu0 0
  %2441 = vmatmul.mubr.bf16.gmra.mrb[0].mxu0 %v2269
  %v2442 = vpop.f32.mrb[0].mxu0
  %v2443 = vadd.f32 %v2221, %v2442
  %v2444 = vpop.f32.mrb[0].mxu0
  %v2445 = vpop.f32.mrb[0].mxu0
  %v2446 = vadd.f32 %v2221, %v2445
  %v2447 = vpop.f32.mrb[0].mxu0
  %2448 = vmatprep.mubr.bf16.mxu0 0
  %2449 = vmatmul.mubr.bf16.gmra.mrb[0].mxu0 %v2272
  %v2450 = vpop.f32.mrb[0].mxu0
  %v2451 = vadd.f32 %v2221, %v2450
  %v2452 = vpop.f32.mrb[0].mxu0
  %v2453 = vpop.f32.mrb[0].mxu0
  %v2454 = vadd.f32 %v2221, %v2453
  %v2455 = vpop.f32.mrb[0].mxu0
  %2456 = vmatprep.mubr.bf16.mxu0 0
  %2457 = vmatmul.mubr.bf16.gmra.mrb[0].mxu0 %v2275
  %v2458 = vpop.f32.mrb[0].mxu0
  %v2459 = vadd.f32 %v2221, %v2458
  %v2460 = vpop.f32.mrb[0].mxu0
  %v2461 = vpop.f32.mrb[0].mxu0
  %v2462 = vadd.f32 %v2221, %v2461
  %v2463 = vpop.f32.mrb[0].mxu0
  %2464 = vmatprep.mubr.bf16.mxu0 0
  %2465 = vmatmul.mubr.bf16.gmra.mrb[0].mxu0 %v2278
  %v2466 = vpop.f32.mrb[0].mxu0
  %v2467 = vadd.f32 %v2221, %v2466
  %v2468 = vpop.f32.mrb[0].mxu0
  %v2469 = vpop.f32.mrb[0].mxu0
  %v2470 = vadd.f32 %v2221, %v2469
  %v2471 = vpop.f32.mrb[0].mxu0
  %2472 = vmatprep.mubr.bf16.mxu0 0
  %2473 = vmatmul.mubr.bf16.gmra.mrb[0].mxu0 %v2281
  %v2474 = vpop.f32.mrb[0].mxu0
  %v2475 = vadd.f32 %v2221, %v2474
  %v2476 = vpop.f32.mrb[0].mxu0
  %v2477 = vpop.f32.mrb[0].mxu0
  %v2478 = vadd.f32 %v2221, %v2477
  %v2479 = vpop.f32.mrb[0].mxu0
  %2480 = vmatprep.mubr.bf16.mxu0 0
  %2481 = vmatmul.mubr.bf16.gmra.mrb[0].mxu0 %v2284
  %v2482 = vpop.f32.mrb[0].mxu0
  %v2483 = vadd.f32 %v2221, %v2482
  %v2484 = vpop.f32.mrb[0].mxu0
  %v2485 = vpop.f32.mrb[0].mxu0
  %v2486 = vadd.f32 %v2221, %v2485
  %v2487 = vpop.f32.mrb[0].mxu0
  %2488 = vmatprep.mubr.bf16.mxu0 0
  %2489 = vmatmul.mubr.bf16.gmra.mrb[0].mxu0 %v2287
  %v2490 = vpop.f32.mrb[0].mxu0
  %v2491 = vadd.f32 %v2221, %v2490
  %v2492 = vpop.f32.mrb[0].mxu0
  %v2493 = vpop.f32.mrb[0].mxu0
  %v2494 = vadd.f32 %v2221, %v2493
  %v2495 = vpop.f32.mrb[0].mxu0
  %2496 = vmatprep.mubr.bf16.mxu0 0
  %2497 = vmatmul.mubr.bf16.gmra.mrb[0].mxu0 %v2290
  %v2498 = vpop.f32.mrb[0].mxu0
  %v2499 = vadd.f32 %v2221, %v2498
  %v2500 = vpop.f32.mrb[0].mxu0
  %v2501 = vpop.f32.mrb[0].mxu0
  %v2502 = vadd.f32 %v2221, %v2501
  %v2503 = vpop.f32.mrb[0].mxu0
  %2504 = vmatprep.mubr.bf16.mxu0 0
  %2505 = vmatmul.mubr.bf16.gmra.mrb[0].mxu0 %v2293
  %v2506 = vpop.f32.mrb[0].mxu0
  %v2507 = vadd.f32 %v2221, %v2506
  %v2508 = vpop.f32.mrb[0].mxu0
  %v2509 = vpop.f32.mrb[0].mxu0
  %v2510 = vadd.f32 %v2221, %v2509
  %v2511 = vpop.f32.mrb[0].mxu0
  %2512 = vmatprep.mubr.bf16.mxu0 0
  %2513 = vmatmul.mubr.bf16.gmra.mrb[0].mxu0 %v2296
  %v2514 = vpop.f32.mrb[0].mxu0
  %v2515 = vadd.f32 %v2221, %v2514
  %v2516 = vpop.f32.mrb[0].mxu0
  %v2517 = vpop.f32.mrb[0].mxu0
  %v2518 = vadd.f32 %v2221, %v2517
  %v2519 = vpop.f32.mrb[0].mxu0
  %2520 = vmatprep.mubr.bf16.mxu0 0
  %2521 = vmatmul.mubr.bf16.gmra.mrb[0].mxu0 %v2299
  %v2522 = vpop.f32.mrb[0].mxu0
  %v2523 = vadd.f32 %v2221, %v2522
  %v2524 = vpop.f32.mrb[0].mxu0
  %v2525 = vpop.f32.mrb[0].mxu0
  %v2526 = vadd.f32 %v2221, %v2525
  %v2527 = vpop.f32.mrb[0].mxu0
  %2528 = vmatprep.mubr.bf16.mxu0 0
  %2529 = vmatmul.mubr.bf16.gmra.mrb[0].mxu0 %v2302
  %v2530 = vpop.f32.mrb[0].mxu0
  %v2531 = vadd.f32 %v2221, %v2530
  %v2532 = vpop.f32.mrb[0].mxu0
  %v2533 = vpop.f32.mrb[0].mxu0
  %v2534 = vadd.f32 %v2221, %v2533
  %v2535 = vpop.f32.mrb[0].mxu0
  %2536 = vdwg.mxu0
  %vm2537 = vcmp.gt.f32.partialorder %v2339, 0.0
  %vm2538 = vcmp.gt.f32.partialorder %v2342, 0.0
  %vm2539 = vcmp.gt.f32.partialorder %v2347, 0.0
  %vm2540 = vcmp.gt.f32.partialorder %v2350, 0.0
  %vm2541 = vcmp.gt.f32.partialorder %v2355, 0.0
  %vm2542 = vcmp.gt.f32.partialorder %v2358, 0.0
  %vm2543 = vcmp.gt.f32.partialorder %v2363, 0.0
  %vm2544 = vcmp.gt.f32.partialorder %v2366, 0.0
  %vm2545 = vcmp.gt.f32.partialorder %v2371, 0.0
  %vm2546 = vcmp.gt.f32.partialorder %v2374, 0.0
  %vm2547 = vcmp.gt.f32.partialorder %v2379, 0.0
  %vm2548 = vcmp.gt.f32.partialorder %v2382, 0.0
  %vm2549 = vcmp.gt.f32.partialorder %v2387, 0.0
  %vm2550 = vcmp.gt.f32.partialorder %v2390, 0.0
  %vm2551 = vcmp.gt.f32.partialorder %v2395, 0.0
  %vm2552 = vcmp.gt.f32.partialorder %v2398, 0.0
  %vm2553 = vcmp.gt.f32.partialorder %v2403, 0.0
  %vm2554 = vcmp.gt.f32.partialorder %v2406, 0.0
  %vm2555 = vcmp.gt.f32.partialorder %v2411, 0.0
  %vm2556 = vcmp.gt.f32.partialorder %v2414, 0.0
  %vm2557 = vcmp.gt.f32.partialorder %v2419, 0.0
  %vm2558 = vcmp.gt.f32.partialorder %v2422, 0.0
  %vm2559 = vcmp.gt.f32.partialorder %v2427, 0.0
  %vm2560 = vcmp.gt.f32.partialorder %v2430, 0.0
  %vm2561 = vcmp.gt.f32.partialorder %v2435, 0.0
  %vm2562 = vcmp.gt.f32.partialorder %v2438, 0.0
  %vm2563 = vcmp.gt.f32.partialorder %v2443, 0.0
  %vm2564 = vcmp.gt.f32.partialorder %v2446, 0.0
  %vm2565 = vcmp.gt.f32.partialorder %v2451, 0.0
  %vm2566 = vcmp.gt.f32.partialorder %v2454, 0.0
  %vm2567 = vcmp.gt.f32.partialorder %v2459, 0.0
  %vm2568 = vcmp.gt.f32.partialorder %v2462, 0.0
  %vm2569 = vcmp.gt.f32.partialorder %v2467, 0.0
  %vm2570 = vcmp.gt.f32.partialorder %v2470, 0.0
  %vm2571 = vcmp.gt.f32.partialorder %v2475, 0.0
  %vm2572 = vcmp.gt.f32.partialorder %v2478, 0.0
  %vm2573 = vcmp.gt.f32.partialorder %v2483, 0.0
  %vm2574 = vcmp.gt.f32.partialorder %v2486, 0.0
  %vm2575 = vcmp.gt.f32.partialorder %v2491, 0.0
  %vm2576 = vcmp.gt.f32.partialorder %v2494, 0.0
  %vm2577 = vcmp.gt.f32.partialorder %v2499, 0.0
  %vm2578 = vcmp.gt.f32.partialorder %v2502, 0.0
  %vm2579 = vcmp.gt.f32.partialorder %v2507, 0.0
  %vm2580 = vcmp.gt.f32.partialorder %v2510, 0.0
  %vm2581 = vcmp.gt.f32.partialorder %v2515, 0.0
  %vm2582 = vcmp.gt.f32.partialorder %v2518, 0.0
  %vm2583 = vcmp.gt.f32.partialorder %v2523, 0.0
  %vm2584 = vcmp.gt.f32.partialorder %v2526, 0.0
  %vm2585 = vcmp.gt.f32.partialorder %v2531, 0.0
  %vm2586 = vcmp.gt.f32.partialorder %v2534, 0.0
  %v2587 = vmin.f32 %v2339, 0.0
  %v2588 = vmin.f32 %v2342, 0.0
  %v2589 = vmin.f32 %v2347, 0.0
  %v2590 = vmin.f32 %v2350, 0.0
  %v2591 = vmin.f32 %v2355, 0.0
  %v2592 = vmin.f32 %v2358, 0.0
  %v2593 = vmin.f32 %v2363, 0.0
  %v2594 = vmin.f32 %v2366, 0.0
  %v2595 = vmin.f32 %v2371, 0.0
  %v2596 = vmin.f32 %v2374, 0.0
  %v2597 = vmin.f32 %v2379, 0.0
  %v2598 = vmin.f32 %v2382, 0.0
  %v2599 = vmin.f32 %v2387, 0.0
  %v2600 = vmin.f32 %v2390, 0.0
  %v2601 = vmin.f32 %v2395, 0.0
  %v2602 = vmin.f32 %v2398, 0.0
  %v2603 = vmin.f32 %v2403, 0.0
  %v2604 = vmin.f32 %v2406, 0.0
  %v2605 = vmin.f32 %v2411, 0.0
  %v2606 = vmin.f32 %v2414, 0.0
  %v2607 = vmin.f32 %v2419, 0.0
  %v2608 = vmin.f32 %v2422, 0.0
  %v2609 = vmin.f32 %v2427, 0.0
  %v2610 = vmin.f32 %v2430, 0.0
  %v2611 = vmin.f32 %v2435, 0.0
  %v2612 = vmin.f32 %v2438, 0.0
  %v2613 = vmin.f32 %v2443, 0.0
  %v2614 = vmin.f32 %v2446, 0.0
  %v2615 = vmin.f32 %v2451, 0.0
  %v2616 = vmin.f32 %v2454, 0.0
  %v2617 = vmin.f32 %v2459, 0.0
  %v2618 = vmin.f32 %v2462, 0.0
  %v2619 = vmin.f32 %v2467, 0.0
  %v2620 = vmin.f32 %v2470, 0.0
  %v2621 = vmin.f32 %v2475, 0.0
  %v2622 = vmin.f32 %v2478, 0.0
  %v2623 = vmin.f32 %v2483, 0.0
  %v2624 = vmin.f32 %v2486, 0.0
  %v2625 = vmin.f32 %v2491, 0.0
  %v2626 = vmin.f32 %v2494, 0.0
  %v2627 = vmin.f32 %v2499, 0.0
  %v2628 = vmin.f32 %v2502, 0.0
  %v2629 = vmin.f32 %v2507, 0.0
  %v2630 = vmin.f32 %v2510, 0.0
  %v2631 = vmin.f32 %v2515, 0.0
  %v2632 = vmin.f32 %v2518, 0.0
  %v2633 = vmin.f32 %v2523, 0.0
  %v2634 = vmin.f32 %v2526, 0.0
  %v2635 = vmin.f32 %v2531, 0.0
  %v2636 = vmin.f32 %v2534, 0.0
  %v2637 = vmul.f32 %v2587, 1.442695
  %v2638 = vpow.pop %v2637
  %v2639 = vmul.f32 %v2588, 1.442695
  %v2640 = vpow.pop %v2639
  %v2641 = vmul.f32 %v2589, 1.442695
  %v2642 = vpow.pop %v2641
  %v2643 = vmul.f32 %v2590, 1.442695
  %v2644 = vpow.pop %v2643
  %v2645 = vmul.f32 %v2591, 1.442695
  %v2646 = vpow.pop %v2645
  %v2647 = vmul.f32 %v2592, 1.442695
  %v2648 = vpow.pop %v2647
  %v2649 = vmul.f32 %v2593, 1.442695
  %v2650 = vpow.pop %v2649
  %v2651 = vmul.f32 %v2594, 1.442695
  %v2652 = vpow.pop %v2651
  %v2653 = vmul.f32 %v2595, 1.442695
  %v2654 = vpow.pop %v2653
  %v2655 = vmul.f32 %v2596, 1.442695
  %v2656 = vpow.pop %v2655
  %v2657 = vmul.f32 %v2597, 1.442695
  %v2658 = vpow.pop %v2657
  %v2659 = vmul.f32 %v2598, 1.442695
  %v2660 = vpow.pop %v2659
  %v2661 = vmul.f32 %v2599, 1.442695
  %v2662 = vpow.pop %v2661
  %v2663 = vmul.f32 %v2600, 1.442695
  %v2664 = vpow.pop %v2663
  %v2665 = vmul.f32 %v2601, 1.442695
  %v2666 = vpow.pop %v2665
  %v2667 = vmul.f32 %v2602, 1.442695
  %v2668 = vpow.pop %v2667
  %v2669 = vmul.f32 %v2603, 1.442695
  %v2670 = vpow.pop %v2669
  %v2671 = vmul.f32 %v2604, 1.442695
  %v2672 = vpow.pop %v2671
  %v2673 = vmul.f32 %v2605, 1.442695
  %v2674 = vpow.pop %v2673
  %v2675 = vmul.f32 %v2606, 1.442695
  %v2676 = vpow.pop %v2675
  %v2677 = vmul.f32 %v2607, 1.442695
  %v2678 = vpow.pop %v2677
  %v2679 = vmul.f32 %v2608, 1.442695
  %v2680 = vpow.pop %v2679
  %v2681 = vmul.f32 %v2609, 1.442695
  %v2682 = vpow.pop %v2681
  %v2683 = vmul.f32 %v2610, 1.442695
  %v2684 = vpow.pop %v2683
  %v2685 = vmul.f32 %v2611, 1.442695
  %v2686 = vpow.pop %v2685
  %v2687 = vmul.f32 %v2612, 1.442695
  %v2688 = vpow.pop %v2687
  %v2689 = vmul.f32 %v2613, 1.442695
  %v2690 = vpow.pop %v2689
  %v2691 = vmul.f32 %v2614, 1.442695
  %v2692 = vpow.pop %v2691
  %v2693 = vmul.f32 %v2615, 1.442695
  %v2694 = vpow.pop %v2693
  %v2695 = vmul.f32 %v2616, 1.442695
  %v2696 = vpow.pop %v2695
  %v2697 = vmul.f32 %v2617, 1.442695
  %v2698 = vpow.pop %v2697
  %v2699 = vmul.f32 %v2618, 1.442695
  %v2700 = vpow.pop %v2699
  %v2701 = vmul.f32 %v2619, 1.442695
  %v2702 = vpow.pop %v2701
  %v2703 = vmul.f32 %v2620, 1.442695
  %v2704 = vpow.pop %v2703
  %v2705 = vmul.f32 %v2621, 1.442695
  %v2706 = vpow.pop %v2705
  %v2707 = vmul.f32 %v2622, 1.442695
  %v2708 = vpow.pop %v2707
  %v2709 = vmul.f32 %v2623, 1.442695
  %v2710 = vpow.pop %v2709
  %v2711 = vmul.f32 %v2624, 1.442695
  %v2712 = vpow.pop %v2711
  %v2713 = vmul.f32 %v2625, 1.442695
  %v2714 = vpow.pop %v2713
  %v2715 = vmul.f32 %v2626, 1.442695
  %v2716 = vpow.pop %v2715
  %v2717 = vmul.f32 %v2627, 1.442695
  %v2718 = vpow.pop %v2717
  %v2719 = vmul.f32 %v2628, 1.442695
  %v2720 = vpow.pop %v2719
  %v2721 = vmul.f32 %v2629, 1.442695
  %v2722 = vpow.pop %v2721
  %v2723 = vmul.f32 %v2630, 1.442695
  %v2724 = vpow.pop %v2723
  %v2725 = vmul.f32 %v2631, 1.442695
  %v2726 = vpow.pop %v2725
  %v2727 = vmul.f32 %v2632, 1.442695
  %v2728 = vpow.pop %v2727
  %v2729 = vmul.f32 %v2633, 1.442695
  %v2730 = vpow.pop %v2729
  %v2731 = vmul.f32 %v2634, 1.442695
  %v2732 = vpow.pop %v2731
  %v2733 = vmul.f32 %v2635, 1.442695
  %v2734 = vpow.pop %v2733
  %v2735 = vmul.f32 %v2636, 1.442695
  %v2736 = vpow.pop %v2735
  %v2737 = vsub.f32 %v2638, 1.0
  %v2738 = vsub.f32 %v2640, 1.0
  %v2739 = vsub.f32 %v2642, 1.0
  %v2740 = vsub.f32 %v2644, 1.0
  %v2741 = vsub.f32 %v2646, 1.0
  %v2742 = vsub.f32 %v2648, 1.0
  %v2743 = vsub.f32 %v2650, 1.0
  %v2744 = vsub.f32 %v2652, 1.0
  %v2745 = vsub.f32 %v2654, 1.0
  %v2746 = vsub.f32 %v2656, 1.0
  %v2747 = vsub.f32 %v2658, 1.0
  %v2748 = vsub.f32 %v2660, 1.0
  %v2749 = vsub.f32 %v2662, 1.0
  %v2750 = vsub.f32 %v2664, 1.0
  %v2751 = vsub.f32 %v2666, 1.0
  %v2752 = vsub.f32 %v2668, 1.0
  %v2753 = vsub.f32 %v2670, 1.0
  %v2754 = vsub.f32 %v2672, 1.0
  %v2755 = vsub.f32 %v2674, 1.0
  %v2756 = vsub.f32 %v2676, 1.0
  %v2757 = vsub.f32 %v2678, 1.0
  %v2758 = vsub.f32 %v2680, 1.0
  %v2759 = vsub.f32 %v2682, 1.0
  %v2760 = vsub.f32 %v2684, 1.0
  %v2761 = vsub.f32 %v2686, 1.0
  %v2762 = vsub.f32 %v2688, 1.0
  %v2763 = vsub.f32 %v2690, 1.0
  %v2764 = vsub.f32 %v2692, 1.0
  %v2765 = vsub.f32 %v2694, 1.0
  %v2766 = vsub.f32 %v2696, 1.0
  %v2767 = vsub.f32 %v2698, 1.0
  %v2768 = vsub.f32 %v2700, 1.0
  %v2769 = vsub.f32 %v2702, 1.0
  %v2770 = vsub.f32 %v2704, 1.0
  %v2771 = vsub.f32 %v2706, 1.0
  %v2772 = vsub.f32 %v2708, 1.0
  %v2773 = vsub.f32 %v2710, 1.0
  %v2774 = vsub.f32 %v2712, 1.0
  %v2775 = vsub.f32 %v2714, 1.0
  %v2776 = vsub.f32 %v2716, 1.0
  %v2777 = vsub.f32 %v2718, 1.0
  %v2778 = vsub.f32 %v2720, 1.0
  %v2779 = vsub.f32 %v2722, 1.0
  %v2780 = vsub.f32 %v2724, 1.0
  %v2781 = vsub.f32 %v2726, 1.0
  %v2782 = vsub.f32 %v2728, 1.0
  %v2783 = vsub.f32 %v2730, 1.0
  %v2784 = vsub.f32 %v2732, 1.0
  %v2785 = vsub.f32 %v2734, 1.0
  %v2786 = vsub.f32 %v2736, 1.0
  %v2787 = vsel %vm2537, %v2339, %v2737
  %v2788 = vsel %vm2538, %v2342, %v2738
  %v2789 = vsel %vm2539, %v2347, %v2739
  %v2790 = vsel %vm2540, %v2350, %v2740
  %v2791 = vsel %vm2541, %v2355, %v2741
  %v2792 = vsel %vm2542, %v2358, %v2742
  %v2793 = vsel %vm2543, %v2363, %v2743
  %v2794 = vsel %vm2544, %v2366, %v2744
  %v2795 = vsel %vm2545, %v2371, %v2745
  %v2796 = vsel %vm2546, %v2374, %v2746
  %v2797 = vsel %vm2547, %v2379, %v2747
  %v2798 = vsel %vm2548, %v2382, %v2748
  %v2799 = vsel %vm2549, %v2387, %v2749
  %v2800 = vsel %vm2550, %v2390, %v2750
  %v2801 = vsel %vm2551, %v2395, %v2751
  %v2802 = vsel %vm2552, %v2398, %v2752
  %v2803 = vsel %vm2553, %v2403, %v2753
  %v2804 = vsel %vm2554, %v2406, %v2754
  %v2805 = vsel %vm2555, %v2411, %v2755
  %v2806 = vsel %vm2556, %v2414, %v2756
  %v2807 = vsel %vm2557, %v2419, %v2757
  %v2808 = vsel %vm2558, %v2422, %v2758
  %v2809 = vsel %vm2559, %v2427, %v2759
  %v2810 = vsel %vm2560, %v2430, %v2760
  %v2811 = vsel %vm2561, %v2435, %v2761
  %v2812 = vsel %vm2562, %v2438, %v2762
  %v2813 = vsel %vm2563, %v2443, %v2763
  %v2814 = vsel %vm2564, %v2446, %v2764
  %v2815 = vsel %vm2565, %v2451, %v2765
  %v2816 = vsel %vm2566, %v2454, %v2766
  %v2817 = vsel %vm2567, %v2459, %v2767
  %v2818 = vsel %vm2568, %v2462, %v2768
  %v2819 = vsel %vm2569, %v2467, %v2769
  %v2820 = vsel %vm2570, %v2470, %v2770
  %v2821 = vsel %vm2571, %v2475, %v2771
  %v2822 = vsel %vm2572, %v2478, %v2772
  %v2823 = vsel %vm2573, %v2483, %v2773
  %v2824 = vsel %vm2574, %v2486, %v2774
  %v2825 = vsel %vm2575, %v2491, %v2775
  %v2826 = vsel %vm2576, %v2494, %v2776
  %v2827 = vsel %vm2577, %v2499, %v2777
  %v2828 = vsel %vm2578, %v2502, %v2778
  %v2829 = vsel %vm2579, %v2507, %v2779
  %v2830 = vsel %vm2580, %v2510, %v2780
  %v2831 = vsel %vm2581, %v2515, %v2781
  %v2832 = vsel %vm2582, %v2518, %v2782
  %v2833 = vsel %vm2583, %v2523, %v2783
  %v2834 = vsel %vm2584, %v2526, %v2784
  %v2835 = vsel %vm2585, %v2531, %v2785
  %v2836 = vsel %vm2586, %v2534, %v2786
  %v2837 = vld [vmem:[%s11] sm:$0x1]
  %v2839 = vlaneseq
  %v2840 = vshrl.u32 %v2839, 7
  %v2841 = vsub.s32 0, %v2840
  %v2842 = vrot.slane %v2837, %v2841
  %v2844 = vmul.f32 %v2787, %v2842
  %v2845 = vmul.f32 %v2788, %v2842
  %v2846 = vmul.f32 %v2789, %v2842
  %v2847 = vmul.f32 %v2790, %v2842
  %v2848 = vmul.f32 %v2791, %v2842
  %v2849 = vmul.f32 %v2792, %v2842
  %v2850 = vmul.f32 %v2793, %v2842
  %v2851 = vmul.f32 %v2794, %v2842
  %v2852 = vmul.f32 %v2795, %v2842
  %v2853 = vmul.f32 %v2796, %v2842
  %v2854 = vmul.f32 %v2797, %v2842
  %v2855 = vmul.f32 %v2798, %v2842
  %v2856 = vmul.f32 %v2799, %v2842
  %v2857 = vmul.f32 %v2800, %v2842
  %v2858 = vmul.f32 %v2801, %v2842
  %v2859 = vmul.f32 %v2802, %v2842
  %v2860 = vmul.f32 %v2803, %v2842
  %v2861 = vmul.f32 %v2804, %v2842
  %v2862 = vmul.f32 %v2805, %v2842
  %v2863 = vmul.f32 %v2806, %v2842
  %v2864 = vmul.f32 %v2807, %v2842
  %v2865 = vmul.f32 %v2808, %v2842
  %v2866 = vmul.f32 %v2809, %v2842
  %v2867 = vmul.f32 %v2810, %v2842
  %v2868 = vmul.f32 %v2811, %v2842
  %v2869 = vmul.f32 %v2812, %v2842
  %v2870 = vmul.f32 %v2813, %v2842
  %v2871 = vmul.f32 %v2814, %v2842
  %v2872 = vmul.f32 %v2815, %v2842
  %v2873 = vmul.f32 %v2816, %v2842
  %v2874 = vmul.f32 %v2817, %v2842
  %v2875 = vmul.f32 %v2818, %v2842
  %v2876 = vmul.f32 %v2819, %v2842
  %v2877 = vmul.f32 %v2820, %v2842
  %v2878 = vmul.f32 %v2821, %v2842
  %v2879 = vmul.f32 %v2822, %v2842
  %v2880 = vmul.f32 %v2823, %v2842
  %v2881 = vmul.f32 %v2824, %v2842
  %v2882 = vmul.f32 %v2825, %v2842
  %v2883 = vmul.f32 %v2826, %v2842
  %v2884 = vmul.f32 %v2827, %v2842
  %v2885 = vmul.f32 %v2828, %v2842
  %v2886 = vmul.f32 %v2829, %v2842
  %v2887 = vmul.f32 %v2830, %v2842
  %v2888 = vmul.f32 %v2831, %v2842
  %v2889 = vmul.f32 %v2832, %v2842
  %v2890 = vmul.f32 %v2833, %v2842
  %v2891 = vmul.f32 %v2834, %v2842
  %v2892 = vmul.f32 %v2835, %v2842
  %v2893 = vmul.f32 %v2836, %v2842
  %vm2894 = vcmask 64512
  %v2895 = vsel %vm2894, %v2844, 0.0
  %2896 = vadd.xlane.f32.xlu0 %v2895
  %v2897 = vpop.xlane.xlu0 %2896
  %v2898 = vsel %vm2894, %v2845, 0.0
  %2899 = vadd.xlane.f32.xlu0 %v2898
  %v2900 = vpop.xlane.xlu0 %2899
  %v2901 = vsel %vm2894, %v2846, 0.0
  %2902 = vadd.xlane.f32.xlu0 %v2901
  %v2903 = vpop.xlane.xlu0 %2902
  %v2904 = vsel %vm2894, %v2847, 0.0
  %2905 = vadd.xlane.f32.xlu0 %v2904
  %v2906 = vpop.xlane.xlu0 %2905
  %v2907 = vsel %vm2894, %v2848, 0.0
  %2908 = vadd.xlane.f32.xlu0 %v2907
  %v2909 = vpop.xlane.xlu0 %2908
  %v2910 = vsel %vm2894, %v2849, 0.0
  %2911 = vadd.xlane.f32.xlu0 %v2910
  %v2912 = vpop.xlane.xlu0 %2911
  %v2913 = vsel %vm2894, %v2850, 0.0
  %2914 = vadd.xlane.f32.xlu0 %v2913
  %v2915 = vpop.xlane.xlu0 %2914
  %v2916 = vsel %vm2894, %v2851, 0.0
  %2917 = vadd.xlane.f32.xlu0 %v2916
  %v2918 = vpop.xlane.xlu0 %2917
  %v2919 = vsel %vm2894, %v2852, 0.0
  %2920 = vadd.xlane.f32.xlu0 %v2919
  %v2921 = vpop.xlane.xlu0 %2920
  %v2922 = vsel %vm2894, %v2853, 0.0
  %2923 = vadd.xlane.f32.xlu0 %v2922
  %v2924 = vpop.xlane.xlu0 %2923
  %v2925 = vsel %vm2894, %v2854, 0.0
  %2926 = vadd.xlane.f32.xlu0 %v2925
  %v2927 = vpop.xlane.xlu0 %2926
  %v2928 = vsel %vm2894, %v2855, 0.0
  %2929 = vadd.xlane.f32.xlu0 %v2928
  %v2930 = vpop.xlane.xlu0 %2929
  %v2931 = vsel %vm2894, %v2856, 0.0
  %2932 = vadd.xlane.f32.xlu0 %v2931
  %v2933 = vpop.xlane.xlu0 %2932
  %v2934 = vsel %vm2894, %v2857, 0.0
  %2935 = vadd.xlane.f32.xlu0 %v2934
  %v2936 = vpop.xlane.xlu0 %2935
  %v2937 = vsel %vm2894, %v2858, 0.0
  %2938 = vadd.xlane.f32.xlu0 %v2937
  %v2939 = vpop.xlane.xlu0 %2938
  %v2940 = vsel %vm2894, %v2859, 0.0
  %2941 = vadd.xlane.f32.xlu0 %v2940
  %v2942 = vpop.xlane.xlu0 %2941
  %v2943 = vsel %vm2894, %v2860, 0.0
  %2944 = vadd.xlane.f32.xlu0 %v2943
  %v2945 = vpop.xlane.xlu0 %2944
  %v2946 = vsel %vm2894, %v2861, 0.0
  %2947 = vadd.xlane.f32.xlu0 %v2946
  %v2948 = vpop.xlane.xlu0 %2947
  %v2949 = vsel %vm2894, %v2862, 0.0
  %2950 = vadd.xlane.f32.xlu0 %v2949
  %v2951 = vpop.xlane.xlu0 %2950
  %v2952 = vsel %vm2894, %v2863, 0.0
  %2953 = vadd.xlane.f32.xlu0 %v2952
  %v2954 = vpop.xlane.xlu0 %2953
  %v2955 = vsel %vm2894, %v2864, 0.0
  %2956 = vadd.xlane.f32.xlu0 %v2955
  %v2957 = vpop.xlane.xlu0 %2956
  %v2958 = vsel %vm2894, %v2865, 0.0
  %2959 = vadd.xlane.f32.xlu0 %v2958
  %v2960 = vpop.xlane.xlu0 %2959
  %v2961 = vsel %vm2894, %v2866, 0.0
  %2962 = vadd.xlane.f32.xlu0 %v2961
  %v2963 = vpop.xlane.xlu0 %2962
  %v2964 = vsel %vm2894, %v2867, 0.0
  %2965 = vadd.xlane.f32.xlu0 %v2964
  %v2966 = vpop.xlane.xlu0 %2965
  %v2967 = vsel %vm2894, %v2868, 0.0
  %2968 = vadd.xlane.f32.xlu0 %v2967
  %v2969 = vpop.xlane.xlu0 %2968
  %v2970 = vsel %vm2894, %v2869, 0.0
  %2971 = vadd.xlane.f32.xlu0 %v2970
  %v2972 = vpop.xlane.xlu0 %2971
  %v2973 = vsel %vm2894, %v2870, 0.0
  %2974 = vadd.xlane.f32.xlu0 %v2973
  %v2975 = vpop.xlane.xlu0 %2974
  %v2976 = vsel %vm2894, %v2871, 0.0
  %2977 = vadd.xlane.f32.xlu0 %v2976
  %v2978 = vpop.xlane.xlu0 %2977
  %v2979 = vsel %vm2894, %v2872, 0.0
  %2980 = vadd.xlane.f32.xlu0 %v2979
  %v2981 = vpop.xlane.xlu0 %2980
  %v2982 = vsel %vm2894, %v2873, 0.0
  %2983 = vadd.xlane.f32.xlu0 %v2982
  %v2984 = vpop.xlane.xlu0 %2983
  %v2985 = vsel %vm2894, %v2874, 0.0
  %2986 = vadd.xlane.f32.xlu0 %v2985
  %v2987 = vpop.xlane.xlu0 %2986
  %v2988 = vsel %vm2894, %v2875, 0.0
  %2989 = vadd.xlane.f32.xlu0 %v2988
  %v2990 = vpop.xlane.xlu0 %2989
  %v2991 = vsel %vm2894, %v2876, 0.0
  %2992 = vadd.xlane.f32.xlu0 %v2991
  %v2993 = vpop.xlane.xlu0 %2992
  %v2994 = vsel %vm2894, %v2877, 0.0
  %2995 = vadd.xlane.f32.xlu0 %v2994
  %v2996 = vpop.xlane.xlu0 %2995
  %v2997 = vsel %vm2894, %v2878, 0.0
  %2998 = vadd.xlane.f32.xlu0 %v2997
  %v2999 = vpop.xlane.xlu0 %2998
  %v3000 = vsel %vm2894, %v2879, 0.0
  %3001 = vadd.xlane.f32.xlu0 %v3000
  %v3002 = vpop.xlane.xlu0 %3001
  %v3003 = vsel %vm2894, %v2880, 0.0
  %3004 = vadd.xlane.f32.xlu0 %v3003
  %v3005 = vpop.xlane.xlu0 %3004
  %v3006 = vsel %vm2894, %v2881, 0.0
  %3007 = vadd.xlane.f32.xlu0 %v3006
  %v3008 = vpop.xlane.xlu0 %3007
  %v3009 = vsel %vm2894, %v2882, 0.0
  %3010 = vadd.xlane.f32.xlu0 %v3009
  %v3011 = vpop.xlane.xlu0 %3010
  %v3012 = vsel %vm2894, %v2883, 0.0
  %3013 = vadd.xlane.f32.xlu0 %v3012
  %v3014 = vpop.xlane.xlu0 %3013
  %v3015 = vsel %vm2894, %v2884, 0.0
  %3016 = vadd.xlane.f32.xlu0 %v3015
  %v3017 = vpop.xlane.xlu0 %3016
  %v3018 = vsel %vm2894, %v2885, 0.0
  %3019 = vadd.xlane.f32.xlu0 %v3018
  %v3020 = vpop.xlane.xlu0 %3019
  %v3021 = vsel %vm2894, %v2886, 0.0
  %3022 = vadd.xlane.f32.xlu0 %v3021
  %v3023 = vpop.xlane.xlu0 %3022
  %v3024 = vsel %vm2894, %v2887, 0.0
  %3025 = vadd.xlane.f32.xlu0 %v3024
  %v3026 = vpop.xlane.xlu0 %3025
  %v3027 = vsel %vm2894, %v2888, 0.0
  %3028 = vadd.xlane.f32.xlu0 %v3027
  %v3029 = vpop.xlane.xlu0 %3028
  %v3030 = vsel %vm2894, %v2889, 0.0
  %3031 = vadd.xlane.f32.xlu0 %v3030
  %v3032 = vpop.xlane.xlu0 %3031
  %v3033 = vsel %vm2894, %v2890, 0.0
  %3034 = vadd.xlane.f32.xlu0 %v3033
  %v3035 = vpop.xlane.xlu0 %3034
  %v3036 = vsel %vm2894, %v2891, 0.0
  %3037 = vadd.xlane.f32.xlu0 %v3036
  %v3038 = vpop.xlane.xlu0 %3037
  %v3039 = vsel %vm2894, %v2892, 0.0
  %3040 = vadd.xlane.f32.xlu0 %v3039
  %v3041 = vpop.xlane.xlu0 %3040
  %v3042 = vsel %vm2894, %v2893, 0.0
  %3043 = vadd.xlane.f32.xlu0 %v3042
  %v3044 = vpop.xlane.xlu0 %3043
  %v3045 = vld [vmem:[#allocation2] sm:$0x1]
  %v3047 = vlaneseq
  %v3048 = vshrl.u32 %v3047, 7
  %v3049 = vsub.s32 0, %v3048
  %v3050 = vrot.slane %v3045, %v3049
  %v3052 = vadd.f32 %v2897, %v3050
  %v3053 = vadd.f32 %v2900, %v3050
  %v3054 = vadd.f32 %v2903, %v3050
  %v3055 = vadd.f32 %v2906, %v3050
  %v3056 = vadd.f32 %v2909, %v3050
  %v3057 = vadd.f32 %v2912, %v3050
  %v3058 = vadd.f32 %v2915, %v3050
  %v3059 = vadd.f32 %v2918, %v3050
  %v3060 = vadd.f32 %v2921, %v3050
  %v3061 = vadd.f32 %v2924, %v3050
  %v3062 = vadd.f32 %v2927, %v3050
  %v3063 = vadd.f32 %v2930, %v3050
  %v3064 = vadd.f32 %v2933, %v3050
  %v3065 = vadd.f32 %v2936, %v3050
  %v3066 = vadd.f32 %v2939, %v3050
  %v3067 = vadd.f32 %v2942, %v3050
  %v3068 = vadd.f32 %v2945, %v3050
  %v3069 = vadd.f32 %v2948, %v3050
  %v3070 = vadd.f32 %v2951, %v3050
  %v3071 = vadd.f32 %v2954, %v3050
  %v3072 = vadd.f32 %v2957, %v3050
  %v3073 = vadd.f32 %v2960, %v3050
  %v3074 = vadd.f32 %v2963, %v3050
  %v3075 = vadd.f32 %v2966, %v3050
  %v3076 = vadd.f32 %v2969, %v3050
  %v3077 = vadd.f32 %v2972, %v3050
  %v3078 = vadd.f32 %v2975, %v3050
  %v3079 = vadd.f32 %v2978, %v3050
  %v3080 = vadd.f32 %v2981, %v3050
  %v3081 = vadd.f32 %v2984, %v3050
  %v3082 = vadd.f32 %v2987, %v3050
  %v3083 = vadd.f32 %v2990, %v3050
  %v3084 = vadd.f32 %v2993, %v3050
  %v3085 = vadd.f32 %v2996, %v3050
  %v3086 = vadd.f32 %v2999, %v3050
  %v3087 = vadd.f32 %v3002, %v3050
  %v3088 = vadd.f32 %v3005, %v3050
  %v3089 = vadd.f32 %v3008, %v3050
  %v3090 = vadd.f32 %v3011, %v3050
  %v3091 = vadd.f32 %v3014, %v3050
  %v3092 = vadd.f32 %v3017, %v3050
  %v3093 = vadd.f32 %v3020, %v3050
  %v3094 = vadd.f32 %v3023, %v3050
  %v3095 = vadd.f32 %v3026, %v3050
  %v3096 = vadd.f32 %v3029, %v3050
  %v3097 = vadd.f32 %v3032, %v3050
  %v3098 = vadd.f32 %v3035, %v3050
  %v3099 = vadd.f32 %v3038, %v3050
  %v3100 = vadd.f32 %v3041, %v3050
  %v3101 = vadd.f32 %v3044, %v3050
  %v3102 = vxor.u32 %v3052, 2147483648
  %v3103 = vxor.u32 %v3053, 2147483648
  %v3104 = vxor.u32 %v3054, 2147483648
  %v3105 = vxor.u32 %v3055, 2147483648
  %v3106 = vxor.u32 %v3056, 2147483648
  %v3107 = vxor.u32 %v3057, 2147483648
  %v3108 = vxor.u32 %v3058, 2147483648
  %v3109 = vxor.u32 %v3059, 2147483648
  %v3110 = vxor.u32 %v3060, 2147483648
  %v3111 = vxor.u32 %v3061, 2147483648
  %v3112 = vxor.u32 %v3062, 2147483648
  %v3113 = vxor.u32 %v3063, 2147483648
  %v3114 = vxor.u32 %v3064, 2147483648
  %v3115 = vxor.u32 %v3065, 2147483648
  %v3116 = vxor.u32 %v3066, 2147483648
  %v3117 = vxor.u32 %v3067, 2147483648
  %v3118 = vxor.u32 %v3068, 2147483648
  %v3119 = vxor.u32 %v3069, 2147483648
  %v3120 = vxor.u32 %v3070, 2147483648
  %v3121 = vxor.u32 %v3071, 2147483648
  %v3122 = vxor.u32 %v3072, 2147483648
  %v3123 = vxor.u32 %v3073, 2147483648
  %v3124 = vxor.u32 %v3074, 2147483648
  %v3125 = vxor.u32 %v3075, 2147483648
  %v3126 = vxor.u32 %v3076, 2147483648
  %v3127 = vxor.u32 %v3077, 2147483648
  %v3128 = vxor.u32 %v3078, 2147483648
  %v3129 = vxor.u32 %v3079, 2147483648
  %v3130 = vxor.u32 %v3080, 2147483648
  %v3131 = vxor.u32 %v3081, 2147483648
  %v3132 = vxor.u32 %v3082, 2147483648
  %v3133 = vxor.u32 %v3083, 2147483648
  %v3134 = vxor.u32 %v3084, 2147483648
  %v3135 = vxor.u32 %v3085, 2147483648
  %v3136 = vxor.u32 %v3086, 2147483648
  %v3137 = vxor.u32 %v3087, 2147483648
  %v3138 = vxor.u32 %v3088, 2147483648
  %v3139 = vxor.u32 %v3089, 2147483648
  %v3140 = vxor.u32 %v3090, 2147483648
  %v3141 = vxor.u32 %v3091, 2147483648
  %v3142 = vxor.u32 %v3092, 2147483648
  %v3143 = vxor.u32 %v3093, 2147483648
  %v3144 = vxor.u32 %v3094, 2147483648
  %v3145 = vxor.u32 %v3095, 2147483648
  %v3146 = vxor.u32 %v3096, 2147483648
  %v3147 = vxor.u32 %v3097, 2147483648
  %v3148 = vxor.u32 %v3098, 2147483648
  %v3149 = vxor.u32 %v3099, 2147483648
  %v3150 = vxor.u32 %v3100, 2147483648
  %v3151 = vxor.u32 %v3101, 2147483648
  %v3152 = vmul.f32 %v3102, 1.442695
  %v3153 = vpow.pop %v3152
  %v3154 = vmul.f32 %v3103, 1.442695
  %v3155 = vpow.pop %v3154
  %v3156 = vmul.f32 %v3104, 1.442695
  %v3157 = vpow.pop %v3156
  %v3158 = vmul.f32 %v3105, 1.442695
  %v3159 = vpow.pop %v3158
  %v3160 = vmul.f32 %v3106, 1.442695
  %v3161 = vpow.pop %v3160
  %v3162 = vmul.f32 %v3107, 1.442695
  %v3163 = vpow.pop %v3162
  %v3164 = vmul.f32 %v3108, 1.442695
  %v3165 = vpow.pop %v3164
  %v3166 = vmul.f32 %v3109, 1.442695
  %v3167 = vpow.pop %v3166
  %v3168 = vmul.f32 %v3110, 1.442695
  %v3169 = vpow.pop %v3168
  %v3170 = vmul.f32 %v3111, 1.442695
  %v3171 = vpow.pop %v3170
  %v3172 = vmul.f32 %v3112, 1.442695
  %v3173 = vpow.pop %v3172
  %v3174 = vmul.f32 %v3113, 1.442695
  %v3175 = vpow.pop %v3174
  %v3176 = vmul.f32 %v3114, 1.442695
  %v3177 = vpow.pop %v3176
  %v3178 = vmul.f32 %v3115, 1.442695
  %v3179 = vpow.pop %v3178
  %v3180 = vmul.f32 %v3116, 1.442695
  %v3181 = vpow.pop %v3180
  %v3182 = vmul.f32 %v3117, 1.442695
  %v3183 = vpow.pop %v3182
  %v3184 = vmul.f32 %v3118, 1.442695
  %v3185 = vpow.pop %v3184
  %v3186 = vmul.f32 %v3119, 1.442695
  %v3187 = vpow.pop %v3186
  %v3188 = vmul.f32 %v3120, 1.442695
  %v3189 = vpow.pop %v3188
  %v3190 = vmul.f32 %v3121, 1.442695
  %v3191 = vpow.pop %v3190
  %v3192 = vmul.f32 %v3122, 1.442695
  %v3193 = vpow.pop %v3192
  %v3194 = vmul.f32 %v3123, 1.442695
  %v3195 = vpow.pop %v3194
  %v3196 = vmul.f32 %v3124, 1.442695
  %v3197 = vpow.pop %v3196
  %v3198 = vmul.f32 %v3125, 1.442695
  %v3199 = vpow.pop %v3198
  %v3200 = vmul.f32 %v3126, 1.442695
  %v3201 = vpow.pop %v3200
  %v3202 = vmul.f32 %v3127, 1.442695
  %v3203 = vpow.pop %v3202
  %v3204 = vmul.f32 %v3128, 1.442695
  %v3205 = vpow.pop %v3204
  %v3206 = vmul.f32 %v3129, 1.442695
  %v3207 = vpow.pop %v3206
  %v3208 = vmul.f32 %v3130, 1.442695
  %v3209 = vpow.pop %v3208
  %v3210 = vmul.f32 %v3131, 1.442695
  %v3211 = vpow.pop %v3210
  %v3212 = vmul.f32 %v3132, 1.442695
  %v3213 = vpow.pop %v3212
  %v3214 = vmul.f32 %v3133, 1.442695
  %v3215 = vpow.pop %v3214
  %v3216 = vmul.f32 %v3134, 1.442695
  %v3217 = vpow.pop %v3216
  %v3218 = vmul.f32 %v3135, 1.442695
  %v3219 = vpow.pop %v3218
  %v3220 = vmul.f32 %v3136, 1.442695
  %v3221 = vpow.pop %v3220
  %v3222 = vmul.f32 %v3137, 1.442695
  %v3223 = vpow.pop %v3222
  %v3224 = vmul.f32 %v3138, 1.442695
  %v3225 = vpow.pop %v3224
  %v3226 = vmul.f32 %v3139, 1.442695
  %v3227 = vpow.pop %v3226
  %v3228 = vmul.f32 %v3140, 1.442695
  %v3229 = vpow.pop %v3228
  %v3230 = vmul.f32 %v3141, 1.442695
  %v3231 = vpow.pop %v3230
  %v3232 = vmul.f32 %v3142, 1.442695
  %v3233 = vpow.pop %v3232
  %v3234 = vmul.f32 %v3143, 1.442695
  %v3235 = vpow.pop %v3234
  %v3236 = vmul.f32 %v3144, 1.442695
  %v3237 = vpow.pop %v3236
  %v3238 = vmul.f32 %v3145, 1.442695
  %v3239 = vpow.pop %v3238
  %v3240 = vmul.f32 %v3146, 1.442695
  %v3241 = vpow.pop %v3240
  %v3242 = vmul.f32 %v3147, 1.442695
  %v3243 = vpow.pop %v3242
  %v3244 = vmul.f32 %v3148, 1.442695
  %v3245 = vpow.pop %v3244
  %v3246 = vmul.f32 %v3149, 1.442695
  %v3247 = vpow.pop %v3246
  %v3248 = vmul.f32 %v3150, 1.442695
  %v3249 = vpow.pop %v3248
  %v3250 = vmul.f32 %v3151, 1.442695
  %v3251 = vpow.pop %v3250
  %v3252 = vadd.f32 %v3153, 1.0
  %v3253 = vadd.f32 %v3155, 1.0
  %v3254 = vadd.f32 %v3157, 1.0
  %v3255 = vadd.f32 %v3159, 1.0
  %v3256 = vadd.f32 %v3161, 1.0
  %v3257 = vadd.f32 %v3163, 1.0
  %v3258 = vadd.f32 %v3165, 1.0
  %v3259 = vadd.f32 %v3167, 1.0
  %v3260 = vadd.f32 %v3169, 1.0
  %v3261 = vadd.f32 %v3171, 1.0
  %v3262 = vadd.f32 %v3173, 1.0
  %v3263 = vadd.f32 %v3175, 1.0
  %v3264 = vadd.f32 %v3177, 1.0
  %v3265 = vadd.f32 %v3179, 1.0
  %v3266 = vadd.f32 %v3181, 1.0
  %v3267 = vadd.f32 %v3183, 1.0
  %v3268 = vadd.f32 %v3185, 1.0
  %v3269 = vadd.f32 %v3187, 1.0
  %v3270 = vadd.f32 %v3189, 1.0
  %v3271 = vadd.f32 %v3191, 1.0
  %v3272 = vadd.f32 %v3193, 1.0
  %v3273 = vadd.f32 %v3195, 1.0
  %v3274 = vadd.f32 %v3197, 1.0
  %v3275 = vadd.f32 %v3199, 1.0
  %v3276 = vadd.f32 %v3201, 1.0
  %v3277 = vadd.f32 %v3203, 1.0
  %v3278 = vadd.f32 %v3205, 1.0
  %v3279 = vadd.f32 %v3207, 1.0
  %v3280 = vadd.f32 %v3209, 1.0
  %v3281 = vadd.f32 %v3211, 1.0
  %v3282 = vadd.f32 %v3213, 1.0
  %v3283 = vadd.f32 %v3215, 1.0
  %v3284 = vadd.f32 %v3217, 1.0
  %v3285 = vadd.f32 %v3219, 1.0
  %v3286 = vadd.f32 %v3221, 1.0
  %v3287 = vadd.f32 %v3223, 1.0
  %v3288 = vadd.f32 %v3225, 1.0
  %v3289 = vadd.f32 %v3227, 1.0
  %v3290 = vadd.f32 %v3229, 1.0
  %v3291 = vadd.f32 %v3231, 1.0
  %v3292 = vadd.f32 %v3233, 1.0
  %v3293 = vadd.f32 %v3235, 1.0
  %v3294 = vadd.f32 %v3237, 1.0
  %v3295 = vadd.f32 %v3239, 1.0
  %v3296 = vadd.f32 %v3241, 1.0
  %v3297 = vadd.f32 %v3243, 1.0
  %v3298 = vadd.f32 %v3245, 1.0
  %v3299 = vadd.f32 %v3247, 1.0
  %v3300 = vadd.f32 %v3249, 1.0
  %v3301 = vadd.f32 %v3251, 1.0
  %v3302 = vrcp.pop %v3252
  %v3303 = vmul.f32 1.0, %v3302
  %v3304 = vrcp.pop %v3253
  %v3305 = vmul.f32 1.0, %v3304
  %v3306 = vrcp.pop %v3254
  %v3307 = vmul.f32 1.0, %v3306
  %v3308 = vrcp.pop %v3255
  %v3309 = vmul.f32 1.0, %v3308
  %v3310 = vrcp.pop %v3256
  %v3311 = vmul.f32 1.0, %v3310
  %v3312 = vrcp.pop %v3257
  %v3313 = vmul.f32 1.0, %v3312
  %v3314 = vrcp.pop %v3258
  %v3315 = vmul.f32 1.0, %v3314
  %v3316 = vrcp.pop %v3259
  %v3317 = vmul.f32 1.0, %v3316
  %v3318 = vrcp.pop %v3260
  %v3319 = vmul.f32 1.0, %v3318
  %v3320 = vrcp.pop %v3261
  %v3321 = vmul.f32 1.0, %v3320
  %v3322 = vrcp.pop %v3262
  %v3323 = vmul.f32 1.0, %v3322
  %v3324 = vrcp.pop %v3263
  %v3325 = vmul.f32 1.0, %v3324
  %v3326 = vrcp.pop %v3264
  %v3327 = vmul.f32 1.0, %v3326
  %v3328 = vrcp.pop %v3265
  %v3329 = vmul.f32 1.0, %v3328
  %v3330 = vrcp.pop %v3266
  %v3331 = vmul.f32 1.0, %v3330
  %v3332 = vrcp.pop %v3267
  %v3333 = vmul.f32 1.0, %v3332
  %v3334 = vrcp.pop %v3268
  %v3335 = vmul.f32 1.0, %v3334
  %v3336 = vrcp.pop %v3269
  %v3337 = vmul.f32 1.0, %v3336
  %v3338 = vrcp.pop %v3270
  %v3339 = vmul.f32 1.0, %v3338
  %v3340 = vrcp.pop %v3271
  %v3341 = vmul.f32 1.0, %v3340
  %v3342 = vrcp.pop %v3272
  %v3343 = vmul.f32 1.0, %v3342
  %v3344 = vrcp.pop %v3273
  %v3345 = vmul.f32 1.0, %v3344
  %v3346 = vrcp.pop %v3274
  %v3347 = vmul.f32 1.0, %v3346
  %v3348 = vrcp.pop %v3275
  %v3349 = vmul.f32 1.0, %v3348
  %v3350 = vrcp.pop %v3276
  %v3351 = vmul.f32 1.0, %v3350
  %v3352 = vrcp.pop %v3277
  %v3353 = vmul.f32 1.0, %v3352
  %v3354 = vrcp.pop %v3278
  %v3355 = vmul.f32 1.0, %v3354
  %v3356 = vrcp.pop %v3279
  %v3357 = vmul.f32 1.0, %v3356
  %v3358 = vrcp.pop %v3280
  %v3359 = vmul.f32 1.0, %v3358
  %v3360 = vrcp.pop %v3281
  %v3361 = vmul.f32 1.0, %v3360
  %v3362 = vrcp.pop %v3282
  %v3363 = vmul.f32 1.0, %v3362
  %v3364 = vrcp.pop %v3283
  %v3365 = vmul.f32 1.0, %v3364
  %v3366 = vrcp.pop %v3284
  %v3367 = vmul.f32 1.0, %v3366
  %v3368 = vrcp.pop %v3285
  %v3369 = vmul.f32 1.0, %v3368
  %v3370 = vrcp.pop %v3286
  %v3371 = vmul.f32 1.0, %v3370
  %v3372 = vrcp.pop %v3287
  %v3373 = vmul.f32 1.0, %v3372
  %v3374 = vrcp.pop %v3288
  %v3375 = vmul.f32 1.0, %v3374
  %v3376 = vrcp.pop %v3289
  %v3377 = vmul.f32 1.0, %v3376
  %v3378 = vrcp.pop %v3290
  %v3379 = vmul.f32 1.0, %v3378
  %v3380 = vrcp.pop %v3291
  %v3381 = vmul.f32 1.0, %v3380
  %v3382 = vrcp.pop %v3292
  %v3383 = vmul.f32 1.0, %v3382
  %v3384 = vrcp.pop %v3293
  %v3385 = vmul.f32 1.0, %v3384
  %v3386 = vrcp.pop %v3294
  %v3387 = vmul.f32 1.0, %v3386
  %v3388 = vrcp.pop %v3295
  %v3389 = vmul.f32 1.0, %v3388
  %v3390 = vrcp.pop %v3296
  %v3391 = vmul.f32 1.0, %v3390
  %v3392 = vrcp.pop %v3297
  %v3393 = vmul.f32 1.0, %v3392
  %v3394 = vrcp.pop %v3298
  %v3395 = vmul.f32 1.0, %v3394
  %v3396 = vrcp.pop %v3299
  %v3397 = vmul.f32 1.0, %v3396
  %v3398 = vrcp.pop %v3300
  %v3399 = vmul.f32 1.0, %v3398
  %v3400 = vrcp.pop %v3301
  %v3401 = vmul.f32 1.0, %v3400
  %v3402 = vmul.f32 %v85, %v3353
  %v3403 = vmul.f32 %v86, %v3355
  %v3404 = vmul.f32 %v87, %v3357
  %v3405 = vmul.f32 %v88, %v3359
  %v3406 = vmul.f32 %v89, %v3361
  %v3407 = vmul.f32 %v90, %v3363
  %v3408 = vmul.f32 %v91, %v3365
  %v3409 = vmul.f32 %v92, %v3367
  %v3410 = vmul.f32 %v93, %v3369
  %v3411 = vmul.f32 %v94, %v3371
  %v3412 = vmul.f32 %v95, %v3373
  %v3413 = vmul.f32 %v96, %v3375
  %v3414 = vmul.f32 %v97, %v3377
  %v3415 = vmul.f32 %v98, %v3379
  %v3416 = vmul.f32 %v99, %v3381
  %v3417 = vmul.f32 %v100, %v3383
  %v3418 = vmul.f32 %v101, %v3385
  %v3419 = vmul.f32 %v102, %v3387
  %v3420 = vmul.f32 %v103, %v3389
  %v3421 = vmul.f32 %v104, %v3391
  %v3422 = vmul.f32 %v105, %v3393
  %v3423 = vmul.f32 %v106, %v3395
  %v3424 = vmul.f32 %v107, %v3397
  %v3425 = vmul.f32 %v108, %v3399
  %v3426 = vmul.f32 %v109, %v3401
  %v3427 = vsub.f32 1.0, %v85
  %v3428 = vsub.f32 1.0, %v86
  %v3429 = vsub.f32 1.0, %v87
  %v3430 = vsub.f32 1.0, %v88
  %v3431 = vsub.f32 1.0, %v89
  %v3432 = vsub.f32 1.0, %v90
  %v3433 = vsub.f32 1.0, %v91
  %v3434 = vsub.f32 1.0, %v92
  %v3435 = vsub.f32 1.0, %v93
  %v3436 = vsub.f32 1.0, %v94
  %v3437 = vsub.f32 1.0, %v95
  %v3438 = vsub.f32 1.0, %v96
  %v3439 = vsub.f32 1.0, %v97
  %v3440 = vsub.f32 1.0, %v98
  %v3441 = vsub.f32 1.0, %v99
  %v3442 = vsub.f32 1.0, %v100
  %v3443 = vsub.f32 1.0, %v101
  %v3444 = vsub.f32 1.0, %v102
  %v3445 = vsub.f32 1.0, %v103
  %v3446 = vsub.f32 1.0, %v104
  %v3447 = vsub.f32 1.0, %v105
  %v3448 = vsub.f32 1.0, %v106
  %v3449 = vsub.f32 1.0, %v107
  %v3450 = vsub.f32 1.0, %v108
  %v3451 = vsub.f32 1.0, %v109
  %v3452 = vmul.f32 %v3427, %v3303
  %v3453 = vmul.f32 %v3428, %v3305
  %v3454 = vmul.f32 %v3429, %v3307
  %v3455 = vmul.f32 %v3430, %v3309
  %v3456 = vmul.f32 %v3431, %v3311
  %v3457 = vmul.f32 %v3432, %v3313
  %v3458 = vmul.f32 %v3433, %v3315
  %v3459 = vmul.f32 %v3434, %v3317
  %v3460 = vmul.f32 %v3435, %v3319
  %v3461 = vmul.f32 %v3436, %v3321
  %v3462 = vmul.f32 %v3437, %v3323
  %v3463 = vmul.f32 %v3438, %v3325
  %v3464 = vmul.f32 %v3439, %v3327
  %v3465 = vmul.f32 %v3440, %v3329
  %v3466 = vmul.f32 %v3441, %v3331
  %v3467 = vmul.f32 %v3442, %v3333
  %v3468 = vmul.f32 %v3443, %v3335
  %v3469 = vmul.f32 %v3444, %v3337
  %v3470 = vmul.f32 %v3445, %v3339
  %v3471 = vmul.f32 %v3446, %v3341
  %v3472 = vmul.f32 %v3447, %v3343
  %v3473 = vmul.f32 %v3448, %v3345
  %v3474 = vmul.f32 %v3449, %v3347
  %v3475 = vmul.f32 %v3450, %v3349
  %v3476 = vmul.f32 %v3451, %v3351
  %v3477 = vadd.f32 %v3402, %v3452
  %v3478 = vadd.f32 %v3403, %v3453
  %v3479 = vadd.f32 %v3404, %v3454
  %v3480 = vadd.f32 %v3405, %v3455
  %v3481 = vadd.f32 %v3406, %v3456
  %v3482 = vadd.f32 %v3407, %v3457
  %v3483 = vadd.f32 %v3408, %v3458
  %v3484 = vadd.f32 %v3409, %v3459
  %v3485 = vadd.f32 %v3410, %v3460
  %v3486 = vadd.f32 %v3411, %v3461
  %v3487 = vadd.f32 %v3412, %v3462
  %v3488 = vadd.f32 %v3413, %v3463
  %v3489 = vadd.f32 %v3414, %v3464
  %v3490 = vadd.f32 %v3415, %v3465
  %v3491 = vadd.f32 %v3416, %v3466
  %v3492 = vadd.f32 %v3417, %v3467
  %v3493 = vadd.f32 %v3418, %v3468
  %v3494 = vadd.f32 %v3419, %v3469
  %v3495 = vadd.f32 %v3420, %v3470
  %v3496 = vadd.f32 %v3421, %v3471
  %v3497 = vadd.f32 %v3422, %v3472
  %v3498 = vadd.f32 %v3423, %v3473
  %v3499 = vadd.f32 %v3424, %v3474
  %v3500 = vadd.f32 %v3425, %v3475
  %v3501 = vadd.f32 %v3426, %v3476
  %v3502 = vmul.f32 %v85, %v3303
  %v3503 = vmul.f32 %v86, %v3305
  %v3504 = vmul.f32 %v87, %v3307
  %v3505 = vmul.f32 %v88, %v3309
  %v3506 = vmul.f32 %v89, %v3311
  %v3507 = vmul.f32 %v90, %v3313
  %v3508 = vmul.f32 %v91, %v3315
  %v3509 = vmul.f32 %v92, %v3317
  %v3510 = vmul.f32 %v93, %v3319
  %v3511 = vmul.f32 %v94, %v3321
  %v3512 = vmul.f32 %v95, %v3323
  %v3513 = vmul.f32 %v96, %v3325
  %v3514 = vmul.f32 %v97, %v3327
  %v3515 = vmul.f32 %v98, %v3329
  %v3516 = vmul.f32 %v99, %v3331
  %v3517 = vmul.f32 %v100, %v3333
  %v3518 = vmul.f32 %v101, %v3335
  %v3519 = vmul.f32 %v102, %v3337
  %v3520 = vmul.f32 %v103, %v3339
  %v3521 = vmul.f32 %v104, %v3341
  %v3522 = vmul.f32 %v105, %v3343
  %v3523 = vmul.f32 %v106, %v3345
  %v3524 = vmul.f32 %v107, %v3347
  %v3525 = vmul.f32 %v108, %v3349
  %v3526 = vmul.f32 %v109, %v3351
  %v3527 = vmul.f32 %v3427, %v3353
  %v3528 = vmul.f32 %v3428, %v3355
  %v3529 = vmul.f32 %v3429, %v3357
  %v3530 = vmul.f32 %v3430, %v3359
  %v3531 = vmul.f32 %v3431, %v3361
  %v3532 = vmul.f32 %v3432, %v3363
  %v3533 = vmul.f32 %v3433, %v3365
  %v3534 = vmul.f32 %v3434, %v3367
  %v3535 = vmul.f32 %v3435, %v3369
  %v3536 = vmul.f32 %v3436, %v3371
  %v3537 = vmul.f32 %v3437, %v3373
  %v3538 = vmul.f32 %v3438, %v3375
  %v3539 = vmul.f32 %v3439, %v3377
  %v3540 = vmul.f32 %v3440, %v3379
  %v3541 = vmul.f32 %v3441, %v3381
  %v3542 = vmul.f32 %v3442, %v3383
  %v3543 = vmul.f32 %v3443, %v3385
  %v3544 = vmul.f32 %v3444, %v3387
  %v3545 = vmul.f32 %v3445, %v3389
  %v3546 = vmul.f32 %v3446, %v3391
  %v3547 = vmul.f32 %v3447, %v3393
  %v3548 = vmul.f32 %v3448, %v3395
  %v3549 = vmul.f32 %v3449, %v3397
  %v3550 = vmul.f32 %v3450, %v3399
  %v3551 = vmul.f32 %v3451, %v3401
  %v3552 = vadd.f32 %v3502, %v3527
  %v3553 = vadd.f32 %v3503, %v3528
  %v3554 = vadd.f32 %v3504, %v3529
  %v3555 = vadd.f32 %v3505, %v3530
  %v3556 = vadd.f32 %v3506, %v3531
  %v3557 = vadd.f32 %v3507, %v3532
  %v3558 = vadd.f32 %v3508, %v3533
  %v3559 = vadd.f32 %v3509, %v3534
  %v3560 = vadd.f32 %v3510, %v3535
  %v3561 = vadd.f32 %v3511, %v3536
  %v3562 = vadd.f32 %v3512, %v3537
  %v3563 = vadd.f32 %v3513, %v3538
  %v3564 = vadd.f32 %v3514, %v3539
  %v3565 = vadd.f32 %v3515, %v3540
  %v3566 = vadd.f32 %v3516, %v3541
  %v3567 = vadd.f32 %v3517, %v3542
  %v3568 = vadd.f32 %v3518, %v3543
  %v3569 = vadd.f32 %v3519, %v3544
  %v3570 = vadd.f32 %v3520, %v3545
  %v3571 = vadd.f32 %v3521, %v3546
  %v3572 = vadd.f32 %v3522, %v3547
  %v3573 = vadd.f32 %v3523, %v3548
  %v3574 = vadd.f32 %v3524, %v3549
  %v3575 = vadd.f32 %v3525, %v3550
  %v3576 = vadd.f32 %v3526, %v3551
  %v3577 = vsub.f32 %v3552, %v3477
  %v3578 = vsub.f32 %v3553, %v3478
  %v3579 = vsub.f32 %v3554, %v3479
  %v3580 = vsub.f32 %v3555, %v3480
  %v3581 = vsub.f32 %v3556, %v3481
  %v3582 = vsub.f32 %v3557, %v3482
  %v3583 = vsub.f32 %v3558, %v3483
  %v3584 = vsub.f32 %v3559, %v3484
  %v3585 = vsub.f32 %v3560, %v3485
  %v3586 = vsub.f32 %v3561, %v3486
  %v3587 = vsub.f32 %v3562, %v3487
  %v3588 = vsub.f32 %v3563, %v3488
  %v3589 = vsub.f32 %v3564, %v3489
  %v3590 = vsub.f32 %v3565, %v3490
  %v3591 = vsub.f32 %v3566, %v3491
  %v3592 = vsub.f32 %v3567, %v3492
  %v3593 = vsub.f32 %v3568, %v3493
  %v3594 = vsub.f32 %v3569, %v3494
  %v3595 = vsub.f32 %v3570, %v3495
  %v3596 = vsub.f32 %v3571, %v3496
  %v3597 = vsub.f32 %v3572, %v3497
  %v3598 = vsub.f32 %v3573, %v3498
  %v3599 = vsub.f32 %v3574, %v3499
  %v3600 = vsub.f32 %v3575, %v3500
  %v3601 = vsub.f32 %v3576, %v3501
  %3627 = vrot.lane.b32.xlu0 %v3577, 1
  %v3628 = vpop.permute.xlu0 %3627
  %3629 = vrot.lane.b32.xlu0 %v3578, 1
  %v3630 = vpop.permute.xlu0 %3629
  %3631 = vrot.lane.b32.xlu0 %v3579, 1
  %v3632 = vpop.permute.xlu0 %3631
  %3633 = vrot.lane.b32.xlu0 %v3580, 1
  %v3634 = vpop.permute.xlu0 %3633
  %3635 = vrot.lane.b32.xlu0 %v3581, 1
  %v3636 = vpop.permute.xlu0 %3635
  %3637 = vrot.lane.b32.xlu0 %v3582, 1
  %v3638 = vpop.permute.xlu0 %3637
  %3639 = vrot.lane.b32.xlu0 %v3583, 1
  %v3640 = vpop.permute.xlu0 %3639
  %3641 = vrot.lane.b32.xlu0 %v3584, 1
  %v3642 = vpop.permute.xlu0 %3641
  %3643 = vrot.lane.b32.xlu0 %v3585, 1
  %v3644 = vpop.permute.xlu0 %3643
  %3645 = vrot.lane.b32.xlu0 %v3586, 1
  %v3646 = vpop.permute.xlu0 %3645
  %3647 = vrot.lane.b32.xlu0 %v3587, 1
  %v3648 = vpop.permute.xlu0 %3647
  %3649 = vrot.lane.b32.xlu0 %v3588, 1
  %v3650 = vpop.permute.xlu0 %3649
  %3651 = vrot.lane.b32.xlu0 %v3589, 1
  %v3652 = vpop.permute.xlu0 %3651
  %3653 = vrot.lane.b32.xlu0 %v3590, 1
  %v3654 = vpop.permute.xlu0 %3653
  %3655 = vrot.lane.b32.xlu0 %v3591, 1
  %v3656 = vpop.permute.xlu0 %3655
  %3657 = vrot.lane.b32.xlu0 %v3592, 1
  %v3658 = vpop.permute.xlu0 %3657
  %3659 = vrot.lane.b32.xlu0 %v3593, 1
  %v3660 = vpop.permute.xlu0 %3659
  %3661 = vrot.lane.b32.xlu0 %v3594, 1
  %v3662 = vpop.permute.xlu0 %3661
  %3663 = vrot.lane.b32.xlu0 %v3595, 1
  %v3664 = vpop.permute.xlu0 %3663
  %3665 = vrot.lane.b32.xlu0 %v3596, 1
  %v3666 = vpop.permute.xlu0 %3665
  %3667 = vrot.lane.b32.xlu0 %v3597, 1
  %v3668 = vpop.permute.xlu0 %3667
  %3669 = vrot.lane.b32.xlu0 %v3598, 1
  %v3670 = vpop.permute.xlu0 %3669
  %3671 = vrot.lane.b32.xlu0 %v3599, 1
  %v3672 = vpop.permute.xlu0 %3671
  %3673 = vrot.lane.b32.xlu0 %v3600, 1
  %v3674 = vpop.permute.xlu0 %3673
  %3675 = vrot.lane.b32.xlu0 %v3601, 1
  %v3676 = vpop.permute.xlu0 %3675
  %vm3702 = vcmask 7168
  %v3703 = vsel %vm3702, %v3052, %v3628
  %v3704 = vsel %vm3702, %v3053, %v3630
  %v3705 = vsel %vm3702, %v3054, %v3632
  %v3706 = vsel %vm3702, %v3055, %v3634
  %v3707 = vsel %vm3702, %v3056, %v3636
  %v3708 = vsel %vm3702, %v3057, %v3638
  %v3709 = vsel %vm3702, %v3058, %v3640
  %v3710 = vsel %vm3702, %v3059, %v3642
  %v3711 = vsel %vm3702, %v3060, %v3644
  %v3712 = vsel %vm3702, %v3061, %v3646
  %v3713 = vsel %vm3702, %v3062, %v3648
  %v3714 = vsel %vm3702, %v3063, %v3650
  %v3715 = vsel %vm3702, %v3064, %v3652
  %v3716 = vsel %vm3702, %v3065, %v3654
  %v3717 = vsel %vm3702, %v3066, %v3656
  %v3718 = vsel %vm3702, %v3067, %v3658
  %v3719 = vsel %vm3702, %v3068, %v3660
  %v3720 = vsel %vm3702, %v3069, %v3662
  %v3721 = vsel %vm3702, %v3070, %v3664
  %v3722 = vsel %vm3702, %v3071, %v3666
  %v3723 = vsel %vm3702, %v3072, %v3668
  %v3724 = vsel %vm3702, %v3073, %v3670
  %v3725 = vsel %vm3702, %v3074, %v3672
  %v3726 = vsel %vm3702, %v3075, %v3674
  %v3727 = vsel %vm3702, %v3076, %v3676
  %vm3728 = vcmask 15360
  %3729 = vst.msk [vmem:[%s13] sm:$0xff] %vm3728, %v3703
  %3730 = vst.msk [vmem:[%s13 + $0x8] sm:$0xff] %vm3728, %v3704
  %3731 = vst.msk [vmem:[%s13 + $0x10] sm:$0xff] %vm3728, %v3705
  %3732 = vst.msk [vmem:[%s13 + $0x18] sm:$0xff] %vm3728, %v3706
  %3733 = vst.msk [vmem:[%s13 + $0x20] sm:$0xff] %vm3728, %v3707
  %3734 = vst.msk [vmem:[%s13 + $0x28] sm:$0xff] %vm3728, %v3708
  %3735 = vst.msk [vmem:[%s13 + $0x30] sm:$0xff] %vm3728, %v3709
  %3736 = vst.msk [vmem:[%s13 + $0x38] sm:$0xff] %vm3728, %v3710
  %3737 = vst.msk [vmem:[%s13 + $0x40] sm:$0xff] %vm3728, %v3711
  %3738 = vst.msk [vmem:[%s13 + $0x48] sm:$0xff] %vm3728, %v3712
  %3739 = vst.msk [vmem:[%s13 + $0x50] sm:$0xff] %vm3728, %v3713
  %3740 = vst.msk [vmem:[%s13 + $0x58] sm:$0xff] %vm3728, %v3714
  %3741 = vst.msk [vmem:[%s13 + $0x60] sm:$0xff] %vm3728, %v3715
  %3742 = vst.msk [vmem:[%s13 + $0x68] sm:$0xff] %vm3728, %v3716
  %3743 = vst.msk [vmem:[%s13 + $0x70] sm:$0xff] %vm3728, %v3717
  %3744 = vst.msk [vmem:[%s13 + $0x78] sm:$0xff] %vm3728, %v3718
  %3745 = vst.msk [vmem:[%s13 + $0x80] sm:$0xff] %vm3728, %v3719
  %3746 = vst.msk [vmem:[%s13 + $0x88] sm:$0xff] %vm3728, %v3720
  %3747 = vst.msk [vmem:[%s13 + $0x90] sm:$0xff] %vm3728, %v3721
  %3748 = vst.msk [vmem:[%s13 + $0x98] sm:$0xff] %vm3728, %v3722
  %3749 = vst.msk [vmem:[%s13 + $0xa0] sm:$0xff] %vm3728, %v3723
  %3750 = vst.msk [vmem:[%s13 + $0xa8] sm:$0xff] %vm3728, %v3724
  %3751 = vst.msk [vmem:[%s13 + $0xb0] sm:$0xff] %vm3728, %v3725
  %3752 = vst.msk [vmem:[%s13 + $0xb8] sm:$0xff] %vm3728, %v3726
  %3753 = vst.msk [vmem:[%s13 + $0xc0] sm:$0xff] %vm3728, %v3727
  // Predicated region
  $region54: #{tpu_custom_call.1} parent=0 // pred_check
    _
  $region55: #{tpu_custom_call.1} parent=0 // pred_check_branch
    %3755 = sbr.rel (0) target = $region57
  $region56: #{tpu_custom_call.1} parent=0 // pred_region
    _
  $region57: #{tpu_custom_call.1} parent=0 // pred_fallthru
    _
  // Predicated region
  $region58: #{tpu_custom_call.1} parent=0 // pred_check
    _
  $region59: #{tpu_custom_call.1} parent=0 // pred_check_branch
    %3757 = sbr.rel (0) target = $region61
  $region60: #{tpu_custom_call.1} parent=0 // pred_region
    _
  $region61: #{tpu_custom_call.1} parent=0 // pred_fallthru
    _

</llo_original>
